<compile_context>
chip_gen: v7x
topology: tpu7x:2x2x1
jax: 0.10.0
libtpu: 0.0.40
codegen_flags: <defaults>
</compile_context>

<pallas_src>
import functools
import math

import jax
import jax.numpy as jnp
from jax.experimental import pallas as pl
from jax.experimental.pallas import tpu as pltpu


_MXU_DTYPE = jnp.bfloat16          # MXU operand dtype (accumulation is always f32)
_ACT_DTYPE = jnp.bfloat16          # inter-kernel activation dtype


def _vmem_limit_bytes():
    # ~96 MiB on 128-MiB-VMEM chips (v5e/v6e), ~48 MiB on v7x (64 MiB physical).
    try:
        cap = int(pltpu.get_tpu_info().vmem_capacity_bytes)
    except Exception:
        cap = 64 * 1024 * 1024
    return max(32 * 1024 * 1024, min(100 * 1024 * 1024, (cap * 3) // 4))


_VMEM_LIMIT = _vmem_limit_bytes()


# ----------------------------------------------------------------------------
# Tile-size helpers: tiles must divide the dim and be (8,128)-aligned, or be
# the full dim.
# ----------------------------------------------------------------------------

def _tile_rows(dim, pref):
    """Tile for a sublane (second-minor) axis: multiple of 8 or the full dim."""
    if dim % 8 != 0 or dim <= 8:
        return dim
    t = min(pref, dim)
    t -= t % 8
    while dim % t != 0:
        t -= 8
    # Prefer >= 2 row tiles so both TensorCores get work.
    if dim // t == 1 and dim >= 16 and (dim // 2) % 8 == 0:
        t = dim // 2
    return t


def _tile_lanes(dim, pref):
    """Tile for a lane (minor) axis: multiple of 128, or the full dim."""
    if dim % 128 != 0:
        return dim
    t = min(pref, dim)
    t -= t % 128
    while dim % t != 0:
        t -= 128
    return t


def _head_group_size(n_head, dph):
    """Heads per attention grid step: smallest group whose lane width is
    128-aligned; otherwise all heads (block lane width == d_model == full dim)."""
    for hg in range(1, n_head + 1):
        if n_head % hg == 0 and (hg * dph) % 128 == 0:
            return hg
    return n_head


# ----------------------------------------------------------------------------
# Fused QKV projection:  qkv3[s] = x @ Wqkv[s] + bqkv[s]   for s in {q,k,v}
# Output layout (3, M, D): each of q/k/v is a contiguous lane-dense slab.
# ----------------------------------------------------------------------------

def _qkv_matmul_kernel(x_ref, w_ref, b_ref, o_ref, acc_ref):
    @pl.when(pl.program_id(3) == 0)
    def _():
        acc_ref[...] = jnp.zeros_like(acc_ref)

    acc_ref[...] += jnp.dot(x_ref[...].astype(_MXU_DTYPE),
                            w_ref[0].astype(_MXU_DTYPE),
                            preferred_element_type=jnp.float32)

    @pl.when(pl.program_id(3) == pl.num_programs(3) - 1)
    def _():
        o_ref[0] = (acc_ref[...] + b_ref[0]).astype(o_ref.dtype)


def qkv_projection(x2d, w3, b3, *, tm=512, tn=512, tk=1024, out_dtype=_ACT_DTYPE):
    """x2d: (M, D), w3: (3, D, D) bf16, b3: (3, D) f32  ->  (3, M, D) bf16."""
    M, K = x2d.shape
    _, _, N = w3.shape
    tm = _tile_rows(M, tm)
    tn = _tile_lanes(N, tn)
    tk = _tile_lanes(K, tk)
    return pl.pallas_call(
        _qkv_matmul_kernel,
        out_shape=jax.ShapeDtypeStruct((3, M, N), out_dtype),
        grid=(3, M // tm, N // tn, K // tk),
        in_specs=[
            pl.BlockSpec((tm, tk), lambda s, i, j, k: (i, k)),
            pl.BlockSpec((1, tk, tn), lambda s, i, j, k: (s, k, j)),
            pl.BlockSpec((1, 1, tn), lambda s, i, j, k: (s, 0, j)),
        ],
        out_specs=pl.BlockSpec((1, tm, tn), lambda s, i, j, k: (s, i, j)),
        scratch_shapes=[pltpu.VMEM((tm, tn), jnp.float32)],
        compiler_params=pltpu.CompilerParams(
            dimension_semantics=("parallel", "parallel", "parallel", "arbitrary"),
            vmem_limit_bytes=_VMEM_LIMIT),
    )(x2d, w3, b3.reshape(3, 1, N))


# ----------------------------------------------------------------------------
# Tiled linear (+ optional relu):  o = act(x @ w + b)
# ----------------------------------------------------------------------------

def _matmul_kernel(x_ref, w_ref, b_ref, o_ref, acc_ref, *, activation):
    @pl.when(pl.program_id(2) == 0)
    def _():
        acc_ref[...] = jnp.zeros_like(acc_ref)

    acc_ref[...] += jnp.dot(x_ref[...].astype(_MXU_DTYPE),
                            w_ref[...].astype(_MXU_DTYPE),
                            preferred_element_type=jnp.float32)

    @pl.when(pl.program_id(2) == pl.num_programs(2) - 1)
    def _():
        acc = acc_ref[...] + b_ref[...]
        if activation == "relu":
            acc = jnp.maximum(acc, 0.0)
        o_ref[...] = acc.astype(o_ref.dtype)


def linear(x2d, w, b, activation=None, out_dtype=_ACT_DTYPE, *,
           tm=512, tn=512, tk=1024):
    """x2d: (M, K), w: (K, N) bf16, b: (N,) f32 -> (M, N)."""
    M, K = x2d.shape
    _, N = w.shape
    tm = _tile_rows(M, tm)
    tn = _tile_lanes(N, tn)
    tk = _tile_lanes(K, tk)
    kernel = functools.partial(_matmul_kernel, activation=activation)
    return pl.pallas_call(
        kernel,
        out_shape=jax.ShapeDtypeStruct((M, N), out_dtype),
        grid=(M // tm, N // tn, K // tk),
        in_specs=[
            pl.BlockSpec((tm, tk), lambda i, j, k: (i, k)),
            pl.BlockSpec((tk, tn), lambda i, j, k: (k, j)),
            pl.BlockSpec((1, tn), lambda i, j, k: (0, j)),
        ],
        out_specs=pl.BlockSpec((tm, tn), lambda i, j, k: (i, j)),
        scratch_shapes=[pltpu.VMEM((tm, tn), jnp.float32)],
        compiler_params=pltpu.CompilerParams(
            dimension_semantics=("parallel", "parallel", "arbitrary"),
            vmem_limit_bytes=_VMEM_LIMIT),
    )(x2d, w, b.reshape(1, N))


# ----------------------------------------------------------------------------
# Fused matmul + bias + residual add + LayerNorm:
#   xres = x @ w + b + res;  h = LayerNorm(xres)
# N (= d_model) is one block so LayerNorm sees the full feature row.
# ----------------------------------------------------------------------------

def _matmul_res_ln_kernel(x_ref, w_ref, b_ref, res_ref, g_ref, bt_ref,
                          *outs, eps, emit_residual):
    if emit_residual:
        xres_ref, h_ref, acc_ref = outs
    else:
        h_ref, acc_ref = outs
        xres_ref = None

    @pl.when(pl.program_id(1) == 0)
    def _():
        acc_ref[...] = jnp.zeros_like(acc_ref)

    acc_ref[...] += jnp.dot(x_ref[...].astype(_MXU_DTYPE),
                            w_ref[...].astype(_MXU_DTYPE),
                            preferred_element_type=jnp.float32)

    @pl.when(pl.program_id(1) == pl.num_programs(1) - 1)
    def _():
        xres = acc_ref[...] + b_ref[...] + res_ref[...].astype(jnp.float32)
        if emit_residual:
            xres_ref[...] = xres
        mean = jnp.mean(xres, axis=-1, keepdims=True)
        xc = xres - mean
        var = jnp.mean(xc * xc, axis=-1, keepdims=True)   # biased (torch LN)
        h = xc * jax.lax.rsqrt(var + eps) * g_ref[...] + bt_ref[...]
        h_ref[...] = h.astype(h_ref.dtype)


def matmul_residual_layernorm(x2d, w, b, res2d, gamma, beta, *, emit_residual,
                              ln_out_dtype, eps=1e-5, tm=512, tk=1024):
    M, K = x2d.shape
    _, D = w.shape
    tm = _tile_rows(M, tm)
    tk = _tile_lanes(K, tk)
    kernel = functools.partial(_matmul_res_ln_kernel, eps=eps,
                               emit_residual=emit_residual)
    out_spec = pl.BlockSpec((tm, D), lambda i, k: (i, 0))
    if emit_residual:
        out_shape = (jax.ShapeDtypeStruct((M, D), jnp.float32),     # x + attn_out
                     jax.ShapeDtypeStruct((M, D), ln_out_dtype))    # LN(x + attn_out)
        out_specs = (out_spec, out_spec)
    else:
        out_shape = jax.ShapeDtypeStruct((M, D), ln_out_dtype)
        out_specs = out_spec
    return pl.pallas_call(
        kernel,
        out_shape=out_shape,
        grid=(M // tm, K // tk),
        in_specs=[
            pl.BlockSpec((tm, tk), lambda i, k: (i, k)),
            pl.BlockSpec((tk, D), lambda i, k: (k, 0)),
            pl.BlockSpec((1, D), lambda i, k: (0, 0)),
            pl.BlockSpec((tm, D), lambda i, k: (i, 0)),
            pl.BlockSpec((1, D), lambda i, k: (0, 0)),
            pl.BlockSpec((1, D), lambda i, k: (0, 0)),
        ],
        out_specs=out_specs,
        scratch_shapes=[pltpu.VMEM((tm, D), jnp.float32)],
        compiler_params=pltpu.CompilerParams(
            dimension_semantics=("parallel", "arbitrary"),
            vmem_limit_bytes=_VMEM_LIMIT),
    )(x2d, w, b.reshape(1, D), res2d, gamma.reshape(1, D), beta.reshape(1, D))


# ----------------------------------------------------------------------------
# Flash attention (no attention-prob output).
#   qkv3: (3, B, S, D)  -- q/k/v planes;  mask: (1 or B, 1, S, S) additive.
#   grid (B, head_group, q_tile, kv_tile); online softmax with f32 accumulator.
# ----------------------------------------------------------------------------

def _flash_attn_kernel(q_ref, k_ref, v_ref, mask_ref, ctx_ref,
                       m_ref, l_ref, acc_ref, *, hg, dph, scale):
    j = pl.program_id(3)

    @pl.when(j == 0)
    def _():
        m_ref[...] = jnp.full_like(m_ref, -jnp.inf)
        l_ref[...] = jnp.zeros_like(l_ref)
        acc_ref[...] = jnp.zeros_like(acc_ref)

    qb = q_ref[0, 0]                                # (tq, hg*dph) bf16
    kb = k_ref[0, 0]                                # (tkv, hg*dph) bf16
    vb = v_ref[0, 0]
    mask = mask_ref[0, 0].astype(jnp.float32)       # (tq, tkv) additive

    for h in range(hg):                             # static unroll over head group
        sl = slice(h * dph, (h + 1) * dph)
        s = jax.lax.dot_general(qb[:, sl], kb[:, sl],
                                (((1,), (1,)), ((), ())),
                                preferred_element_type=jnp.float32) * scale + mask
        m_prev = m_ref[h]                                          # (tq, 1)
        m_new = jnp.maximum(m_prev, jnp.max(s, axis=-1, keepdims=True))
        alpha = jnp.exp(m_prev - m_new)
        p = jnp.exp(s - m_new)
        l_ref[h] = alpha * l_ref[h] + jnp.sum(p, axis=-1, keepdims=True)
        acc_ref[:, sl] = alpha * acc_ref[:, sl] + jnp.dot(
            p.astype(vb.dtype), vb[:, sl], preferred_element_type=jnp.float32)
        m_ref[h] = m_new

    @pl.when(j == pl.num_programs(3) - 1)
    def _():
        for h in range(hg):                         # exact divide (finalize only)
            sl = slice(h * dph, (h + 1) * dph)
            acc_ref[:, sl] = acc_ref[:, sl] / l_ref[h]
        ctx_ref[0] = acc_ref[...].astype(ctx_ref.dtype)   # one lane-dense store


def flash_attention(qkv3, mask, n_head, *, tq=256, tkv=512):
    _, B, S, D = qkv3.shape
    dph = D // n_head
    hg = _head_group_size(n_head, dph)
    G = n_head // hg
    cw = hg * dph
    tq = _tile_rows(S, tq)
    tkv = _tile_lanes(S, tkv)      # also the mask's lane axis -> 128-aligned or full
    scale = 1.0 / math.sqrt(dph)
    mb = (lambda b: b) if mask.shape[0] > 1 else (lambda b: 0)
    kernel = functools.partial(_flash_attn_kernel, hg=hg, dph=dph, scale=scale)
    return pl.pallas_call(
        kernel,
        out_shape=jax.ShapeDtypeStruct((B, S, D), _ACT_DTYPE),
        grid=(B, G, S // tq, S // tkv),
        in_specs=[
            pl.BlockSpec((1, 1, tq, cw), lambda b, g, i, j: (0, b, i, g)),
            pl.BlockSpec((1, 1, tkv, cw), lambda b, g, i, j: (1, b, j, g)),
            pl.BlockSpec((1, 1, tkv, cw), lambda b, g, i, j: (2, b, j, g)),
            pl.BlockSpec((1, 1, tq, tkv), lambda b, g, i, j: (mb(b), 0, i, j)),
        ],
        out_specs=pl.BlockSpec((1, tq, cw), lambda b, g, i, j: (b, i, g)),
        scratch_shapes=[pltpu.VMEM((hg, tq, 1), jnp.float32),
                        pltpu.VMEM((hg, tq, 1), jnp.float32),
                        pltpu.VMEM((tq, cw), jnp.float32)],
        compiler_params=pltpu.CompilerParams(
            dimension_semantics=("parallel", "parallel", "parallel", "arbitrary"),
            vmem_limit_bytes=_VMEM_LIMIT),
    )(qkv3, qkv3, qkv3, mask)


# ----------------------------------------------------------------------------
# Attention for the LAST layer: also materializes the attention probabilities
# (bf16, lane-dense (1, hg, tq, S) blocks).  KV kept as one block because the
# attn output is O(S^2) anyway; grid (B, head_group, q_tile), all parallel.
# ----------------------------------------------------------------------------

def _attn_with_probs_kernel(q_ref, k_ref, v_ref, mask_ref, ctx_ref, attn_ref,
                            *, hg, dph, scale):
    qb = q_ref[0, 0]                                # (tq, hg*dph)
    kb = k_ref[0, 0]                                # (S, hg*dph)
    vb = v_ref[0, 0]
    mask = mask_ref[0, 0].astype(jnp.float32)       # (tq, S)

    for h in range(hg):
        sl = slice(h * dph, (h + 1) * dph)
        s = jax.lax.dot_general(qb[:, sl], kb[:, sl],
                                (((1,), (1,)), ((), ())),
                                preferred_element_type=jnp.float32) * scale + mask
        s = s - jnp.max(s, axis=-1, keepdims=True)
        p = jnp.exp(s)
        p = p / jnp.sum(p, axis=-1, keepdims=True)          # exact divide (parity)
        attn_ref[0, h] = p.astype(attn_ref.dtype)
        ctx_ref[0, :, sl] = jnp.dot(p.astype(vb.dtype), vb[:, sl],
                                    preferred_element_type=jnp.float32
                                    ).astype(ctx_ref.dtype)


def attention_with_probs(qkv3, mask, n_head, *, tq=256):
    _, B, S, D = qkv3.shape
    dph = D // n_head
    hg = _head_group_size(n_head, dph)
    G = n_head // hg
    cw = hg * dph
    tq = _tile_rows(S, tq)
    scale = 1.0 / math.sqrt(dph)
    mb = (lambda b: b) if mask.shape[0] > 1 else (lambda b: 0)
    kernel = functools.partial(_attn_with_probs_kernel, hg=hg, dph=dph, scale=scale)
    return pl.pallas_call(
        kernel,
        out_shape=(jax.ShapeDtypeStruct((B, S, D), _ACT_DTYPE),
                   jax.ShapeDtypeStruct((B, n_head, S, S), _ACT_DTYPE)),
        grid=(B, G, S // tq),
        in_specs=[
            pl.BlockSpec((1, 1, tq, cw), lambda b, g, i: (0, b, i, g)),
            pl.BlockSpec((1, 1, S, cw), lambda b, g, i: (1, b, 0, g)),
            pl.BlockSpec((1, 1, S, cw), lambda b, g, i: (2, b, 0, g)),
            pl.BlockSpec((1, 1, tq, S), lambda b, g, i: (mb(b), 0, i, 0)),
        ],
        out_specs=(pl.BlockSpec((1, tq, cw), lambda b, g, i: (b, i, g)),
                   pl.BlockSpec((1, hg, tq, S), lambda b, g, i: (b, g, i, 0))),
        compiler_params=pltpu.CompilerParams(
            dimension_semantics=("parallel", "parallel", "parallel"),
            vmem_limit_bytes=_VMEM_LIMIT),
    )(qkv3, qkv3, qkv3, mask)


# ----------------------------------------------------------------------------
# Parameter construction (deterministic, synthetic).  Matmul weights bf16,
# biases / LN params f32.
# ----------------------------------------------------------------------------

def init_params(key, num_layers, d_model, d_ff):
    def lin(k, fan_in, fan_out):
        k1, k2 = jax.random.split(k)
        bound = 1.0 / math.sqrt(fan_in)
        w = jax.random.uniform(k1, (fan_in, fan_out), jnp.float32, -bound, bound)
        b = jax.random.uniform(k2, (fan_out,), jnp.float32, -bound, bound)
        return w.astype(_MXU_DTYPE), b

    layers = []
    for _ in range(num_layers):
        key, *ks = jax.random.split(key, 7)
        wq, bq = lin(ks[0], d_model, d_model)
        wk, bk = lin(ks[1], d_model, d_model)
        wv, bv = lin(ks[2], d_model, d_model)
        layers.append(dict(
            wqkv=(jnp.stack([wq, wk, wv]), jnp.stack([bq, bk, bv])),   # (3,D,D),(3,D)
            wo=lin(ks[3], d_model, d_model),
            ff1=lin(ks[4], d_model, d_ff),
            ff2=lin(ks[5], d_ff, d_model),
            ln0=(jnp.ones((d_model,), jnp.float32),
                 jnp.zeros((d_model,), jnp.float32)),
            ln1=(jnp.ones((d_model,), jnp.float32),
                 jnp.zeros((d_model,), jnp.float32)),
        ))
    return layers


# ----------------------------------------------------------------------------
# EncoderGPT2 forward
# ----------------------------------------------------------------------------

def encoder_gpt2_forward(x, mask, params, n_head, pasts=None):
    """x: (B, S, D) f32, mask: (1 or B, 1, S, S) additive.  pasts must be None."""
    B, S, D = x.shape
    dph = D // n_head
    n_layers = len(params)
    if pasts is None:
        pasts = [None] * n_layers
    presents = []
    attn = None

    x2d = x.reshape(B * S, D).astype(jnp.float32)     # residual stream stays f32
    for li, (p, past) in enumerate(zip(params, pasts)):
        # TODO(synk): layer_past (KV-cache concat) not implemented; pasts must be None.
        assert past is None

        # Fused QKV projection -> (3, B, S, D) bf16 (q/k/v planes, lane-dense).
        qkv3 = qkv_projection(x2d, *p["wqkv"]).reshape(3, B, S, D)

        # Presents (2, B, H, S, dph): one XLA reshape/transpose of the K/V planes.
        presents.append(jnp.transpose(
            qkv3[1:].reshape(2, B, S, n_head, dph), (0, 1, 3, 2, 4)))

        if li == n_layers - 1:     # attn probabilities only for the last layer
            ctx, attn = attention_with_probs(qkv3, mask, n_head)
        else:
            ctx = flash_attention(qkv3, mask, n_head)

        # dense(ctx) + residual + LayerNorm0 (fused); keep the pre-LN residual (f32).
        x_res2d, h2d = matmul_residual_layernorm(
            ctx.reshape(B * S, D), *p["wo"], x2d, *p["ln0"],
            emit_residual=True, ln_out_dtype=_ACT_DTYPE)

        # FFN first layer with fused relu (bf16 activations).
        h2d = linear(h2d, *p["ff1"], activation="relu", out_dtype=_ACT_DTYPE)

        # ff2 + residual + LayerNorm1 (fused); layer output / residual stream in f32.
        x2d = matmul_residual_layernorm(
            h2d, *p["ff2"], x_res2d, *p["ln1"],
            emit_residual=False, ln_out_dtype=jnp.float32)

    return x2d.reshape(B, S, D), attn, presents


# ----------------------------------------------------------------------------
# Demo
# ----------------------------------------------------------------------------

if __name__ == "__main__":
    num_hidden_layers = 2
    d_model = 32
    n_head = 4
    d_feedforward = 64
    B, S = 2, 8

    key = jax.random.PRNGKey(0)
    key, kx = jax.random.split(key)
    params = init_params(key, num_hidden_layers, d_model, d_feedforward)

    x = jax.random.normal(kx, (B, S, d_model), jnp.float32)

    # Additive causal mask: 0 where attending is allowed, -1e9 on future tokens.
    # Passed as (1, 1, S, S) -- NOT broadcast to B (kernel reuses the block).
    causal = jnp.tril(jnp.ones((S, S), jnp.float32))
    mask = ((1.0 - causal) * -1e9)[None, None, :, :]

    fwd = jax.jit(functools.partial(encoder_gpt2_forward, n_head=n_head))
    out, attn, presents = fwd(x, mask, params)
    jax.block_until_ready((out, attn, presents))

    assert out.shape == (B, S, d_model)
    assert attn.shape == (B, n_head, S, S)
    assert len(presents) == num_hidden_layers
    assert presents[0].shape == (2, B, n_head, S, d_model // n_head)
    # attention rows sum to ~1 (bf16 probs + bf16 MXU operands -> loose tol)
    row_sums = jnp.sum(attn.astype(jnp.float32), axis=-1)
    assert jnp.allclose(row_sums, 1.0, atol=1e-2)
    # causal mask respected: strictly-upper-triangular attention is ~0
    upper = jnp.triu(jnp.ones((S, S), jnp.float32), k=1)
    assert float(jnp.max(jnp.abs(attn.astype(jnp.float32) * upper))) < 1e-6

    print("KERNEL_OK")
</pallas_src>

<mosaic_0001>
module attributes {stable_mosaic.version = 11 : i64} {
  func.func @_qkv_matmul_kernel(%arg0: i32, %arg1: i32, %arg2: i32, %arg3: i32, %arg4: memref<8x32xf32, #tpu.memory_space<vmem>>, %arg5: memref<1x32x32xbf16, #tpu.memory_space<vmem>>, %arg6: memref<1x1x32xf32, #tpu.memory_space<vmem>>, %arg7: memref<1x8x32xbf16, #tpu.memory_space<vmem>>, %arg8: memref<8x32xf32, #tpu.memory_space<vmem>>) attributes {dimension_semantics = [#tpu.dimension_semantics<parallel>, #tpu.dimension_semantics<parallel>, #tpu.dimension_semantics<parallel>, #tpu.dimension_semantics<arbitrary>], iteration_bounds = array<i64: 3, 2, 1, 1>, scalar_prefetch = 0 : i64, scratch_operands = 1 : i64, tpu.core_type = #tpu.core_type<tc>, window_params = [{transform_indices = @transform_0, window_bounds = array<i64: 8, 32>}, {transform_indices = @transform_1, window_bounds = array<i64: 1, 32, 32>}, {transform_indices = @transform_2, window_bounds = array<i64: 1, 1, 32>}, {transform_indices = @transform_3, window_bounds = array<i64: 1, 8, 32>}]} {
    %c0_i32 = arith.constant 0 : i32
    %0 = arith.cmpi eq, %arg3, %c0_i32 : i32
    %1 = arith.extui %0 : i1 to i32
    %c0_i32_0 = arith.constant 0 : i32
    %2 = arith.cmpi ne, %1, %c0_i32_0 : i32
    scf.if %2 {
      %cst_11 = arith.constant 0.000000e+00 : f32
      %14 = vector.broadcast %cst_11 : f32 to vector<8x32xf32>
      %c0_12 = arith.constant 0 : index
      %c0_13 = arith.constant 0 : index
      %15 = vector.load %arg8[%c0_12, %c0_13] : memref<8x32xf32, #tpu.memory_space<vmem>>, vector<8x32xf32>
      tpu.vector_store %arg8[%c0_12, %c0_13], %14 {strides = array<i32>} : memref<8x32xf32, #tpu.memory_space<vmem>>, vector<8x32xf32>,
    } else {
    }
    %c0 = arith.constant 0 : index
    %c0_1 = arith.constant 0 : index
    %3 = vector.load %arg8[%c0, %c0_1] : memref<8x32xf32, #tpu.memory_space<vmem>>, vector<8x32xf32>
    %c0_2 = arith.constant 0 : index
    %c0_3 = arith.constant 0 : index
    %4 = vector.load %arg4[%c0_2, %c0_3] : memref<8x32xf32, #tpu.memory_space<vmem>>, vector<8x32xf32>
    %5 = arith.truncf %4 : vector<8x32xf32> to vector<8x32xbf16>
    %c0_4 = arith.constant 0 : index
    %c0_5 = arith.constant 0 : index
    %c0_6 = arith.constant 0 : index
    %6 = vector.load %arg5[%c0_4, %c0_5, %c0_6] : memref<1x32x32xbf16, #tpu.memory_space<vmem>>, vector<1x32x32xbf16>
    %7 = vector.shape_cast %6 : vector<1x32x32xbf16> to vector<32x32xbf16>
    %cst = arith.constant dense<0.000000e+00> : vector<8x32xf32>
    %8 = tpu.matmul %5, %7, %cst {dimension_numbers = #tpu.dot_dimension_numbers<[1], [0], [0], [1], [0, 0, 1, 1], [], []>} : vector<8x32xbf16>, vector<32x32xbf16>, vector<8x32xf32> -> vector<8x32xf32>
    %9 = arith.addf %3, %8 : vector<8x32xf32>
    %c0_7 = arith.constant 0 : index
    %c0_8 = arith.constant 0 : index
    %10 = vector.load %arg8[%c0_7, %c0_8] : memref<8x32xf32, #tpu.memory_space<vmem>>, vector<8x32xf32>
    tpu.vector_store %arg8[%c0_7, %c0_8], %9 {strides = array<i32>} : memref<8x32xf32, #tpu.memory_space<vmem>>, vector<8x32xf32>,
    %c0_i32_9 = arith.constant 0 : i32
    %11 = arith.cmpi eq, %arg3, %c0_i32_9 : i32
    %12 = arith.extui %11 : i1 to i32
    %c0_i32_10 = arith.constant 0 : i32
    %13 = arith.cmpi ne, %12, %c0_i32_10 : i32
    scf.if %13 {
      %c0_11 = arith.constant 0 : index
      %c0_12 = arith.constant 0 : index
      %14 = vector.load %arg8[%c0_11, %c0_12] : memref<8x32xf32, #tpu.memory_space<vmem>>, vector<8x32xf32>
      %c0_13 = arith.constant 0 : index
      %c0_14 = arith.constant 0 : index
      %c0_15 = arith.constant 0 : index
      %15 = vector.load %arg6[%c0_13, %c0_14, %c0_15] : memref<1x1x32xf32, #tpu.memory_space<vmem>>, vector<1x1x32xf32>
      %16 = vector.shape_cast %15 : vector<1x1x32xf32> to vector<1x32xf32>
      %17 = vector.broadcast %16 : vector<1x32xf32> to vector<8x32xf32>
      %18 = arith.addf %14, %17 : vector<8x32xf32>
      %19 = arith.truncf %18 : vector<8x32xf32> to vector<8x32xbf16>
      %c0_16 = arith.constant 0 : index
      %c0_17 = arith.constant 0 : index
      %c0_18 = arith.constant 0 : index
      %20 = vector.load %arg7[%c0_16, %c0_17, %c0_18] : memref<1x8x32xbf16, #tpu.memory_space<vmem>>, vector<1x8x32xbf16>
      %21 = vector.shape_cast %20 : vector<1x8x32xbf16> to vector<8x32xbf16>
      %22 = vector.shape_cast %19 : vector<8x32xbf16> to vector<1x8x32xbf16>
      tpu.vector_store %arg7[%c0_16, %c0_17, %c0_18], %22 {strides = array<i32>} : memref<1x8x32xbf16, #tpu.memory_space<vmem>>, vector<1x8x32xbf16>,
    } else {
    }
    return
  }
  func.func @transform_0(%arg0: i32, %arg1: i32, %arg2: i32, %arg3: i32) -> (i32, i32) {
    %c0_i32 = arith.constant 0 : i32
    return %arg1, %arg3 : i32, i32
  }
  func.func @transform_1(%arg0: i32, %arg1: i32, %arg2: i32, %arg3: i32) -> (i32, i32, i32) {
    %c0_i32 = arith.constant 0 : i32
    return %arg0, %arg3, %arg2 : i32, i32, i32
  }
  func.func @transform_2(%arg0: i32, %arg1: i32, %arg2: i32, %arg3: i32) -> (i32, i32, i32) {
    %c0_i32 = arith.constant 0 : i32
    %c0_i32_0 = arith.constant 0 : i32
    return %arg0, %c0_i32, %arg2 : i32, i32, i32
  }
  func.func @transform_3(%arg0: i32, %arg1: i32, %arg2: i32, %arg3: i32) -> (i32, i32, i32) {
    %c0_i32 = arith.constant 0 : i32
    return %arg0, %arg1, %arg2 : i32, i32, i32
  }
}

module attributes {stable_mosaic.version = 11 : i64} {
  func.func @_flash_attn_kernel(%arg0: i32, %arg1: i32, %arg2: i32, %arg3: i32, %arg4: memref<1x1x8x32xbf16, #tpu.memory_space<vmem>>, %arg5: memref<1x1x8x32xbf16, #tpu.memory_space<vmem>>, %arg6: memref<1x1x8x32xbf16, #tpu.memory_space<vmem>>, %arg7: memref<1x1x8x8xf32, #tpu.memory_space<vmem>>, %arg8: memref<1x8x32xbf16, #tpu.memory_space<vmem>>, %arg9: memref<4x8x1xf32, #tpu.memory_space<vmem>>, %arg10: memref<4x8x1xf32, #tpu.memory_space<vmem>>, %arg11: memref<8x32xf32, #tpu.memory_space<vmem>>) attributes {dimension_semantics = [#tpu.dimension_semantics<parallel>, #tpu.dimension_semantics<parallel>, #tpu.dimension_semantics<parallel>, #tpu.dimension_semantics<arbitrary>], iteration_bounds = array<i64: 2, 1, 1, 1>, scalar_prefetch = 0 : i64, scratch_operands = 3 : i64, tpu.core_type = #tpu.core_type<tc>, window_params = [{transform_indices = @transform_0, window_bounds = array<i64: 1, 1, 8, 32>}, {transform_indices = @transform_1, window_bounds = array<i64: 1, 1, 8, 32>}, {transform_indices = @transform_2, window_bounds = array<i64: 1, 1, 8, 32>}, {transform_indices = @transform_3, window_bounds = array<i64: 1, 1, 8, 8>}, {transform_indices = @transform_4, window_bounds = array<i64: 1, 8, 32>}]} {
    %c0_i32 = arith.constant 0 : i32
    %0 = arith.cmpi eq, %arg3, %c0_i32 : i32
    %1 = arith.extui %0 : i1 to i32
    %c0_i32_0 = arith.constant 0 : i32
    %2 = arith.cmpi ne, %1, %c0_i32_0 : i32
    scf.if %2 {
      %cst_95 = arith.constant 0xFF800000 : f32
      %158 = vector.broadcast %cst_95 : f32 to vector<4x8x1xf32>
      %c0_96 = arith.constant 0 : index
      %c0_97 = arith.constant 0 : index
      %c0_98 = arith.constant 0 : index
      %159 = vector.load %arg9[%c0_96, %c0_97, %c0_98] : memref<4x8x1xf32, #tpu.memory_space<vmem>>, vector<4x8x1xf32>
      tpu.vector_store %arg9[%c0_96, %c0_97, %c0_98], %158 {strides = array<i32>} : memref<4x8x1xf32, #tpu.memory_space<vmem>>, vector<4x8x1xf32>,
      %cst_99 = arith.constant 0.000000e+00 : f32
      %160 = vector.broadcast %cst_99 : f32 to vector<4x8x1xf32>
      %c0_100 = arith.constant 0 : index
      %c0_101 = arith.constant 0 : index
      %c0_102 = arith.constant 0 : index
      %161 = vector.load %arg10[%c0_100, %c0_101, %c0_102] : memref<4x8x1xf32, #tpu.memory_space<vmem>>, vector<4x8x1xf32>
      tpu.vector_store %arg10[%c0_100, %c0_101, %c0_102], %160 {strides = array<i32>} : memref<4x8x1xf32, #tpu.memory_space<vmem>>, vector<4x8x1xf32>,
      %cst_103 = arith.constant 0.000000e+00 : f32
      %162 = vector.broadcast %cst_103 : f32 to vector<8x32xf32>
      %c0_104 = arith.constant 0 : index
      %c0_105 = arith.constant 0 : index
      %163 = vector.load %arg11[%c0_104, %c0_105] : memref<8x32xf32, #tpu.memory_space<vmem>>, vector<8x32xf32>
      tpu.vector_store %arg11[%c0_104, %c0_105], %162 {strides = array<i32>} : memref<8x32xf32, #tpu.memory_space<vmem>>, vector<8x32xf32>,
    } else {
    }
    %c0 = arith.constant 0 : index
    %c0_1 = arith.constant 0 : index
    %c0_2 = arith.constant 0 : index
    %c0_3 = arith.constant 0 : index
    %3 = vector.load %arg4[%c0, %c0_1, %c0_2, %c0_3] : memref<1x1x8x32xbf16, #tpu.memory_space<vmem>>, vector<1x1x8x32xbf16>
    %4 = vector.shape_cast %3 : vector<1x1x8x32xbf16> to vector<8x32xbf16>
    %c0_4 = arith.constant 0 : index
    %c0_5 = arith.constant 0 : index
    %c0_6 = arith.constant 0 : index
    %c0_7 = arith.constant 0 : index
    %5 = vector.load %arg5[%c0_4, %c0_5, %c0_6, %c0_7] : memref<1x1x8x32xbf16, #tpu.memory_space<vmem>>, vector<1x1x8x32xbf16>
    %6 = vector.shape_cast %5 : vector<1x1x8x32xbf16> to vector<8x32xbf16>
    %c0_8 = arith.constant 0 : index
    %c0_9 = arith.constant 0 : index
    %c0_10 = arith.constant 0 : index
    %c0_11 = arith.constant 0 : index
    %7 = vector.load %arg6[%c0_8, %c0_9, %c0_10, %c0_11] : memref<1x1x8x32xbf16, #tpu.memory_space<vmem>>, vector<1x1x8x32xbf16>
    %8 = vector.shape_cast %7 : vector<1x1x8x32xbf16> to vector<8x32xbf16>
    %c0_12 = arith.constant 0 : index
    %c0_13 = arith.constant 0 : index
    %c0_14 = arith.constant 0 : index
    %c0_15 = arith.constant 0 : index
    %9 = vector.load %arg7[%c0_12, %c0_13, %c0_14, %c0_15] : memref<1x1x8x8xf32, #tpu.memory_space<vmem>>, vector<1x1x8x8xf32>
    %10 = vector.shape_cast %9 : vector<1x1x8x8xf32> to vector<8x8xf32>
    %11 = vector.extract_strided_slice %4 {offsets = [0, 0], sizes = [8, 8], strides = [1, 1]} : vector<8x32xbf16> to vector<8x8xbf16>
    %12 = vector.extract_strided_slice %6 {offsets = [0, 0], sizes = [8, 8], strides = [1, 1]} : vector<8x32xbf16> to vector<8x8xbf16>
    %cst = arith.constant dense<0.000000e+00> : vector<8x8xf32>
    %13 = tpu.matmul %11, %12, %cst {dimension_numbers = #tpu.dot_dimension_numbers<[1], [1], [0], [0], [0, 0, 1, 0], [], []>} : vector<8x8xbf16>, vector<8x8xbf16>, vector<8x8xf32> -> vector<8x8xf32>
    %cst_16 = arith.constant 0.353553385 : f32
    %14 = vector.broadcast %cst_16 : f32 to vector<8x8xf32>
    %15 = arith.mulf %13, %14 : vector<8x8xf32>
    %16 = arith.addf %15, %10 : vector<8x8xf32>
    %c0_17 = arith.constant 0 : index
    %c0_18 = arith.constant 0 : index
    %c0_19 = arith.constant 0 : index
    %17 = vector.load %arg9[%c0_17, %c0_18, %c0_19] : memref<4x8x1xf32, #tpu.memory_space<vmem>>, vector<1x8x1xf32>
    %18 = vector.shape_cast %17 : vector<1x8x1xf32> to vector<8x1xf32>
    %cst_20 = arith.constant dense<0xFF800000> : vector<8xf32>
    %19 = vector.multi_reduction <maximumf>, %16, %cst_20 [1] : vector<8x8xf32> to vector<8xf32>
    %20 = vector.shape_cast %19 : vector<8xf32> to vector<8x1xf32>
    %21 = arith.maximumf %18, %20 : vector<8x1xf32>
    %22 = arith.subf %18, %21 : vector<8x1xf32>
    %23 = math.exp %22 : vector<8x1xf32>
    %24 = vector.broadcast %21 : vector<8x1xf32> to vector<8x8xf32>
    %25 = arith.subf %16, %24 : vector<8x8xf32>
    %26 = math.exp %25 : vector<8x8xf32>
    %c0_21 = arith.constant 0 : index
    %c0_22 = arith.constant 0 : index
    %c0_23 = arith.constant 0 : index
    %27 = vector.load %arg10[%c0_21, %c0_22, %c0_23] : memref<4x8x1xf32, #tpu.memory_space<vmem>>, vector<1x8x1xf32>
    %28 = vector.shape_cast %27 : vector<1x8x1xf32> to vector<8x1xf32>
    %29 = arith.mulf %23, %28 : vector<8x1xf32>
    %cst_24 = arith.constant dense<0.000000e+00> : vector<8xf32>
    %30 = vector.multi_reduction <add>, %26, %cst_24 [1] : vector<8x8xf32> to vector<8xf32>
    %31 = vector.shape_cast %30 : vector<8xf32> to vector<8x1xf32>
    %32 = arith.addf %29, %31 : vector<8x1xf32>
    %c0_25 = arith.constant 0 : index
    %c0_26 = arith.constant 0 : index
    %c0_27 = arith.constant 0 : index
    %33 = vector.load %arg10[%c0_25, %c0_26, %c0_27] : memref<4x8x1xf32, #tpu.memory_space<vmem>>, vector<1x8x1xf32>
    %34 = vector.shape_cast %33 : vector<1x8x1xf32> to vector<8x1xf32>
    %35 = vector.shape_cast %32 : vector<8x1xf32> to vector<1x8x1xf32>
    tpu.vector_store %arg10[%c0_25, %c0_26, %c0_27], %35 {strides = array<i32>} : memref<4x8x1xf32, #tpu.memory_space<vmem>>, vector<1x8x1xf32>,
    %c0_28 = arith.constant 0 : index
    %c0_29 = arith.constant 0 : index
    %36 = vector.load %arg11[%c0_28, %c0_29] : memref<8x32xf32, #tpu.memory_space<vmem>>, vector<8x8xf32>
    %37 = vector.broadcast %23 : vector<8x1xf32> to vector<8x8xf32>
    %38 = arith.mulf %37, %36 : vector<8x8xf32>
    %39 = arith.truncf %26 : vector<8x8xf32> to vector<8x8xbf16>
    %40 = vector.extract_strided_slice %8 {offsets = [0, 0], sizes = [8, 8], strides = [1, 1]} : vector<8x32xbf16> to vector<8x8xbf16>
    %cst_30 = arith.constant dense<0.000000e+00> : vector<8x8xf32>
    %41 = tpu.matmul %39, %40, %cst_30 {dimension_numbers = #tpu.dot_dimension_numbers<[1], [0], [0], [1], [0, 0, 1, 1], [], []>} : vector<8x8xbf16>, vector<8x8xbf16>, vector<8x8xf32> -> vector<8x8xf32>
    %42 = arith.addf %38, %41 : vector<8x8xf32>
    %c0_31 = arith.constant 0 : index
    %c0_32 = arith.constant 0 : index
    %43 = vector.load %arg11[%c0_31, %c0_32] : memref<8x32xf32, #tpu.memory_space<vmem>>, vector<8x8xf32>
    tpu.vector_store %arg11[%c0_31, %c0_32], %42 {strides = array<i32>} : memref<8x32xf32, #tpu.memory_space<vmem>>, vector<8x8xf32>,
    %c0_33 = arith.constant 0 : index
    %c0_34 = arith.constant 0 : index
    %c0_35 = arith.constant 0 : index
    %44 = vector.load %arg9[%c0_33, %c0_34, %c0_35] : memref<4x8x1xf32, #tpu.memory_space<vmem>>, vector<1x8x1xf32>
    %45 = vector.shape_cast %44 : vector<1x8x1xf32> to vector<8x1xf32>
    %46 = vector.shape_cast %21 : vector<8x1xf32> to vector<1x8x1xf32>
    tpu.vector_store %arg9[%c0_33, %c0_34, %c0_35], %46 {strides = array<i32>} : memref<4x8x1xf32, #tpu.memory_space<vmem>>, vector<1x8x1xf32>,
    %47 = vector.extract_strided_slice %4 {offsets = [0, 8], sizes = [8, 8], strides = [1, 1]} : vector<8x32xbf16> to vector<8x8xbf16>
    %48 = vector.extract_strided_slice %6 {offsets = [0, 8], sizes = [8, 8], strides = [1, 1]} : vector<8x32xbf16> to vector<8x8xbf16>
    %cst_36 = arith.constant dense<0.000000e+00> : vector<8x8xf32>
    %49 = tpu.matmul %47, %48, %cst_36 {dimension_numbers = #tpu.dot_dimension_numbers<[1], [1], [0], [0], [0, 0, 1, 0], [], []>} : vector<8x8xbf16>, vector<8x8xbf16>, vector<8x8xf32> -> vector<8x8xf32>
    %cst_37 = arith.constant 0.353553385 : f32
    %50 = vector.broadcast %cst_37 : f32 to vector<8x8xf32>
    %51 = arith.mulf %49, %50 : vector<8x8xf32>
    %52 = arith.addf %51, %10 : vector<8x8xf32>
    %c1 = arith.constant 1 : index
    %c0_38 = arith.constant 0 : index
    %c0_39 = arith.constant 0 : index
    %53 = vector.load %arg9[%c1, %c0_38, %c0_39] : memref<4x8x1xf32, #tpu.memory_space<vmem>>, vector<1x8x1xf32>
    %54 = vector.shape_cast %53 : vector<1x8x1xf32> to vector<8x1xf32>
    %cst_40 = arith.constant dense<0xFF800000> : vector<8xf32>
    %55 = vector.multi_reduction <maximumf>, %52, %cst_40 [1] : vector<8x8xf32> to vector<8xf32>
    %56 = vector.shape_cast %55 : vector<8xf32> to vector<8x1xf32>
    %57 = arith.maximumf %54, %56 : vector<8x1xf32>
    %58 = arith.subf %54, %57 : vector<8x1xf32>
    %59 = math.exp %58 : vector<8x1xf32>
    %60 = vector.broadcast %57 : vector<8x1xf32> to vector<8x8xf32>
    %61 = arith.subf %52, %60 : vector<8x8xf32>
    %62 = math.exp %61 : vector<8x8xf32>
    %c1_41 = arith.constant 1 : index
    %c0_42 = arith.constant 0 : index
    %c0_43 = arith.constant 0 : index
    %63 = vector.load %arg10[%c1_41, %c0_42, %c0_43] : memref<4x8x1xf32, #tpu.memory_space<vmem>>, vector<1x8x1xf32>
    %64 = vector.shape_cast %63 : vector<1x8x1xf32> to vector<8x1xf32>
    %65 = arith.mulf %59, %64 : vector<8x1xf32>
    %cst_44 = arith.constant dense<0.000000e+00> : vector<8xf32>
    %66 = vector.multi_reduction <add>, %62, %cst_44 [1] : vector<8x8xf32> to vector<8xf32>
    %67 = vector.shape_cast %66 : vector<8xf32> to vector<8x1xf32>
    %68 = arith.addf %65, %67 : vector<8x1xf32>
    %c1_45 = arith.constant 1 : index
    %c0_46 = arith.constant 0 : index
    %c0_47 = arith.constant 0 : index
    %69 = vector.load %arg10[%c1_45, %c0_46, %c0_47] : memref<4x8x1xf32, #tpu.memory_space<vmem>>, vector<1x8x1xf32>
    %70 = vector.shape_cast %69 : vector<1x8x1xf32> to vector<8x1xf32>
    %71 = vector.shape_cast %68 : vector<8x1xf32> to vector<1x8x1xf32>
    tpu.vector_store %arg10[%c1_45, %c0_46, %c0_47], %71 {strides = array<i32>} : memref<4x8x1xf32, #tpu.memory_space<vmem>>, vector<1x8x1xf32>,
    %c0_48 = arith.constant 0 : index
    %c8 = arith.constant 8 : index
    %72 = vector.load %arg11[%c0_48, %c8] : memref<8x32xf32, #tpu.memory_space<vmem>>, vector<8x8xf32>
    %73 = vector.broadcast %59 : vector<8x1xf32> to vector<8x8xf32>
    %74 = arith.mulf %73, %72 : vector<8x8xf32>
    %75 = arith.truncf %62 : vector<8x8xf32> to vector<8x8xbf16>
    %76 = vector.extract_strided_slice %8 {offsets = [0, 8], sizes = [8, 8], strides = [1, 1]} : vector<8x32xbf16> to vector<8x8xbf16>
    %cst_49 = arith.constant dense<0.000000e+00> : vector<8x8xf32>
    %77 = tpu.matmul %75, %76, %cst_49 {dimension_numbers = #tpu.dot_dimension_numbers<[1], [0], [0], [1], [0, 0, 1, 1], [], []>} : vector<8x8xbf16>, vector<8x8xbf16>, vector<8x8xf32> -> vector<8x8xf32>
    %78 = arith.addf %74, %77 : vector<8x8xf32>
    %c0_50 = arith.constant 0 : index
    %c8_51 = arith.constant 8 : index
    %79 = vector.load %arg11[%c0_50, %c8_51] : memref<8x32xf32, #tpu.memory_space<vmem>>, vector<8x8xf32>
    tpu.vector_store %arg11[%c0_50, %c8_51], %78 {strides = array<i32>} : memref<8x32xf32, #tpu.memory_space<vmem>>, vector<8x8xf32>,
    %c1_52 = arith.constant 1 : index
    %c0_53 = arith.constant 0 : index
    %c0_54 = arith.constant 0 : index
    %80 = vector.load %arg9[%c1_52, %c0_53, %c0_54] : memref<4x8x1xf32, #tpu.memory_space<vmem>>, vector<1x8x1xf32>
    %81 = vector.shape_cast %80 : vector<1x8x1xf32> to vector<8x1xf32>
    %82 = vector.shape_cast %57 : vector<8x1xf32> to vector<1x8x1xf32>
    tpu.vector_store %arg9[%c1_52, %c0_53, %c0_54], %82 {strides = array<i32>} : memref<4x8x1xf32, #tpu.memory_space<vmem>>, vector<1x8x1xf32>,
    %83 = vector.extract_strided_slice %4 {offsets = [0, 16], sizes = [8, 8], strides = [1, 1]} : vector<8x32xbf16> to vector<8x8xbf16>
    %84 = vector.extract_strided_slice %6 {offsets = [0, 16], sizes = [8, 8], strides = [1, 1]} : vector<8x32xbf16> to vector<8x8xbf16>
    %cst_55 = arith.constant dense<0.000000e+00> : vector<8x8xf32>
    %85 = tpu.matmul %83, %84, %cst_55 {dimension_numbers = #tpu.dot_dimension_numbers<[1], [1], [0], [0], [0, 0, 1, 0], [], []>} : vector<8x8xbf16>, vector<8x8xbf16>, vector<8x8xf32> -> vector<8x8xf32>
    %cst_56 = arith.constant 0.353553385 : f32
    %86 = vector.broadcast %cst_56 : f32 to vector<8x8xf32>
    %87 = arith.mulf %85, %86 : vector<8x8xf32>
    %88 = arith.addf %87, %10 : vector<8x8xf32>
    %c2 = arith.constant 2 : index
    %c0_57 = arith.constant 0 : index
    %c0_58 = arith.constant 0 : index
    %89 = vector.load %arg9[%c2, %c0_57, %c0_58] : memref<4x8x1xf32, #tpu.memory_space<vmem>>, vector<1x8x1xf32>
    %90 = vector.shape_cast %89 : vector<1x8x1xf32> to vector<8x1xf32>
    %cst_59 = arith.constant dense<0xFF800000> : vector<8xf32>
    %91 = vector.multi_reduction <maximumf>, %88, %cst_59 [1] : vector<8x8xf32> to vector<8xf32>
    %92 = vector.shape_cast %91 : vector<8xf32> to vector<8x1xf32>
    %93 = arith.maximumf %90, %92 : vector<8x1xf32>
    %94 = arith.subf %90, %93 : vector<8x1xf32>
    %95 = math.exp %94 : vector<8x1xf32>
    %96 = vector.broadcast %93 : vector<8x1xf32> to vector<8x8xf32>
    %97 = arith.subf %88, %96 : vector<8x8xf32>
    %98 = math.exp %97 : vector<8x8xf32>
    %c2_60 = arith.constant 2 : index
    %c0_61 = arith.constant 0 : index
    %c0_62 = arith.constant 0 : index
    %99 = vector.load %arg10[%c2_60, %c0_61, %c0_62] : memref<4x8x1xf32, #tpu.memory_space<vmem>>, vector<1x8x1xf32>
    %100 = vector.shape_cast %99 : vector<1x8x1xf32> to vector<8x1xf32>
    %101 = arith.mulf %95, %100 : vector<8x1xf32>
    %cst_63 = arith.constant dense<0.000000e+00> : vector<8xf32>
    %102 = vector.multi_reduction <add>, %98, %cst_63 [1] : vector<8x8xf32> to vector<8xf32>
    %103 = vector.shape_cast %102 : vector<8xf32> to vector<8x1xf32>
    %104 = arith.addf %101, %103 : vector<8x1xf32>
    %c2_64 = arith.constant 2 : index
    %c0_65 = arith.constant 0 : index
    %c0_66 = arith.constant 0 : index
    %105 = vector.load %arg10[%c2_64, %c0_65, %c0_66] : memref<4x8x1xf32, #tpu.memory_space<vmem>>, vector<1x8x1xf32>
    %106 = vector.shape_cast %105 : vector<1x8x1xf32> to vector<8x1xf32>
    %107 = vector.shape_cast %104 : vector<8x1xf32> to vector<1x8x1xf32>
    tpu.vector_store %arg10[%c2_64, %c0_65, %c0_66], %107 {strides = array<i32>} : memref<4x8x1xf32, #tpu.memory_space<vmem>>, vector<1x8x1xf32>,
    %c0_67 = arith.constant 0 : index
    %c16 = arith.constant 16 : index
    %108 = vector.load %arg11[%c0_67, %c16] : memref<8x32xf32, #tpu.memory_space<vmem>>, vector<8x8xf32>
    %109 = vector.broadcast %95 : vector<8x1xf32> to vector<8x8xf32>
    %110 = arith.mulf %109, %108 : vector<8x8xf32>
    %111 = arith.truncf %98 : vector<8x8xf32> to vector<8x8xbf16>
    %112 = vector.extract_strided_slice %8 {offsets = [0, 16], sizes = [8, 8], strides = [1, 1]} : vector<8x32xbf16> to vector<8x8xbf16>
    %cst_68 = arith.constant dense<0.000000e+00> : vector<8x8xf32>
    %113 = tpu.matmul %111, %112, %cst_68 {dimension_numbers = #tpu.dot_dimension_numbers<[1], [0], [0], [1], [0, 0, 1, 1], [], []>} : vector<8x8xbf16>, vector<8x8xbf16>, vector<8x8xf32> -> vector<8x8xf32>
    %114 = arith.addf %110, %113 : vector<8x8xf32>
    %c0_69 = arith.constant 0 : index
    %c16_70 = arith.constant 16 : index
    %115 = vector.load %arg11[%c0_69, %c16_70] : memref<8x32xf32, #tpu.memory_space<vmem>>, vector<8x8xf32>
    tpu.vector_store %arg11[%c0_69, %c16_70], %114 {strides = array<i32>} : memref<8x32xf32, #tpu.memory_space<vmem>>, vector<8x8xf32>,
    %c2_71 = arith.constant 2 : index
    %c0_72 = arith.constant 0 : index
    %c0_73 = arith.constant 0 : index
    %116 = vector.load %arg9[%c2_71, %c0_72, %c0_73] : memref<4x8x1xf32, #tpu.memory_space<vmem>>, vector<1x8x1xf32>
    %117 = vector.shape_cast %116 : vector<1x8x1xf32> to vector<8x1xf32>
    %118 = vector.shape_cast %93 : vector<8x1xf32> to vector<1x8x1xf32>
    tpu.vector_store %arg9[%c2_71, %c0_72, %c0_73], %118 {strides = array<i32>} : memref<4x8x1xf32, #tpu.memory_space<vmem>>, vector<1x8x1xf32>,
    %119 = vector.extract_strided_slice %4 {offsets = [0, 24], sizes = [8, 8], strides = [1, 1]} : vector<8x32xbf16> to vector<8x8xbf16>
    %120 = vector.extract_strided_slice %6 {offsets = [0, 24], sizes = [8, 8], strides = [1, 1]} : vector<8x32xbf16> to vector<8x8xbf16>
    %cst_74 = arith.constant dense<0.000000e+00> : vector<8x8xf32>
    %121 = tpu.matmul %119, %120, %cst_74 {dimension_numbers = #tpu.dot_dimension_numbers<[1], [1], [0], [0], [0, 0, 1, 0], [], []>} : vector<8x8xbf16>, vector<8x8xbf16>, vector<8x8xf32> -> vector<8x8xf32>
    %cst_75 = arith.constant 0.353553385 : f32
    %122 = vector.broadcast %cst_75 : f32 to vector<8x8xf32>
    %123 = arith.mulf %121, %122 : vector<8x8xf32>
    %124 = arith.addf %123, %10 : vector<8x8xf32>
    %c3 = arith.constant 3 : index
    %c0_76 = arith.constant 0 : index
    %c0_77 = arith.constant 0 : index
    %125 = vector.load %arg9[%c3, %c0_76, %c0_77] : memref<4x8x1xf32, #tpu.memory_space<vmem>>, vector<1x8x1xf32>
    %126 = vector.shape_cast %125 : vector<1x8x1xf32> to vector<8x1xf32>
    %cst_78 = arith.constant dense<0xFF800000> : vector<8xf32>
    %127 = vector.multi_reduction <maximumf>, %124, %cst_78 [1] : vector<8x8xf32> to vector<8xf32>
    %128 = vector.shape_cast %127 : vector<8xf32> to vector<8x1xf32>
    %129 = arith.maximumf %126, %128 : vector<8x1xf32>
    %130 = arith.subf %126, %129 : vector<8x1xf32>
    %131 = math.exp %130 : vector<8x1xf32>
    %132 = vector.broadcast %129 : vector<8x1xf32> to vector<8x8xf32>
    %133 = arith.subf %124, %132 : vector<8x8xf32>
    %134 = math.exp %133 : vector<8x8xf32>
    %c3_79 = arith.constant 3 : index
    %c0_80 = arith.constant 0 : index
    %c0_81 = arith.constant 0 : index
    %135 = vector.load %arg10[%c3_79, %c0_80, %c0_81] : memref<4x8x1xf32, #tpu.memory_space<vmem>>, vector<1x8x1xf32>
    %136 = vector.shape_cast %135 : vector<1x8x1xf32> to vector<8x1xf32>
    %137 = arith.mulf %131, %136 : vector<8x1xf32>
    %cst_82 = arith.constant dense<0.000000e+00> : vector<8xf32>
    %138 = vector.multi_reduction <add>, %134, %cst_82 [1] : vector<8x8xf32> to vector<8xf32>
    %139 = vector.shape_cast %138 : vector<8xf32> to vector<8x1xf32>
    %140 = arith.addf %137, %139 : vector<8x1xf32>
    %c3_83 = arith.constant 3 : index
    %c0_84 = arith.constant 0 : index
    %c0_85 = arith.constant 0 : index
    %141 = vector.load %arg10[%c3_83, %c0_84, %c0_85] : memref<4x8x1xf32, #tpu.memory_space<vmem>>, vector<1x8x1xf32>
    %142 = vector.shape_cast %141 : vector<1x8x1xf32> to vector<8x1xf32>
    %143 = vector.shape_cast %140 : vector<8x1xf32> to vector<1x8x1xf32>
    tpu.vector_store %arg10[%c3_83, %c0_84, %c0_85], %143 {strides = array<i32>} : memref<4x8x1xf32, #tpu.memory_space<vmem>>, vector<1x8x1xf32>,
    %c0_86 = arith.constant 0 : index
    %c24 = arith.constant 24 : index
    %144 = vector.load %arg11[%c0_86, %c24] : memref<8x32xf32, #tpu.memory_space<vmem>>, vector<8x8xf32>
    %145 = vector.broadcast %131 : vector<8x1xf32> to vector<8x8xf32>
    %146 = arith.mulf %145, %144 : vector<8x8xf32>
    %147 = arith.truncf %134 : vector<8x8xf32> to vector<8x8xbf16>
    %148 = vector.extract_strided_slice %8 {offsets = [0, 24], sizes = [8, 8], strides = [1, 1]} : vector<8x32xbf16> to vector<8x8xbf16>
    %cst_87 = arith.constant dense<0.000000e+00> : vector<8x8xf32>
    %149 = tpu.matmul %147, %148, %cst_87 {dimension_numbers = #tpu.dot_dimension_numbers<[1], [0], [0], [1], [0, 0, 1, 1], [], []>} : vector<8x8xbf16>, vector<8x8xbf16>, vector<8x8xf32> -> vector<8x8xf32>
    %150 = arith.addf %146, %149 : vector<8x8xf32>
    %c0_88 = arith.constant 0 : index
    %c24_89 = arith.constant 24 : index
    %151 = vector.load %arg11[%c0_88, %c24_89] : memref<8x32xf32, #tpu.memory_space<vmem>>, vector<8x8xf32>
    tpu.vector_store %arg11[%c0_88, %c24_89], %150 {strides = array<i32>} : memref<8x32xf32, #tpu.memory_space<vmem>>, vector<8x8xf32>,
    %c3_90 = arith.constant 3 : index
    %c0_91 = arith.constant 0 : index
    %c0_92 = arith.constant 0 : index
    %152 = vector.load %arg9[%c3_90, %c0_91, %c0_92] : memref<4x8x1xf32, #tpu.memory_space<vmem>>, vector<1x8x1xf32>
    %153 = vector.shape_cast %152 : vector<1x8x1xf32> to vector<8x1xf32>
    %154 = vector.shape_cast %129 : vector<8x1xf32> to vector<1x8x1xf32>
    tpu.vector_store %arg9[%c3_90, %c0_91, %c0_92], %154 {strides = array<i32>} : memref<4x8x1xf32, #tpu.memory_space<vmem>>, vector<1x8x1xf32>,
    %c0_i32_93 = arith.constant 0 : i32
    %155 = arith.cmpi eq, %arg3, %c0_i32_93 : i32
    %156 = arith.extui %155 : i1 to i32
    %c0_i32_94 = arith.constant 0 : i32
    %157 = arith.cmpi ne, %156, %c0_i32_94 : i32
    scf.if %157 {
      %c0_95 = arith.constant 0 : index
      %c0_96 = arith.constant 0 : index
      %158 = vector.load %arg11[%c0_95, %c0_96] : memref<8x32xf32, #tpu.memory_space<vmem>>, vector<8x8xf32>
      %c0_97 = arith.constant 0 : index
      %c0_98 = arith.constant 0 : index
      %c0_99 = arith.constant 0 : index
      %159 = vector.load %arg10[%c0_97, %c0_98, %c0_99] : memref<4x8x1xf32, #tpu.memory_space<vmem>>, vector<1x8x1xf32>
      %160 = vector.shape_cast %159 : vector<1x8x1xf32> to vector<8x1xf32>
      %161 = vector.broadcast %160 : vector<8x1xf32> to vector<8x8xf32>
      %162 = arith.divf %158, %161 : vector<8x8xf32>
      %c0_100 = arith.constant 0 : index
      %c0_101 = arith.constant 0 : index
      %163 = vector.load %arg11[%c0_100, %c0_101] : memref<8x32xf32, #tpu.memory_space<vmem>>, vector<8x8xf32>
      tpu.vector_store %arg11[%c0_100, %c0_101], %162 {strides = array<i32>} : memref<8x32xf32, #tpu.memory_space<vmem>>, vector<8x8xf32>,
      %c0_102 = arith.constant 0 : index
      %c8_103 = arith.constant 8 : index
      %164 = vector.load %arg11[%c0_102, %c8_103] : memref<8x32xf32, #tpu.memory_space<vmem>>, vector<8x8xf32>
      %c1_104 = arith.constant 1 : index
      %c0_105 = arith.constant 0 : index
      %c0_106 = arith.constant 0 : index
      %165 = vector.load %arg10[%c1_104, %c0_105, %c0_106] : memref<4x8x1xf32, #tpu.memory_space<vmem>>, vector<1x8x1xf32>
      %166 = vector.shape_cast %165 : vector<1x8x1xf32> to vector<8x1xf32>
      %167 = vector.broadcast %166 : vector<8x1xf32> to vector<8x8xf32>
      %168 = arith.divf %164, %167 : vector<8x8xf32>
      %c0_107 = arith.constant 0 : index
      %c8_108 = arith.constant 8 : index
      %169 = vector.load %arg11[%c0_107, %c8_108] : memref<8x32xf32, #tpu.memory_space<vmem>>, vector<8x8xf32>
      tpu.vector_store %arg11[%c0_107, %c8_108], %168 {strides = array<i32>} : memref<8x32xf32, #tpu.memory_space<vmem>>, vector<8x8xf32>,
      %c0_109 = arith.constant 0 : index
      %c16_110 = arith.constant 16 : index
      %170 = vector.load %arg11[%c0_109, %c16_110] : memref<8x32xf32, #tpu.memory_space<vmem>>, vector<8x8xf32>
      %c2_111 = arith.constant 2 : index
      %c0_112 = arith.constant 0 : index
      %c0_113 = arith.constant 0 : index
      %171 = vector.load %arg10[%c2_111, %c0_112, %c0_113] : memref<4x8x1xf32, #tpu.memory_space<vmem>>, vector<1x8x1xf32>
      %172 = vector.shape_cast %171 : vector<1x8x1xf32> to vector<8x1xf32>
      %173 = vector.broadcast %172 : vector<8x1xf32> to vector<8x8xf32>
      %174 = arith.divf %170, %173 : vector<8x8xf32>
      %c0_114 = arith.constant 0 : index
      %c16_115 = arith.constant 16 : index
      %175 = vector.load %arg11[%c0_114, %c16_115] : memref<8x32xf32, #tpu.memory_space<vmem>>, vector<8x8xf32>
      tpu.vector_store %arg11[%c0_114, %c16_115], %174 {strides = array<i32>} : memref<8x32xf32, #tpu.memory_space<vmem>>, vector<8x8xf32>,
      %c0_116 = arith.constant 0 : index
      %c24_117 = arith.constant 24 : index
      %176 = vector.load %arg11[%c0_116, %c24_117] : memref<8x32xf32, #tpu.memory_space<vmem>>, vector<8x8xf32>
      %c3_118 = arith.constant 3 : index
      %c0_119 = arith.constant 0 : index
      %c0_120 = arith.constant 0 : index
      %177 = vector.load %arg10[%c3_118, %c0_119, %c0_120] : memref<4x8x1xf32, #tpu.memory_space<vmem>>, vector<1x8x1xf32>
      %178 = vector.shape_cast %177 : vector<1x8x1xf32> to vector<8x1xf32>
      %179 = vector.broadcast %178 : vector<8x1xf32> to vector<8x8xf32>
      %180 = arith.divf %176, %179 : vector<8x8xf32>
      %c0_121 = arith.constant 0 : index
      %c24_122 = arith.constant 24 : index
      %181 = vector.load %arg11[%c0_121, %c24_122] : memref<8x32xf32, #tpu.memory_space<vmem>>, vector<8x8xf32>
      tpu.vector_store %arg11[%c0_121, %c24_122], %180 {strides = array<i32>} : memref<8x32xf32, #tpu.memory_space<vmem>>, vector<8x8xf32>,
      %c0_123 = arith.constant 0 : index
      %c0_124 = arith.constant 0 : index
      %182 = vector.load %arg11[%c0_123, %c0_124] : memref<8x32xf32, #tpu.memory_space<vmem>>, vector<8x32xf32>
      %183 = arith.truncf %182 : vector<8x32xf32> to vector<8x32xbf16>
      %c0_125 = arith.constant 0 : index
      %c0_126 = arith.constant 0 : index
      %c0_127 = arith.constant 0 : index
      %184 = vector.load %arg8[%c0_125, %c0_126, %c0_127] : memref<1x8x32xbf16, #tpu.memory_space<vmem>>, vector<1x8x32xbf16>
      %185 = vector.shape_cast %184 : vector<1x8x32xbf16> to vector<8x32xbf16>
      %186 = vector.shape_cast %183 : vector<8x32xbf16> to vector<1x8x32xbf16>
      tpu.vector_store %arg8[%c0_125, %c0_126, %c0_127], %186 {strides = array<i32>} : memref<1x8x32xbf16, #tpu.memory_space<vmem>>, vector<1x8x32xbf16>,
    } else {
    }
    return
  }
  func.func @transform_0(%arg0: i32, %arg1: i32, %arg2: i32, %arg3: i32) -> (i32, i32, i32, i32) {
    %c0_i32 = arith.constant 0 : i32
    %c0_i32_0 = arith.constant 0 : i32
    return %c0_i32, %arg0, %arg2, %arg1 : i32, i32, i32, i32
  }
  func.func @transform_1(%arg0: i32, %arg1: i32, %arg2: i32, %arg3: i32) -> (i32, i32, i32, i32) {
    %c1_i32 = arith.constant 1 : i32
    %c0_i32 = arith.constant 0 : i32
    return %c1_i32, %arg0, %arg3, %arg1 : i32, i32, i32, i32
  }
  func.func @transform_2(%arg0: i32, %arg1: i32, %arg2: i32, %arg3: i32) -> (i32, i32, i32, i32) {
    %c2_i32 = arith.constant 2 : i32
    %c0_i32 = arith.constant 0 : i32
    return %c2_i32, %arg0, %arg3, %arg1 : i32, i32, i32, i32
  }
  func.func @transform_3(%arg0: i32, %arg1: i32, %arg2: i32, %arg3: i32) -> (i32, i32, i32, i32) {
    %c0_i32 = arith.constant 0 : i32
    %c0_i32_0 = arith.constant 0 : i32
    %c0_i32_1 = arith.constant 0 : i32
    return %c0_i32, %c0_i32_0, %arg2, %arg3 : i32, i32, i32, i32
  }
  func.func @transform_4(%arg0: i32, %arg1: i32, %arg2: i32, %arg3: i32) -> (i32, i32, i32) {
    %c0_i32 = arith.constant 0 : i32
    return %arg0, %arg2, %arg1 : i32, i32, i32
  }
}

module attributes {stable_mosaic.version = 11 : i64} {
  func.func @_matmul_kernel(%arg0: i32, %arg1: i32, %arg2: i32, %arg3: memref<8x32xbf16, #tpu.memory_space<vmem>>, %arg4: memref<32x64xbf16, #tpu.memory_space<vmem>>, %arg5: memref<1x64xf32, #tpu.memory_space<vmem>>, %arg6: memref<8x64xbf16, #tpu.memory_space<vmem>>, %arg7: memref<8x64xf32, #tpu.memory_space<vmem>>) attributes {dimension_semantics = [#tpu.dimension_semantics<parallel>, #tpu.dimension_semantics<parallel>, #tpu.dimension_semantics<arbitrary>], iteration_bounds = array<i64: 2, 1, 1>, scalar_prefetch = 0 : i64, scratch_operands = 1 : i64, tpu.core_type = #tpu.core_type<tc>, window_params = [{transform_indices = @transform_0, window_bounds = array<i64: 8, 32>}, {transform_indices = @transform_1, window_bounds = array<i64: 32, 64>}, {transform_indices = @transform_2, window_bounds = array<i64: 1, 64>}, {transform_indices = @transform_3, window_bounds = array<i64: 8, 64>}]} {
    %c0_i32 = arith.constant 0 : i32
    %0 = arith.cmpi eq, %arg2, %c0_i32 : i32
    %1 = arith.extui %0 : i1 to i32
    %c0_i32_0 = arith.constant 0 : i32
    %2 = arith.cmpi ne, %1, %c0_i32_0 : i32
    scf.if %2 {
      %cst_10 = arith.constant 0.000000e+00 : f32
      %12 = vector.broadcast %cst_10 : f32 to vector<8x64xf32>
      %c0_11 = arith.constant 0 : index
      %c0_12 = arith.constant 0 : index
      %13 = vector.load %arg7[%c0_11, %c0_12] : memref<8x64xf32, #tpu.memory_space<vmem>>, vector<8x64xf32>
      tpu.vector_store %arg7[%c0_11, %c0_12], %12 {strides = array<i32>} : memref<8x64xf32, #tpu.memory_space<vmem>>, vector<8x64xf32>,
    } else {
    }
    %c0 = arith.constant 0 : index
    %c0_1 = arith.constant 0 : index
    %3 = vector.load %arg7[%c0, %c0_1] : memref<8x64xf32, #tpu.memory_space<vmem>>, vector<8x64xf32>
    %c0_2 = arith.constant 0 : index
    %c0_3 = arith.constant 0 : index
    %4 = vector.load %arg3[%c0_2, %c0_3] : memref<8x32xbf16, #tpu.memory_space<vmem>>, vector<8x32xbf16>
    %c0_4 = arith.constant 0 : index
    %c0_5 = arith.constant 0 : index
    %5 = vector.load %arg4[%c0_4, %c0_5] : memref<32x64xbf16, #tpu.memory_space<vmem>>, vector<32x64xbf16>
    %cst = arith.constant dense<0.000000e+00> : vector<8x64xf32>
    %6 = tpu.matmul %4, %5, %cst {dimension_numbers = #tpu.dot_dimension_numbers<[1], [0], [0], [1], [0, 0, 1, 1], [], []>} : vector<8x32xbf16>, vector<32x64xbf16>, vector<8x64xf32> -> vector<8x64xf32>
    %7 = arith.addf %3, %6 : vector<8x64xf32>
    %c0_6 = arith.constant 0 : index
    %c0_7 = arith.constant 0 : index
    %8 = vector.load %arg7[%c0_6, %c0_7] : memref<8x64xf32, #tpu.memory_space<vmem>>, vector<8x64xf32>
    tpu.vector_store %arg7[%c0_6, %c0_7], %7 {strides = array<i32>} : memref<8x64xf32, #tpu.memory_space<vmem>>, vector<8x64xf32>,
    %c0_i32_8 = arith.constant 0 : i32
    %9 = arith.cmpi eq, %arg2, %c0_i32_8 : i32
    %10 = arith.extui %9 : i1 to i32
    %c0_i32_9 = arith.constant 0 : i32
    %11 = arith.cmpi ne, %10, %c0_i32_9 : i32
    scf.if %11 {
      %c0_10 = arith.constant 0 : index
      %c0_11 = arith.constant 0 : index
      %12 = vector.load %arg7[%c0_10, %c0_11] : memref<8x64xf32, #tpu.memory_space<vmem>>, vector<8x64xf32>
      %c0_12 = arith.constant 0 : index
      %c0_13 = arith.constant 0 : index
      %13 = vector.load %arg5[%c0_12, %c0_13] : memref<1x64xf32, #tpu.memory_space<vmem>>, vector<1x64xf32>
      %14 = vector.broadcast %13 : vector<1x64xf32> to vector<8x64xf32>
      %15 = arith.addf %12, %14 : vector<8x64xf32>
      %cst_14 = arith.constant 0.000000e+00 : f32
      %16 = vector.broadcast %cst_14 : f32 to vector<8x64xf32>
      %17 = arith.maximumf %15, %16 : vector<8x64xf32>
      %18 = arith.truncf %17 : vector<8x64xf32> to vector<8x64xbf16>
      %c0_15 = arith.constant 0 : index
      %c0_16 = arith.constant 0 : index
      %19 = vector.load %arg6[%c0_15, %c0_16] : memref<8x64xbf16, #tpu.memory_space<vmem>>, vector<8x64xbf16>
      tpu.vector_store %arg6[%c0_15, %c0_16], %18 {strides = array<i32>} : memref<8x64xbf16, #tpu.memory_space<vmem>>, vector<8x64xbf16>,
    } else {
    }
    return
  }
  func.func @transform_0(%arg0: i32, %arg1: i32, %arg2: i32) -> (i32, i32) {
    %c0_i32 = arith.constant 0 : i32
    return %arg0, %arg2 : i32, i32
  }
  func.func @transform_1(%arg0: i32, %arg1: i32, %arg2: i32) -> (i32, i32) {
    %c0_i32 = arith.constant 0 : i32
    return %arg2, %arg1 : i32, i32
  }
  func.func @transform_2(%arg0: i32, %arg1: i32, %arg2: i32) -> (i32, i32) {
    %c0_i32 = arith.constant 0 : i32
    %c0_i32_0 = arith.constant 0 : i32
    return %c0_i32, %arg1 : i32, i32
  }
  func.func @transform_3(%arg0: i32, %arg1: i32, %arg2: i32) -> (i32, i32) {
    %c0_i32 = arith.constant 0 : i32
    return %arg0, %arg1 : i32, i32
  }
}

module attributes {stable_mosaic.version = 11 : i64} {
  func.func @_matmul_res_ln_kernel(%arg0: i32, %arg1: i32, %arg2: memref<8x32xbf16, #tpu.memory_space<vmem>>, %arg3: memref<32x32xbf16, #tpu.memory_space<vmem>>, %arg4: memref<1x32xf32, #tpu.memory_space<vmem>>, %arg5: memref<8x32xf32, #tpu.memory_space<vmem>>, %arg6: memref<1x32xf32, #tpu.memory_space<vmem>>, %arg7: memref<1x32xf32, #tpu.memory_space<vmem>>, %arg8: memref<8x32xf32, #tpu.memory_space<vmem>>, %arg9: memref<8x32xbf16, #tpu.memory_space<vmem>>, %arg10: memref<8x32xf32, #tpu.memory_space<vmem>>) attributes {dimension_semantics = [#tpu.dimension_semantics<parallel>, #tpu.dimension_semantics<arbitrary>], iteration_bounds = array<i64: 2, 1>, scalar_prefetch = 0 : i64, scratch_operands = 1 : i64, tpu.core_type = #tpu.core_type<tc>, window_params = [{transform_indices = @transform_0, window_bounds = array<i64: 8, 32>}, {transform_indices = @transform_1, window_bounds = array<i64: 32, 32>}, {pipeline_mode = #tpu.pipeline_mode<synchronous>, transform_indices = @transform_2, window_bounds = array<i64: 1, 32>}, {transform_indices = @transform_3, window_bounds = array<i64: 8, 32>}, {pipeline_mode = #tpu.pipeline_mode<synchronous>, transform_indices = @transform_4, window_bounds = array<i64: 1, 32>}, {pipeline_mode = #tpu.pipeline_mode<synchronous>, transform_indices = @transform_5, window_bounds = array<i64: 1, 32>}, {transform_indices = @transform_6, window_bounds = array<i64: 8, 32>}, {transform_indices = @transform_7, window_bounds = array<i64: 8, 32>}]} {
    %c0_i32 = arith.constant 0 : i32
    %0 = arith.cmpi eq, %arg1, %c0_i32 : i32
    %1 = arith.extui %0 : i1 to i32
    %c0_i32_0 = arith.constant 0 : i32
    %2 = arith.cmpi ne, %1, %c0_i32_0 : i32
    scf.if %2 {
      %cst_10 = arith.constant 0.000000e+00 : f32
      %12 = vector.broadcast %cst_10 : f32 to vector<8x32xf32>
      %c0_11 = arith.constant 0 : index
      %c0_12 = arith.constant 0 : index
      %13 = vector.load %arg10[%c0_11, %c0_12] : memref<8x32xf32, #tpu.memory_space<vmem>>, vector<8x32xf32>
      tpu.vector_store %arg10[%c0_11, %c0_12], %12 {strides = array<i32>} : memref<8x32xf32, #tpu.memory_space<vmem>>, vector<8x32xf32>,
    } else {
    }
    %c0 = arith.constant 0 : index
    %c0_1 = arith.constant 0 : index
    %3 = vector.load %arg10[%c0, %c0_1] : memref<8x32xf32, #tpu.memory_space<vmem>>, vector<8x32xf32>
    %c0_2 = arith.constant 0 : index
    %c0_3 = arith.constant 0 : index
    %4 = vector.load %arg2[%c0_2, %c0_3] : memref<8x32xbf16, #tpu.memory_space<vmem>>, vector<8x32xbf16>
    %c0_4 = arith.constant 0 : index
    %c0_5 = arith.constant 0 : index
    %5 = vector.load %arg3[%c0_4, %c0_5] : memref<32x32xbf16, #tpu.memory_space<vmem>>, vector<32x32xbf16>
    %cst = arith.constant dense<0.000000e+00> : vector<8x32xf32>
    %6 = tpu.matmul %4, %5, %cst {dimension_numbers = #tpu.dot_dimension_numbers<[1], [0], [0], [1], [0, 0, 1, 1], [], []>} : vector<8x32xbf16>, vector<32x32xbf16>, vector<8x32xf32> -> vector<8x32xf32>
    %7 = arith.addf %3, %6 : vector<8x32xf32>
    %c0_6 = arith.constant 0 : index
    %c0_7 = arith.constant 0 : index
    %8 = vector.load %arg10[%c0_6, %c0_7] : memref<8x32xf32, #tpu.memory_space<vmem>>, vector<8x32xf32>
    tpu.vector_store %arg10[%c0_6, %c0_7], %7 {strides = array<i32>} : memref<8x32xf32, #tpu.memory_space<vmem>>, vector<8x32xf32>,
    %c0_i32_8 = arith.constant 0 : i32
    %9 = arith.cmpi eq, %arg1, %c0_i32_8 : i32
    %10 = arith.extui %9 : i1 to i32
    %c0_i32_9 = arith.constant 0 : i32
    %11 = arith.cmpi ne, %10, %c0_i32_9 : i32
    scf.if %11 {
      %c0_10 = arith.constant 0 : index
      %c0_11 = arith.constant 0 : index
      %12 = vector.load %arg10[%c0_10, %c0_11] : memref<8x32xf32, #tpu.memory_space<vmem>>, vector<8x32xf32>
      %c0_12 = arith.constant 0 : index
      %c0_13 = arith.constant 0 : index
      %13 = vector.load %arg4[%c0_12, %c0_13] : memref<1x32xf32, #tpu.memory_space<vmem>>, vector<1x32xf32>
      %14 = vector.broadcast %13 : vector<1x32xf32> to vector<8x32xf32>
      %15 = arith.addf %12, %14 : vector<8x32xf32>
      %c0_14 = arith.constant 0 : index
      %c0_15 = arith.constant 0 : index
      %16 = vector.load %arg5[%c0_14, %c0_15] : memref<8x32xf32, #tpu.memory_space<vmem>>, vector<8x32xf32>
      %17 = arith.addf %15, %16 : vector<8x32xf32>
      %c0_16 = arith.constant 0 : index
      %c0_17 = arith.constant 0 : index
      %18 = vector.load %arg8[%c0_16, %c0_17] : memref<8x32xf32, #tpu.memory_space<vmem>>, vector<8x32xf32>
      tpu.vector_store %arg8[%c0_16, %c0_17], %17 {strides = array<i32>} : memref<8x32xf32, #tpu.memory_space<vmem>>, vector<8x32xf32>,
      %cst_18 = arith.constant dense<0.000000e+00> : vector<8xf32>
      %19 = vector.multi_reduction <add>, %17, %cst_18 [1] : vector<8x32xf32> to vector<8xf32>
      %20 = vector.shape_cast %19 : vector<8xf32> to vector<8x1xf32>
      %cst_19 = arith.constant 3.200000e+01 : f32
      %21 = vector.broadcast %cst_19 : f32 to vector<8x1xf32>
      %22 = arith.divf %20, %21 : vector<8x1xf32>
      %23 = vector.broadcast %22 : vector<8x1xf32> to vector<8x32xf32>
      %24 = arith.subf %17, %23 : vector<8x32xf32>
      %25 = arith.mulf %24, %24 : vector<8x32xf32>
      %cst_20 = arith.constant dense<0.000000e+00> : vector<8xf32>
      %26 = vector.multi_reduction <add>, %25, %cst_20 [1] : vector<8x32xf32> to vector<8xf32>
      %27 = vector.shape_cast %26 : vector<8xf32> to vector<8x1xf32>
      %cst_21 = arith.constant 3.200000e+01 : f32
      %28 = vector.broadcast %cst_21 : f32 to vector<8x1xf32>
      %29 = arith.divf %27, %28 : vector<8x1xf32>
      %cst_22 = arith.constant 9.99999974E-6 : f32
      %30 = vector.broadcast %cst_22 : f32 to vector<8x1xf32>
      %31 = arith.addf %29, %30 : vector<8x1xf32>
      %32 = math.rsqrt %31 : vector<8x1xf32>
      %33 = vector.broadcast %32 : vector<8x1xf32> to vector<8x32xf32>
      %34 = arith.mulf %24, %33 : vector<8x32xf32>
      %c0_23 = arith.constant 0 : index
      %c0_24 = arith.constant 0 : index
      %35 = vector.load %arg6[%c0_23, %c0_24] : memref<1x32xf32, #tpu.memory_space<vmem>>, vector<1x32xf32>
      %36 = vector.broadcast %35 : vector<1x32xf32> to vector<8x32xf32>
      %37 = arith.mulf %34, %36 : vector<8x32xf32>
      %c0_25 = arith.constant 0 : index
      %c0_26 = arith.constant 0 : index
      %38 = vector.load %arg7[%c0_25, %c0_26] : memref<1x32xf32, #tpu.memory_space<vmem>>, vector<1x32xf32>
      %39 = vector.broadcast %38 : vector<1x32xf32> to vector<8x32xf32>
      %40 = arith.addf %37, %39 : vector<8x32xf32>
      %41 = arith.truncf %40 : vector<8x32xf32> to vector<8x32xbf16>
      %c0_27 = arith.constant 0 : index
      %c0_28 = arith.constant 0 : index
      %42 = vector.load %arg9[%c0_27, %c0_28] : memref<8x32xbf16, #tpu.memory_space<vmem>>, vector<8x32xbf16>
      tpu.vector_store %arg9[%c0_27, %c0_28], %41 {strides = array<i32>} : memref<8x32xbf16, #tpu.memory_space<vmem>>, vector<8x32xbf16>,
    } else {
    }
    return
  }
  func.func @transform_0(%arg0: i32, %arg1: i32) -> (i32, i32) {
    %c0_i32 = arith.constant 0 : i32
    return %arg0, %arg1 : i32, i32
  }
  func.func @transform_1(%arg0: i32, %arg1: i32) -> (i32, i32) {
    %c0_i32 = arith.constant 0 : i32
    %c0_i32_0 = arith.constant 0 : i32
    return %arg1, %c0_i32 : i32, i32
  }
  func.func @transform_2(%arg0: i32, %arg1: i32) -> (i32, i32) {
    %c0_i32 = arith.constant 0 : i32
    %c0_i32_0 = arith.constant 0 : i32
    %c0_i32_1 = arith.constant 0 : i32
    return %c0_i32, %c0_i32_0 : i32, i32
  }
  func.func @transform_3(%arg0: i32, %arg1: i32) -> (i32, i32) {
    %c0_i32 = arith.constant 0 : i32
    %c0_i32_0 = arith.constant 0 : i32
    return %arg0, %c0_i32 : i32, i32
  }
  func.func @transform_4(%arg0: i32, %arg1: i32) -> (i32, i32) {
    %c0_i32 = arith.constant 0 : i32
    %c0_i32_0 = arith.constant 0 : i32
    %c0_i32_1 = arith.constant 0 : i32
    return %c0_i32, %c0_i32_0 : i32, i32
  }
  func.func @transform_5(%arg0: i32, %arg1: i32) -> (i32, i32) {
    %c0_i32 = arith.constant 0 : i32
    %c0_i32_0 = arith.constant 0 : i32
    %c0_i32_1 = arith.constant 0 : i32
    return %c0_i32, %c0_i32_0 : i32, i32
  }
  func.func @transform_6(%arg0: i32, %arg1: i32) -> (i32, i32) {
    %c0_i32 = arith.constant 0 : i32
    %c0_i32_0 = arith.constant 0 : i32
    return %arg0, %c0_i32 : i32, i32
  }
  func.func @transform_7(%arg0: i32, %arg1: i32) -> (i32, i32) {
    %c0_i32 = arith.constant 0 : i32
    %c0_i32_0 = arith.constant 0 : i32
    return %arg0, %c0_i32 : i32, i32
  }
}

module attributes {stable_mosaic.version = 11 : i64} {
  func.func @_matmul_res_ln_kernel(%arg0: i32, %arg1: i32, %arg2: memref<8x64xbf16, #tpu.memory_space<vmem>>, %arg3: memref<64x32xbf16, #tpu.memory_space<vmem>>, %arg4: memref<1x32xf32, #tpu.memory_space<vmem>>, %arg5: memref<8x32xf32, #tpu.memory_space<vmem>>, %arg6: memref<1x32xf32, #tpu.memory_space<vmem>>, %arg7: memref<1x32xf32, #tpu.memory_space<vmem>>, %arg8: memref<8x32xf32, #tpu.memory_space<vmem>>, %arg9: memref<8x32xf32, #tpu.memory_space<vmem>>) attributes {dimension_semantics = [#tpu.dimension_semantics<parallel>, #tpu.dimension_semantics<arbitrary>], iteration_bounds = array<i64: 2, 1>, scalar_prefetch = 0 : i64, scratch_operands = 1 : i64, tpu.core_type = #tpu.core_type<tc>, window_params = [{transform_indices = @transform_0, window_bounds = array<i64: 8, 64>}, {transform_indices = @transform_1, window_bounds = array<i64: 64, 32>}, {pipeline_mode = #tpu.pipeline_mode<synchronous>, transform_indices = @transform_2, window_bounds = array<i64: 1, 32>}, {transform_indices = @transform_3, window_bounds = array<i64: 8, 32>}, {pipeline_mode = #tpu.pipeline_mode<synchronous>, transform_indices = @transform_4, window_bounds = array<i64: 1, 32>}, {pipeline_mode = #tpu.pipeline_mode<synchronous>, transform_indices = @transform_5, window_bounds = array<i64: 1, 32>}, {transform_indices = @transform_6, window_bounds = array<i64: 8, 32>}]} {
    %c0_i32 = arith.constant 0 : i32
    %0 = arith.cmpi eq, %arg1, %c0_i32 : i32
    %1 = arith.extui %0 : i1 to i32
    %c0_i32_0 = arith.constant 0 : i32
    %2 = arith.cmpi ne, %1, %c0_i32_0 : i32
    scf.if %2 {
      %cst_10 = arith.constant 0.000000e+00 : f32
      %12 = vector.broadcast %cst_10 : f32 to vector<8x32xf32>
      %c0_11 = arith.constant 0 : index
      %c0_12 = arith.constant 0 : index
      %13 = vector.load %arg9[%c0_11, %c0_12] : memref<8x32xf32, #tpu.memory_space<vmem>>, vector<8x32xf32>
      tpu.vector_store %arg9[%c0_11, %c0_12], %12 {strides = array<i32>} : memref<8x32xf32, #tpu.memory_space<vmem>>, vector<8x32xf32>,
    } else {
    }
    %c0 = arith.constant 0 : index
    %c0_1 = arith.constant 0 : index
    %3 = vector.load %arg9[%c0, %c0_1] : memref<8x32xf32, #tpu.memory_space<vmem>>, vector<8x32xf32>
    %c0_2 = arith.constant 0 : index
    %c0_3 = arith.constant 0 : index
    %4 = vector.load %arg2[%c0_2, %c0_3] : memref<8x64xbf16, #tpu.memory_space<vmem>>, vector<8x64xbf16>
    %c0_4 = arith.constant 0 : index
    %c0_5 = arith.constant 0 : index
    %5 = vector.load %arg3[%c0_4, %c0_5] : memref<64x32xbf16, #tpu.memory_space<vmem>>, vector<64x32xbf16>
    %cst = arith.constant dense<0.000000e+00> : vector<8x32xf32>
    %6 = tpu.matmul %4, %5, %cst {dimension_numbers = #tpu.dot_dimension_numbers<[1], [0], [0], [1], [0, 0, 1, 1], [], []>} : vector<8x64xbf16>, vector<64x32xbf16>, vector<8x32xf32> -> vector<8x32xf32>
    %7 = arith.addf %3, %6 : vector<8x32xf32>
    %c0_6 = arith.constant 0 : index
    %c0_7 = arith.constant 0 : index
    %8 = vector.load %arg9[%c0_6, %c0_7] : memref<8x32xf32, #tpu.memory_space<vmem>>, vector<8x32xf32>
    tpu.vector_store %arg9[%c0_6, %c0_7], %7 {strides = array<i32>} : memref<8x32xf32, #tpu.memory_space<vmem>>, vector<8x32xf32>,
    %c0_i32_8 = arith.constant 0 : i32
    %9 = arith.cmpi eq, %arg1, %c0_i32_8 : i32
    %10 = arith.extui %9 : i1 to i32
    %c0_i32_9 = arith.constant 0 : i32
    %11 = arith.cmpi ne, %10, %c0_i32_9 : i32
    scf.if %11 {
      %c0_10 = arith.constant 0 : index
      %c0_11 = arith.constant 0 : index
      %12 = vector.load %arg9[%c0_10, %c0_11] : memref<8x32xf32, #tpu.memory_space<vmem>>, vector<8x32xf32>
      %c0_12 = arith.constant 0 : index
      %c0_13 = arith.constant 0 : index
      %13 = vector.load %arg4[%c0_12, %c0_13] : memref<1x32xf32, #tpu.memory_space<vmem>>, vector<1x32xf32>
      %14 = vector.broadcast %13 : vector<1x32xf32> to vector<8x32xf32>
      %15 = arith.addf %12, %14 : vector<8x32xf32>
      %c0_14 = arith.constant 0 : index
      %c0_15 = arith.constant 0 : index
      %16 = vector.load %arg5[%c0_14, %c0_15] : memref<8x32xf32, #tpu.memory_space<vmem>>, vector<8x32xf32>
      %17 = arith.addf %15, %16 : vector<8x32xf32>
      %cst_16 = arith.constant dense<0.000000e+00> : vector<8xf32>
      %18 = vector.multi_reduction <add>, %17, %cst_16 [1] : vector<8x32xf32> to vector<8xf32>
      %19 = vector.shape_cast %18 : vector<8xf32> to vector<8x1xf32>
      %cst_17 = arith.constant 3.200000e+01 : f32
      %20 = vector.broadcast %cst_17 : f32 to vector<8x1xf32>
      %21 = arith.divf %19, %20 : vector<8x1xf32>
      %22 = vector.broadcast %21 : vector<8x1xf32> to vector<8x32xf32>
      %23 = arith.subf %17, %22 : vector<8x32xf32>
      %24 = arith.mulf %23, %23 : vector<8x32xf32>
      %cst_18 = arith.constant dense<0.000000e+00> : vector<8xf32>
      %25 = vector.multi_reduction <add>, %24, %cst_18 [1] : vector<8x32xf32> to vector<8xf32>
      %26 = vector.shape_cast %25 : vector<8xf32> to vector<8x1xf32>
      %cst_19 = arith.constant 3.200000e+01 : f32
      %27 = vector.broadcast %cst_19 : f32 to vector<8x1xf32>
      %28 = arith.divf %26, %27 : vector<8x1xf32>
      %cst_20 = arith.constant 9.99999974E-6 : f32
      %29 = vector.broadcast %cst_20 : f32 to vector<8x1xf32>
      %30 = arith.addf %28, %29 : vector<8x1xf32>
      %31 = math.rsqrt %30 : vector<8x1xf32>
      %32 = vector.broadcast %31 : vector<8x1xf32> to vector<8x32xf32>
      %33 = arith.mulf %23, %32 : vector<8x32xf32>
      %c0_21 = arith.constant 0 : index
      %c0_22 = arith.constant 0 : index
      %34 = vector.load %arg6[%c0_21, %c0_22] : memref<1x32xf32, #tpu.memory_space<vmem>>, vector<1x32xf32>
      %35 = vector.broadcast %34 : vector<1x32xf32> to vector<8x32xf32>
      %36 = arith.mulf %33, %35 : vector<8x32xf32>
      %c0_23 = arith.constant 0 : index
      %c0_24 = arith.constant 0 : index
      %37 = vector.load %arg7[%c0_23, %c0_24] : memref<1x32xf32, #tpu.memory_space<vmem>>, vector<1x32xf32>
      %38 = vector.broadcast %37 : vector<1x32xf32> to vector<8x32xf32>
      %39 = arith.addf %36, %38 : vector<8x32xf32>
      %c0_25 = arith.constant 0 : index
      %c0_26 = arith.constant 0 : index
      %40 = vector.load %arg8[%c0_25, %c0_26] : memref<8x32xf32, #tpu.memory_space<vmem>>, vector<8x32xf32>
      tpu.vector_store %arg8[%c0_25, %c0_26], %39 {strides = array<i32>} : memref<8x32xf32, #tpu.memory_space<vmem>>, vector<8x32xf32>,
    } else {
    }
    return
  }
  func.func @transform_0(%arg0: i32, %arg1: i32) -> (i32, i32) {
    %c0_i32 = arith.constant 0 : i32
    return %arg0, %arg1 : i32, i32
  }
  func.func @transform_1(%arg0: i32, %arg1: i32) -> (i32, i32) {
    %c0_i32 = arith.constant 0 : i32
    %c0_i32_0 = arith.constant 0 : i32
    return %arg1, %c0_i32 : i32, i32
  }
  func.func @transform_2(%arg0: i32, %arg1: i32) -> (i32, i32) {
    %c0_i32 = arith.constant 0 : i32
    %c0_i32_0 = arith.constant 0 : i32
    %c0_i32_1 = arith.constant 0 : i32
    return %c0_i32, %c0_i32_0 : i32, i32
  }
  func.func @transform_3(%arg0: i32, %arg1: i32) -> (i32, i32) {
    %c0_i32 = arith.constant 0 : i32
    %c0_i32_0 = arith.constant 0 : i32
    return %arg0, %c0_i32 : i32, i32
  }
  func.func @transform_4(%arg0: i32, %arg1: i32) -> (i32, i32) {
    %c0_i32 = arith.constant 0 : i32
    %c0_i32_0 = arith.constant 0 : i32
    %c0_i32_1 = arith.constant 0 : i32
    return %c0_i32, %c0_i32_0 : i32, i32
  }
  func.func @transform_5(%arg0: i32, %arg1: i32) -> (i32, i32) {
    %c0_i32 = arith.constant 0 : i32
    %c0_i32_0 = arith.constant 0 : i32
    %c0_i32_1 = arith.constant 0 : i32
    return %c0_i32, %c0_i32_0 : i32, i32
  }
  func.func @transform_6(%arg0: i32, %arg1: i32) -> (i32, i32) {
    %c0_i32 = arith.constant 0 : i32
    %c0_i32_0 = arith.constant 0 : i32
    return %arg0, %c0_i32 : i32, i32
  }
}

module attributes {stable_mosaic.version = 11 : i64} {
  func.func @_attn_with_probs_kernel(%arg0: i32, %arg1: i32, %arg2: i32, %arg3: memref<1x1x8x32xbf16, #tpu.memory_space<vmem>>, %arg4: memref<1x1x8x32xbf16, #tpu.memory_space<vmem>>, %arg5: memref<1x1x8x32xbf16, #tpu.memory_space<vmem>>, %arg6: memref<1x1x8x8xf32, #tpu.memory_space<vmem>>, %arg7: memref<1x8x32xbf16, #tpu.memory_space<vmem>>, %arg8: memref<1x4x8x8xbf16, #tpu.memory_space<vmem>>) attributes {dimension_semantics = [#tpu.dimension_semantics<parallel>, #tpu.dimension_semantics<parallel>, #tpu.dimension_semantics<parallel>], iteration_bounds = array<i64: 2, 1, 1>, scalar_prefetch = 0 : i64, scratch_operands = 0 : i64, tpu.core_type = #tpu.core_type<tc>, window_params = [{transform_indices = @transform_0, window_bounds = array<i64: 1, 1, 8, 32>}, {transform_indices = @transform_1, window_bounds = array<i64: 1, 1, 8, 32>}, {transform_indices = @transform_2, window_bounds = array<i64: 1, 1, 8, 32>}, {transform_indices = @transform_3, window_bounds = array<i64: 1, 1, 8, 8>}, {transform_indices = @transform_4, window_bounds = array<i64: 1, 8, 32>}, {transform_indices = @transform_5, window_bounds = array<i64: 1, 4, 8, 8>}]} {
    %c0 = arith.constant 0 : index
    %c0_0 = arith.constant 0 : index
    %c0_1 = arith.constant 0 : index
    %c0_2 = arith.constant 0 : index
    %0 = vector.load %arg3[%c0, %c0_0, %c0_1, %c0_2] : memref<1x1x8x32xbf16, #tpu.memory_space<vmem>>, vector<1x1x8x32xbf16>
    %1 = vector.shape_cast %0 : vector<1x1x8x32xbf16> to vector<8x32xbf16>
    %c0_3 = arith.constant 0 : index
    %c0_4 = arith.constant 0 : index
    %c0_5 = arith.constant 0 : index
    %c0_6 = arith.constant 0 : index
    %2 = vector.load %arg4[%c0_3, %c0_4, %c0_5, %c0_6] : memref<1x1x8x32xbf16, #tpu.memory_space<vmem>>, vector<1x1x8x32xbf16>
    %3 = vector.shape_cast %2 : vector<1x1x8x32xbf16> to vector<8x32xbf16>
    %c0_7 = arith.constant 0 : index
    %c0_8 = arith.constant 0 : index
    %c0_9 = arith.constant 0 : index
    %c0_10 = arith.constant 0 : index
    %4 = vector.load %arg5[%c0_7, %c0_8, %c0_9, %c0_10] : memref<1x1x8x32xbf16, #tpu.memory_space<vmem>>, vector<1x1x8x32xbf16>
    %5 = vector.shape_cast %4 : vector<1x1x8x32xbf16> to vector<8x32xbf16>
    %c0_11 = arith.constant 0 : index
    %c0_12 = arith.constant 0 : index
    %c0_13 = arith.constant 0 : index
    %c0_14 = arith.constant 0 : index
    %6 = vector.load %arg6[%c0_11, %c0_12, %c0_13, %c0_14] : memref<1x1x8x8xf32, #tpu.memory_space<vmem>>, vector<1x1x8x8xf32>
    %7 = vector.shape_cast %6 : vector<1x1x8x8xf32> to vector<8x8xf32>
    %8 = vector.extract_strided_slice %1 {offsets = [0, 0], sizes = [8, 8], strides = [1, 1]} : vector<8x32xbf16> to vector<8x8xbf16>
    %9 = vector.extract_strided_slice %3 {offsets = [0, 0], sizes = [8, 8], strides = [1, 1]} : vector<8x32xbf16> to vector<8x8xbf16>
    %cst = arith.constant dense<0.000000e+00> : vector<8x8xf32>
    %10 = tpu.matmul %8, %9, %cst {dimension_numbers = #tpu.dot_dimension_numbers<[1], [1], [0], [0], [0, 0, 1, 0], [], []>} : vector<8x8xbf16>, vector<8x8xbf16>, vector<8x8xf32> -> vector<8x8xf32>
    %cst_15 = arith.constant 0.353553385 : f32
    %11 = vector.broadcast %cst_15 : f32 to vector<8x8xf32>
    %12 = arith.mulf %10, %11 : vector<8x8xf32>
    %13 = arith.addf %12, %7 : vector<8x8xf32>
    %cst_16 = arith.constant dense<0xFF800000> : vector<8xf32>
    %14 = vector.multi_reduction <maximumf>, %13, %cst_16 [1] : vector<8x8xf32> to vector<8xf32>
    %15 = vector.shape_cast %14 : vector<8xf32> to vector<8x1xf32>
    %16 = vector.broadcast %15 : vector<8x1xf32> to vector<8x8xf32>
    %17 = arith.subf %13, %16 : vector<8x8xf32>
    %18 = math.exp %17 : vector<8x8xf32>
    %cst_17 = arith.constant dense<0.000000e+00> : vector<8xf32>
    %19 = vector.multi_reduction <add>, %18, %cst_17 [1] : vector<8x8xf32> to vector<8xf32>
    %20 = vector.shape_cast %19 : vector<8xf32> to vector<8x1xf32>
    %21 = vector.broadcast %20 : vector<8x1xf32> to vector<8x8xf32>
    %22 = arith.divf %18, %21 : vector<8x8xf32>
    %23 = arith.truncf %22 : vector<8x8xf32> to vector<8x8xbf16>
    %c0_18 = arith.constant 0 : index
    %c0_19 = arith.constant 0 : index
    %c0_20 = arith.constant 0 : index
    %c0_21 = arith.constant 0 : index
    %24 = vector.load %arg8[%c0_18, %c0_19, %c0_20, %c0_21] : memref<1x4x8x8xbf16, #tpu.memory_space<vmem>>, vector<1x1x8x8xbf16>
    %25 = vector.shape_cast %24 : vector<1x1x8x8xbf16> to vector<8x8xbf16>
    %26 = vector.shape_cast %23 : vector<8x8xbf16> to vector<1x1x8x8xbf16>
    tpu.vector_store %arg8[%c0_18, %c0_19, %c0_20, %c0_21], %26 {strides = array<i32>} : memref<1x4x8x8xbf16, #tpu.memory_space<vmem>>, vector<1x1x8x8xbf16>,
    %27 = arith.truncf %22 : vector<8x8xf32> to vector<8x8xbf16>
    %28 = vector.extract_strided_slice %5 {offsets = [0, 0], sizes = [8, 8], strides = [1, 1]} : vector<8x32xbf16> to vector<8x8xbf16>
    %cst_22 = arith.constant dense<0.000000e+00> : vector<8x8xf32>
    %29 = tpu.matmul %27, %28, %cst_22 {dimension_numbers = #tpu.dot_dimension_numbers<[1], [0], [0], [1], [0, 0, 1, 1], [], []>} : vector<8x8xbf16>, vector<8x8xbf16>, vector<8x8xf32> -> vector<8x8xf32>
    %30 = arith.truncf %29 : vector<8x8xf32> to vector<8x8xbf16>
    %c0_23 = arith.constant 0 : index
    %c0_24 = arith.constant 0 : index
    %c0_25 = arith.constant 0 : index
    %31 = vector.load %arg7[%c0_23, %c0_24, %c0_25] : memref<1x8x32xbf16, #tpu.memory_space<vmem>>, vector<1x8x8xbf16>
    %32 = vector.shape_cast %31 : vector<1x8x8xbf16> to vector<8x8xbf16>
    %33 = vector.shape_cast %30 : vector<8x8xbf16> to vector<1x8x8xbf16>
    tpu.vector_store %arg7[%c0_23, %c0_24, %c0_25], %33 {strides = array<i32>} : memref<1x8x32xbf16, #tpu.memory_space<vmem>>, vector<1x8x8xbf16>,
    %34 = vector.extract_strided_slice %1 {offsets = [0, 8], sizes = [8, 8], strides = [1, 1]} : vector<8x32xbf16> to vector<8x8xbf16>
    %35 = vector.extract_strided_slice %3 {offsets = [0, 8], sizes = [8, 8], strides = [1, 1]} : vector<8x32xbf16> to vector<8x8xbf16>
    %cst_26 = arith.constant dense<0.000000e+00> : vector<8x8xf32>
    %36 = tpu.matmul %34, %35, %cst_26 {dimension_numbers = #tpu.dot_dimension_numbers<[1], [1], [0], [0], [0, 0, 1, 0], [], []>} : vector<8x8xbf16>, vector<8x8xbf16>, vector<8x8xf32> -> vector<8x8xf32>
    %cst_27 = arith.constant 0.353553385 : f32
    %37 = vector.broadcast %cst_27 : f32 to vector<8x8xf32>
    %38 = arith.mulf %36, %37 : vector<8x8xf32>
    %39 = arith.addf %38, %7 : vector<8x8xf32>
    %cst_28 = arith.constant dense<0xFF800000> : vector<8xf32>
    %40 = vector.multi_reduction <maximumf>, %39, %cst_28 [1] : vector<8x8xf32> to vector<8xf32>
    %41 = vector.shape_cast %40 : vector<8xf32> to vector<8x1xf32>
    %42 = vector.broadcast %41 : vector<8x1xf32> to vector<8x8xf32>
    %43 = arith.subf %39, %42 : vector<8x8xf32>
    %44 = math.exp %43 : vector<8x8xf32>
    %cst_29 = arith.constant dense<0.000000e+00> : vector<8xf32>
    %45 = vector.multi_reduction <add>, %44, %cst_29 [1] : vector<8x8xf32> to vector<8xf32>
    %46 = vector.shape_cast %45 : vector<8xf32> to vector<8x1xf32>
    %47 = vector.broadcast %46 : vector<8x1xf32> to vector<8x8xf32>
    %48 = arith.divf %44, %47 : vector<8x8xf32>
    %49 = arith.truncf %48 : vector<8x8xf32> to vector<8x8xbf16>
    %c0_30 = arith.constant 0 : index
    %c1 = arith.constant 1 : index
    %c0_31 = arith.constant 0 : index
    %c0_32 = arith.constant 0 : index
    %50 = vector.load %arg8[%c0_30, %c1, %c0_31, %c0_32] : memref<1x4x8x8xbf16, #tpu.memory_space<vmem>>, vector<1x1x8x8xbf16>
    %51 = vector.shape_cast %50 : vector<1x1x8x8xbf16> to vector<8x8xbf16>
    %52 = vector.shape_cast %49 : vector<8x8xbf16> to vector<1x1x8x8xbf16>
    tpu.vector_store %arg8[%c0_30, %c1, %c0_31, %c0_32], %52 {strides = array<i32>} : memref<1x4x8x8xbf16, #tpu.memory_space<vmem>>, vector<1x1x8x8xbf16>,
    %53 = arith.truncf %48 : vector<8x8xf32> to vector<8x8xbf16>
    %54 = vector.extract_strided_slice %5 {offsets = [0, 8], sizes = [8, 8], strides = [1, 1]} : vector<8x32xbf16> to vector<8x8xbf16>
    %cst_33 = arith.constant dense<0.000000e+00> : vector<8x8xf32>
    %55 = tpu.matmul %53, %54, %cst_33 {dimension_numbers = #tpu.dot_dimension_numbers<[1], [0], [0], [1], [0, 0, 1, 1], [], []>} : vector<8x8xbf16>, vector<8x8xbf16>, vector<8x8xf32> -> vector<8x8xf32>
    %56 = arith.truncf %55 : vector<8x8xf32> to vector<8x8xbf16>
    %c0_34 = arith.constant 0 : index
    %c0_35 = arith.constant 0 : index
    %c8 = arith.constant 8 : index
    %57 = vector.load %arg7[%c0_34, %c0_35, %c8] : memref<1x8x32xbf16, #tpu.memory_space<vmem>>, vector<1x8x8xbf16>
    %58 = vector.shape_cast %57 : vector<1x8x8xbf16> to vector<8x8xbf16>
    %59 = vector.shape_cast %56 : vector<8x8xbf16> to vector<1x8x8xbf16>
    tpu.vector_store %arg7[%c0_34, %c0_35, %c8], %59 {strides = array<i32>} : memref<1x8x32xbf16, #tpu.memory_space<vmem>>, vector<1x8x8xbf16>,
    %60 = vector.extract_strided_slice %1 {offsets = [0, 16], sizes = [8, 8], strides = [1, 1]} : vector<8x32xbf16> to vector<8x8xbf16>
    %61 = vector.extract_strided_slice %3 {offsets = [0, 16], sizes = [8, 8], strides = [1, 1]} : vector<8x32xbf16> to vector<8x8xbf16>
    %cst_36 = arith.constant dense<0.000000e+00> : vector<8x8xf32>
    %62 = tpu.matmul %60, %61, %cst_36 {dimension_numbers = #tpu.dot_dimension_numbers<[1], [1], [0], [0], [0, 0, 1, 0], [], []>} : vector<8x8xbf16>, vector<8x8xbf16>, vector<8x8xf32> -> vector<8x8xf32>
    %cst_37 = arith.constant 0.353553385 : f32
    %63 = vector.broadcast %cst_37 : f32 to vector<8x8xf32>
    %64 = arith.mulf %62, %63 : vector<8x8xf32>
    %65 = arith.addf %64, %7 : vector<8x8xf32>
    %cst_38 = arith.constant dense<0xFF800000> : vector<8xf32>
    %66 = vector.multi_reduction <maximumf>, %65, %cst_38 [1] : vector<8x8xf32> to vector<8xf32>
    %67 = vector.shape_cast %66 : vector<8xf32> to vector<8x1xf32>
    %68 = vector.broadcast %67 : vector<8x1xf32> to vector<8x8xf32>
    %69 = arith.subf %65, %68 : vector<8x8xf32>
    %70 = math.exp %69 : vector<8x8xf32>
    %cst_39 = arith.constant dense<0.000000e+00> : vector<8xf32>
    %71 = vector.multi_reduction <add>, %70, %cst_39 [1] : vector<8x8xf32> to vector<8xf32>
    %72 = vector.shape_cast %71 : vector<8xf32> to vector<8x1xf32>
    %73 = vector.broadcast %72 : vector<8x1xf32> to vector<8x8xf32>
    %74 = arith.divf %70, %73 : vector<8x8xf32>
    %75 = arith.truncf %74 : vector<8x8xf32> to vector<8x8xbf16>
    %c0_40 = arith.constant 0 : index
    %c2 = arith.constant 2 : index
    %c0_41 = arith.constant 0 : index
    %c0_42 = arith.constant 0 : index
    %76 = vector.load %arg8[%c0_40, %c2, %c0_41, %c0_42] : memref<1x4x8x8xbf16, #tpu.memory_space<vmem>>, vector<1x1x8x8xbf16>
    %77 = vector.shape_cast %76 : vector<1x1x8x8xbf16> to vector<8x8xbf16>
    %78 = vector.shape_cast %75 : vector<8x8xbf16> to vector<1x1x8x8xbf16>
    tpu.vector_store %arg8[%c0_40, %c2, %c0_41, %c0_42], %78 {strides = array<i32>} : memref<1x4x8x8xbf16, #tpu.memory_space<vmem>>, vector<1x1x8x8xbf16>,
    %79 = arith.truncf %74 : vector<8x8xf32> to vector<8x8xbf16>
    %80 = vector.extract_strided_slice %5 {offsets = [0, 16], sizes = [8, 8], strides = [1, 1]} : vector<8x32xbf16> to vector<8x8xbf16>
    %cst_43 = arith.constant dense<0.000000e+00> : vector<8x8xf32>
    %81 = tpu.matmul %79, %80, %cst_43 {dimension_numbers = #tpu.dot_dimension_numbers<[1], [0], [0], [1], [0, 0, 1, 1], [], []>} : vector<8x8xbf16>, vector<8x8xbf16>, vector<8x8xf32> -> vector<8x8xf32>
    %82 = arith.truncf %81 : vector<8x8xf32> to vector<8x8xbf16>
    %c0_44 = arith.constant 0 : index
    %c0_45 = arith.constant 0 : index
    %c16 = arith.constant 16 : index
    %83 = vector.load %arg7[%c0_44, %c0_45, %c16] : memref<1x8x32xbf16, #tpu.memory_space<vmem>>, vector<1x8x8xbf16>
    %84 = vector.shape_cast %83 : vector<1x8x8xbf16> to vector<8x8xbf16>
    %85 = vector.shape_cast %82 : vector<8x8xbf16> to vector<1x8x8xbf16>
    tpu.vector_store %arg7[%c0_44, %c0_45, %c16], %85 {strides = array<i32>} : memref<1x8x32xbf16, #tpu.memory_space<vmem>>, vector<1x8x8xbf16>,
    %86 = vector.extract_strided_slice %1 {offsets = [0, 24], sizes = [8, 8], strides = [1, 1]} : vector<8x32xbf16> to vector<8x8xbf16>
    %87 = vector.extract_strided_slice %3 {offsets = [0, 24], sizes = [8, 8], strides = [1, 1]} : vector<8x32xbf16> to vector<8x8xbf16>
    %cst_46 = arith.constant dense<0.000000e+00> : vector<8x8xf32>
    %88 = tpu.matmul %86, %87, %cst_46 {dimension_numbers = #tpu.dot_dimension_numbers<[1], [1], [0], [0], [0, 0, 1, 0], [], []>} : vector<8x8xbf16>, vector<8x8xbf16>, vector<8x8xf32> -> vector<8x8xf32>
    %cst_47 = arith.constant 0.353553385 : f32
    %89 = vector.broadcast %cst_47 : f32 to vector<8x8xf32>
    %90 = arith.mulf %88, %89 : vector<8x8xf32>
    %91 = arith.addf %90, %7 : vector<8x8xf32>
    %cst_48 = arith.constant dense<0xFF800000> : vector<8xf32>
    %92 = vector.multi_reduction <maximumf>, %91, %cst_48 [1] : vector<8x8xf32> to vector<8xf32>
    %93 = vector.shape_cast %92 : vector<8xf32> to vector<8x1xf32>
    %94 = vector.broadcast %93 : vector<8x1xf32> to vector<8x8xf32>
    %95 = arith.subf %91, %94 : vector<8x8xf32>
    %96 = math.exp %95 : vector<8x8xf32>
    %cst_49 = arith.constant dense<0.000000e+00> : vector<8xf32>
    %97 = vector.multi_reduction <add>, %96, %cst_49 [1] : vector<8x8xf32> to vector<8xf32>
    %98 = vector.shape_cast %97 : vector<8xf32> to vector<8x1xf32>
    %99 = vector.broadcast %98 : vector<8x1xf32> to vector<8x8xf32>
    %100 = arith.divf %96, %99 : vector<8x8xf32>
    %101 = arith.truncf %100 : vector<8x8xf32> to vector<8x8xbf16>
    %c0_50 = arith.constant 0 : index
    %c3 = arith.constant 3 : index
    %c0_51 = arith.constant 0 : index
    %c0_52 = arith.constant 0 : index
    %102 = vector.load %arg8[%c0_50, %c3, %c0_51, %c0_52] : memref<1x4x8x8xbf16, #tpu.memory_space<vmem>>, vector<1x1x8x8xbf16>
    %103 = vector.shape_cast %102 : vector<1x1x8x8xbf16> to vector<8x8xbf16>
    %104 = vector.shape_cast %101 : vector<8x8xbf16> to vector<1x1x8x8xbf16>
    tpu.vector_store %arg8[%c0_50, %c3, %c0_51, %c0_52], %104 {strides = array<i32>} : memref<1x4x8x8xbf16, #tpu.memory_space<vmem>>, vector<1x1x8x8xbf16>,
    %105 = arith.truncf %100 : vector<8x8xf32> to vector<8x8xbf16>
    %106 = vector.extract_strided_slice %5 {offsets = [0, 24], sizes = [8, 8], strides = [1, 1]} : vector<8x32xbf16> to vector<8x8xbf16>
    %cst_53 = arith.constant dense<0.000000e+00> : vector<8x8xf32>
    %107 = tpu.matmul %105, %106, %cst_53 {dimension_numbers = #tpu.dot_dimension_numbers<[1], [0], [0], [1], [0, 0, 1, 1], [], []>} : vector<8x8xbf16>, vector<8x8xbf16>, vector<8x8xf32> -> vector<8x8xf32>
    %108 = arith.truncf %107 : vector<8x8xf32> to vector<8x8xbf16>
    %c0_54 = arith.constant 0 : index
    %c0_55 = arith.constant 0 : index
    %c24 = arith.constant 24 : index
    %109 = vector.load %arg7[%c0_54, %c0_55, %c24] : memref<1x8x32xbf16, #tpu.memory_space<vmem>>, vector<1x8x8xbf16>
    %110 = vector.shape_cast %109 : vector<1x8x8xbf16> to vector<8x8xbf16>
    %111 = vector.shape_cast %108 : vector<8x8xbf16> to vector<1x8x8xbf16>
    tpu.vector_store %arg7[%c0_54, %c0_55, %c24], %111 {strides = array<i32>} : memref<1x8x32xbf16, #tpu.memory_space<vmem>>, vector<1x8x8xbf16>,
    return
  }
  func.func @transform_0(%arg0: i32, %arg1: i32, %arg2: i32) -> (i32, i32, i32, i32) {
    %c0_i32 = arith.constant 0 : i32
    %c0_i32_0 = arith.constant 0 : i32
    return %c0_i32, %arg0, %arg2, %arg1 : i32, i32, i32, i32
  }
  func.func @transform_1(%arg0: i32, %arg1: i32, %arg2: i32) -> (i32, i32, i32, i32) {
    %c1_i32 = arith.constant 1 : i32
    %c0_i32 = arith.constant 0 : i32
    %c0_i32_0 = arith.constant 0 : i32
    return %c1_i32, %arg0, %c0_i32, %arg1 : i32, i32, i32, i32
  }
  func.func @transform_2(%arg0: i32, %arg1: i32, %arg2: i32) -> (i32, i32, i32, i32) {
    %c2_i32 = arith.constant 2 : i32
    %c0_i32 = arith.constant 0 : i32
    %c0_i32_0 = arith.constant 0 : i32
    return %c2_i32, %arg0, %c0_i32, %arg1 : i32, i32, i32, i32
  }
  func.func @transform_3(%arg0: i32, %arg1: i32, %arg2: i32) -> (i32, i32, i32, i32) {
    %c0_i32 = arith.constant 0 : i32
    %c0_i32_0 = arith.constant 0 : i32
    %c0_i32_1 = arith.constant 0 : i32
    %c0_i32_2 = arith.constant 0 : i32
    return %c0_i32, %c0_i32_0, %arg2, %c0_i32_1 : i32, i32, i32, i32
  }
  func.func @transform_4(%arg0: i32, %arg1: i32, %arg2: i32) -> (i32, i32, i32) {
    %c0_i32 = arith.constant 0 : i32
    return %arg0, %arg2, %arg1 : i32, i32, i32
  }
  func.func @transform_5(%arg0: i32, %arg1: i32, %arg2: i32) -> (i32, i32, i32, i32) {
    %c0_i32 = arith.constant 0 : i32
    %c0_i32_0 = arith.constant 0 : i32
    return %arg0, %arg1, %arg2, %c0_i32 : i32, i32, i32, i32
  }
}

module attributes {stable_mosaic.version = 11 : i64} {
  func.func @_matmul_res_ln_kernel(%arg0: i32, %arg1: i32, %arg2: memref<8x64xbf16, #tpu.memory_space<vmem>>, %arg3: memref<64x32xbf16, #tpu.memory_space<vmem>>, %arg4: memref<1x32xf32, #tpu.memory_space<vmem>>, %arg5: memref<8x32xf32, #tpu.memory_space<vmem>>, %arg6: memref<1x32xf32, #tpu.memory_space<vmem>>, %arg7: memref<1x32xf32, #tpu.memory_space<vmem>>, %arg8: memref<8x32xf32, #tpu.memory_space<vmem>>, %arg9: memref<8x32xf32, #tpu.memory_space<vmem>>) attributes {dimension_semantics = [#tpu.dimension_semantics<parallel>, #tpu.dimension_semantics<arbitrary>], iteration_bounds = array<i64: 2, 1>, scalar_prefetch = 0 : i64, scratch_operands = 1 : i64, tpu.core_type = #tpu.core_type<tc>, window_params = [{transform_indices = @transform_0, window_bounds = array<i64: 8, 64>}, {transform_indices = @transform_1, window_bounds = array<i64: 64, 32>}, {pipeline_mode = #tpu.pipeline_mode<synchronous>, transform_indices = @transform_2, window_bounds = array<i64: 1, 32>}, {transform_indices = @transform_3, window_bounds = array<i64: 8, 32>}, {pipeline_mode = #tpu.pipeline_mode<synchronous>, transform_indices = @transform_4, window_bounds = array<i64: 1, 32>}, {pipeline_mode = #tpu.pipeline_mode<synchronous>, transform_indices = @transform_5, window_bounds = array<i64: 1, 32>}, {transform_indices = @transform_6, window_bounds = array<i64: 8, 32>}]} {
    %c0_i32 = arith.constant 0 : i32
    %0 = arith.cmpi eq, %arg1, %c0_i32 : i32
    %1 = arith.extui %0 : i1 to i32
    %c0_i32_0 = arith.constant 0 : i32
    %2 = arith.cmpi ne, %1, %c0_i32_0 : i32
    scf.if %2 {
      %cst_10 = arith.constant 0.000000e+00 : f32
      %12 = vector.broadcast %cst_10 : f32 to vector<8x32xf32>
      %c0_11 = arith.constant 0 : index
      %c0_12 = arith.constant 0 : index
      %13 = vector.load %arg9[%c0_11, %c0_12] : memref<8x32xf32, #tpu.memory_space<vmem>>, vector<8x32xf32>
      tpu.vector_store %arg9[%c0_11, %c0_12], %12 {strides = array<i32>} : memref<8x32xf32, #tpu.memory_space<vmem>>, vector<8x32xf32>,
    } else {
    }
    %c0 = arith.constant 0 : index
    %c0_1 = arith.constant 0 : index
    %3 = vector.load %arg9[%c0, %c0_1] : memref<8x32xf32, #tpu.memory_space<vmem>>, vector<8x32xf32>
    %c0_2 = arith.constant 0 : index
    %c0_3 = arith.constant 0 : index
    %4 = vector.load %arg2[%c0_2, %c0_3] : memref<8x64xbf16, #tpu.memory_space<vmem>>, vector<8x64xbf16>
    %c0_4 = arith.constant 0 : index
    %c0_5 = arith.constant 0 : index
    %5 = vector.load %arg3[%c0_4, %c0_5] : memref<64x32xbf16, #tpu.memory_space<vmem>>, vector<64x32xbf16>
    %cst = arith.constant dense<0.000000e+00> : vector<8x32xf32>
    %6 = tpu.matmul %4, %5, %cst {dimension_numbers = #tpu.dot_dimension_numbers<[1], [0], [0], [1], [0, 0, 1, 1], [], []>} : vector<8x64xbf16>, vector<64x32xbf16>, vector<8x32xf32> -> vector<8x32xf32>
    %7 = arith.addf %3, %6 : vector<8x32xf32>
    %c0_6 = arith.constant 0 : index
    %c0_7 = arith.constant 0 : index
    %8 = vector.load %arg9[%c0_6, %c0_7] : memref<8x32xf32, #tpu.memory_space<vmem>>, vector<8x32xf32>
    tpu.vector_store %arg9[%c0_6, %c0_7], %7 {strides = array<i32>} : memref<8x32xf32, #tpu.memory_space<vmem>>, vector<8x32xf32>,
    %c0_i32_8 = arith.constant 0 : i32
    %9 = arith.cmpi eq, %arg1, %c0_i32_8 : i32
    %10 = arith.extui %9 : i1 to i32
    %c0_i32_9 = arith.constant 0 : i32
    %11 = arith.cmpi ne, %10, %c0_i32_9 : i32
    scf.if %11 {
      %c0_10 = arith.constant 0 : index
      %c0_11 = arith.constant 0 : index
      %12 = vector.load %arg9[%c0_10, %c0_11] : memref<8x32xf32, #tpu.memory_space<vmem>>, vector<8x32xf32>
      %c0_12 = arith.constant 0 : index
      %c0_13 = arith.constant 0 : index
      %13 = vector.load %arg4[%c0_12, %c0_13] : memref<1x32xf32, #tpu.memory_space<vmem>>, vector<1x32xf32>
      %14 = vector.broadcast %13 : vector<1x32xf32> to vector<8x32xf32>
      %15 = arith.addf %12, %14 : vector<8x32xf32>
      %c0_14 = arith.constant 0 : index
      %c0_15 = arith.constant 0 : index
      %16 = vector.load %arg5[%c0_14, %c0_15] : memref<8x32xf32, #tpu.memory_space<vmem>>, vector<8x32xf32>
      %17 = arith.addf %15, %16 : vector<8x32xf32>
      %cst_16 = arith.constant dense<0.000000e+00> : vector<8xf32>
      %18 = vector.multi_reduction <add>, %17, %cst_16 [1] : vector<8x32xf32> to vector<8xf32>
      %19 = vector.shape_cast %18 : vector<8xf32> to vector<8x1xf32>
      %cst_17 = arith.constant 3.200000e+01 : f32
      %20 = vector.broadcast %cst_17 : f32 to vector<8x1xf32>
      %21 = arith.divf %19, %20 : vector<8x1xf32>
      %22 = vector.broadcast %21 : vector<8x1xf32> to vector<8x32xf32>
      %23 = arith.subf %17, %22 : vector<8x32xf32>
      %24 = arith.mulf %23, %23 : vector<8x32xf32>
      %cst_18 = arith.constant dense<0.000000e+00> : vector<8xf32>
      %25 = vector.multi_reduction <add>, %24, %cst_18 [1] : vector<8x32xf32> to vector<8xf32>
      %26 = vector.shape_cast %25 : vector<8xf32> to vector<8x1xf32>
      %cst_19 = arith.constant 3.200000e+01 : f32
      %27 = vector.broadcast %cst_19 : f32 to vector<8x1xf32>
      %28 = arith.divf %26, %27 : vector<8x1xf32>
      %cst_20 = arith.constant 9.99999974E-6 : f32
      %29 = vector.broadcast %cst_20 : f32 to vector<8x1xf32>
      %30 = arith.addf %28, %29 : vector<8x1xf32>
      %31 = math.rsqrt %30 : vector<8x1xf32>
      %32 = vector.broadcast %31 : vector<8x1xf32> to vector<8x32xf32>
      %33 = arith.mulf %23, %32 : vector<8x32xf32>
      %c0_21 = arith.constant 0 : index
      %c0_22 = arith.constant 0 : index
      %34 = vector.load %arg6[%c0_21, %c0_22] : memref<1x32xf32, #tpu.memory_space<vmem>>, vector<1x32xf32>
      %35 = vector.broadcast %34 : vector<1x32xf32> to vector<8x32xf32>
      %36 = arith.mulf %33, %35 : vector<8x32xf32>
      %c0_23 = arith.constant 0 : index
      %c0_24 = arith.constant 0 : index
      %37 = vector.load %arg7[%c0_23, %c0_24] : memref<1x32xf32, #tpu.memory_space<vmem>>, vector<1x32xf32>
      %38 = vector.broadcast %37 : vector<1x32xf32> to vector<8x32xf32>
      %39 = arith.addf %36, %38 : vector<8x32xf32>
      %c0_25 = arith.constant 0 : index
      %c0_26 = arith.constant 0 : index
      %40 = vector.load %arg8[%c0_25, %c0_26] : memref<8x32xf32, #tpu.memory_space<vmem>>, vector<8x32xf32>
      tpu.vector_store %arg8[%c0_25, %c0_26], %39 {strides = array<i32>} : memref<8x32xf32, #tpu.memory_space<vmem>>, vector<8x32xf32>,
    } else {
    }
    return
  }
  func.func @transform_0(%arg0: i32, %arg1: i32) -> (i32, i32) {
    %c0_i32 = arith.constant 0 : i32
    return %arg0, %arg1 : i32, i32
  }
  func.func @transform_1(%arg0: i32, %arg1: i32) -> (i32, i32) {
    %c0_i32 = arith.constant 0 : i32
    %c0_i32_0 = arith.constant 0 : i32
    return %arg1, %c0_i32 : i32, i32
  }
  func.func @transform_2(%arg0: i32, %arg1: i32) -> (i32, i32) {
    %c0_i32 = arith.constant 0 : i32
    %c0_i32_0 = arith.constant 0 : i32
    %c0_i32_1 = arith.constant 0 : i32
    return %c0_i32, %c0_i32_0 : i32, i32
  }
  func.func @transform_3(%arg0: i32, %arg1: i32) -> (i32, i32) {
    %c0_i32 = arith.constant 0 : i32
    %c0_i32_0 = arith.constant 0 : i32
    return %arg0, %c0_i32 : i32, i32
  }
  func.func @transform_4(%arg0: i32, %arg1: i32) -> (i32, i32) {
    %c0_i32 = arith.constant 0 : i32
    %c0_i32_0 = arith.constant 0 : i32
    %c0_i32_1 = arith.constant 0 : i32
    return %c0_i32, %c0_i32_0 : i32, i32
  }
  func.func @transform_5(%arg0: i32, %arg1: i32) -> (i32, i32) {
    %c0_i32 = arith.constant 0 : i32
    %c0_i32_0 = arith.constant 0 : i32
    %c0_i32_1 = arith.constant 0 : i32
    return %c0_i32, %c0_i32_0 : i32, i32
  }
  func.func @transform_6(%arg0: i32, %arg1: i32) -> (i32, i32) {
    %c0_i32 = arith.constant 0 : i32
    %c0_i32_0 = arith.constant 0 : i32
    return %arg0, %c0_i32 : i32, i32
  }
}

</mosaic_0001>

<llo_original>
// kernel: encoder_gpt2_forward.10
$region0: #{encoder_gpt2_forward.10}
  #allocation0 [shape = 'u32[]', space=smem, size = 0x4, offset = 0x4, fixed_abs, tag = 'smem constant byte address 0x4 - core index']
  #allocation1 [shape = 'u32[144,128]{1,0:T(1,128)}', space=vmem, size = 0x12000, scoped, tag = 'internal scratch']
  #allocation2 [shape = 'f32[8,32]{1,0:T(8,128)}', space=vmem, size = 0x1000, scoped, tag = 'scratch operand']
  %s0 = inlined_call_operand.vmem [shape: f32[16,32], index: 0, kind: input, shape index: {}]
  %s1 = inlined_call_operand.vmem [shape: bf16[3,32,32], index: 1, kind: input, shape index: {}]
  %s2 = inlined_call_operand.vmem [shape: f32[3,1,32], index: 2, kind: input, shape index: {}]
  %s3 = inlined_call_operand.vmem [shape: bf16[3,16,32], index: 3, kind: output, shape index: {}]
  %s4 = sld [smem:[#allocation0]]
  $region53: #{encoder_gpt2_forward.10} parent=0
    _
  %s6 = ssub.s32 1, %s4
  %s7 = scalar_select 0, %s6, %s4
  loop: start=0, step=1, limit=8
  $region2: #{encoder_gpt2_forward.10} parent=0 // loop_pre_header
    _
  $region3: #{encoder_gpt2_forward.10} parent=0 // loop_header
    %s9 = sphi 0, %s13
    %p10 = scmp.ge.s32.totalorder %s9, 8
    %s16 = sphi 0, %s42
    %s17 = sphi 0, %s38
    %s18 = sphi 0, %s34
    %s19 = sphi 0, %s30
    %s20 = sphi 0, %s16
    %s21 = sphi 0, %s17
    %s22 = sphi 0, %s18
    %s23 = sphi 0, %s19
    %s24 = sphi 0, %s20
    %s25 = sphi 0, %s21
    %s26 = sphi 0, %s22
    %s27 = sphi 0, %s23
    %s47 = sphi 0, %s49
    %s50 = sphi 0, %s47
    %s51 = sphi 0, %s50
    %s67 = sphi 0, %s51
    %s77 = sphi 0, %s79
    %s80 = sphi 0, %s77
    %s81 = sphi 0, %s80
    %s97 = sphi 0, %s81
    %s105 = sphi 0, %s107
    %s108 = sphi 0, %s105
    %s109 = sphi 0, %s108
    %s125 = sphi 0, %s109
    %s135 = sphi 0, %s137
    %s138 = sphi 0, %s135
    %s139 = sphi 0, %s138
    %s155 = sphi 0, %s139
  $region4: #{encoder_gpt2_forward.10} parent=0 // loop_header_branch
    %12 = sbr.rel (%p10) target = $region8
  $region5: #{encoder_gpt2_forward.10} parent=0 // loop_body
    %s14 = ssub.s32 %s9, 1
    %s15 = ssub.s32 %s9, 2
    %s28 = sadd.s32 1, %s19
    %p29 = scmp.ge.s32.totalorder %s28, 1
    %s30 = scalar_select %p29, 0, %s28
    %s31 = sadd.s32 1, %s18
    %s32 = scalar_select %p29, %s31, %s18
    %p33 = scmp.ge.s32.totalorder %s32, 1
    %s34 = scalar_select %p33, 0, %s32
    %s35 = sadd.s32 1, %s17
    %s36 = scalar_select %p33, %s35, %s17
    %p37 = scmp.ge.s32.totalorder %s36, 2
    %s38 = scalar_select %p37, 0, %s36
    %s39 = sadd.s32 1, %s16
    %s40 = scalar_select %p37, %s39, %s16
    %p41 = scmp.ge.s32.totalorder %s40, 3
    %s42 = scalar_select %p41, 0, %s40
    %s43 = ssub.s32 %s17, %s38
    %s44 = ssub.s32 %s19, %s30
    %s45 = sor.u32 %s43, %s44
    %p46 = scmp.eq.s32.totalorder %s45, 0
    %s48 = sadd.s32 %s47, 1
    %s49 = scalar_select %p46, %s47, %s48
    %p52 = pneg %p46
    %p53 = scmp.eq.s32.totalorder %s9, 5
    %p54 = por %p52, %p53
    %p55 = scmp.ne.s32.totalorder %s47, %s50
    %p56 = scmp.eq.s32.totalorder %s9, 0
    %p57 = por %p55, %p56
    %p58 = scmp.ne.s32.totalorder %s47, %s50
    %p59 = scmp.eq.s32.totalorder %s14, 5
    %p60 = por %p58, %p59
    %p61 = scmp.ne.s32.totalorder %s50, %s51
    %p62 = scmp.eq.s32.totalorder %s14, 0
    %p63 = por %p61, %p62
    %p64 = scmp.ne.s32.totalorder %s50, %s51
    %p65 = scmp.eq.s32.totalorder %s15, 5
    %p66 = por %p64, %p65
    %p68 = scmp.ne.s32.totalorder %s51, %s67
    %p69 = scmp.eq.s32.totalorder %s15, 0
    %p70 = por %p68, %p69
    %s71 = ssub.s32 %s16, %s42
    %s72 = ssub.s32 %s19, %s30
    %s73 = sor.u32 %s71, %s72
    %s74 = ssub.s32 %s18, %s34
    %s75 = sor.u32 %s73, %s74
    %p76 = scmp.eq.s32.totalorder %s75, 0
    %s78 = sadd.s32 %s77, 1
    %s79 = scalar_select %p76, %s77, %s78
    %p82 = pneg %p76
    %p83 = scmp.eq.s32.totalorder %s9, 5
    %p84 = por %p82, %p83
    %p85 = scmp.ne.s32.totalorder %s77, %s80
    %p86 = scmp.eq.s32.totalorder %s9, 0
    %p87 = por %p85, %p86
    %p88 = scmp.ne.s32.totalorder %s77, %s80
    %p89 = scmp.eq.s32.totalorder %s14, 5
    %p90 = por %p88, %p89
    %p91 = scmp.ne.s32.totalorder %s80, %s81
    %p92 = scmp.eq.s32.totalorder %s14, 0
    %p93 = por %p91, %p92
    %p94 = scmp.ne.s32.totalorder %s80, %s81
    %p95 = scmp.eq.s32.totalorder %s15, 5
    %p96 = por %p94, %p95
    %p98 = scmp.ne.s32.totalorder %s81, %s97
    %p99 = scmp.eq.s32.totalorder %s15, 0
    %p100 = por %p98, %p99
    %s101 = ssub.s32 %s16, %s42
    %s102 = ssub.s32 %s18, %s34
    %s103 = sor.u32 %s101, %s102
    %p104 = scmp.eq.s32.totalorder %s103, 0
    %s106 = sadd.s32 %s105, 1
    %s107 = scalar_select %p104, %s105, %s106
    %p110 = pneg %p104
    %p111 = scmp.eq.s32.totalorder %s9, 5
    %p112 = por %p110, %p111
    %p113 = scmp.ne.s32.totalorder %s105, %s108
    %p114 = scmp.eq.s32.totalorder %s9, 0
    %p115 = por %p113, %p114
    %p116 = scmp.ne.s32.totalorder %s105, %s108
    %p117 = scmp.eq.s32.totalorder %s14, 5
    %p118 = por %p116, %p117
    %p119 = scmp.ne.s32.totalorder %s108, %s109
    %p120 = scmp.eq.s32.totalorder %s14, 0
    %p121 = por %p119, %p120
    %p122 = scmp.ne.s32.totalorder %s108, %s109
    %p123 = scmp.eq.s32.totalorder %s15, 5
    %p124 = por %p122, %p123
    %p126 = scmp.ne.s32.totalorder %s109, %s125
    %p127 = scmp.eq.s32.totalorder %s15, 0
    %p128 = por %p126, %p127
    %s129 = ssub.s32 %s16, %s42
    %s130 = ssub.s32 %s17, %s38
    %s131 = sor.u32 %s129, %s130
    %s132 = ssub.s32 %s18, %s34
    %s133 = sor.u32 %s131, %s132
    %p134 = scmp.eq.s32.totalorder %s133, 0
    %s136 = sadd.s32 %s135, 1
    %s137 = scalar_select %p134, %s135, %s136
    %p140 = pneg %p134
    %p141 = scmp.eq.s32.totalorder %s9, 5
    %p142 = por %p140, %p141
    %p143 = scmp.ne.s32.totalorder %s135, %s138
    %p144 = scmp.eq.s32.totalorder %s9, 0
    %p145 = por %p143, %p144
    %p146 = scmp.ne.s32.totalorder %s135, %s138
    %p147 = scmp.eq.s32.totalorder %s14, 5
    %p148 = por %p146, %p147
    %p149 = scmp.ne.s32.totalorder %s138, %s139
    %p150 = scmp.eq.s32.totalorder %s14, 0
    %p151 = por %p149, %p150
    %p152 = scmp.ne.s32.totalorder %s138, %s139
    %p153 = scmp.eq.s32.totalorder %s15, 5
    %p154 = por %p152, %p153
    %p156 = scmp.ne.s32.totalorder %s139, %s155
    %p157 = scmp.eq.s32.totalorder %s15, 0
    %p158 = por %p156, %p157
    %p159 = scmp.le.s32.totalorder 1, %s9
    %p160 = scmp.lt.s32.totalorder %s9, 7
    %p161 = pnand %p159, %p160
    %p162 = pneg %p161
    // Predicated region
    $region9: #{encoder_gpt2_forward.10} parent=5 // pred_check
      _
    $region10: #{encoder_gpt2_forward.10} parent=5 // pred_check_branch
      %164 = sbr.rel (%p161) target = $region12
    $region11: #{encoder_gpt2_forward.10} parent=5 // pred_region
      %s165 = ssub.s32 %s9, 1
    $region12: #{encoder_gpt2_forward.10} parent=5 // pred_fallthru
      _
    %p166 = scmp.lt.s32.totalorder %s9, 6
    // Predicated region
    $region13: #{encoder_gpt2_forward.10} parent=5 // pred_check
      %p167 = pneg %p166
    $region14: #{encoder_gpt2_forward.10} parent=5 // pred_check_branch
      %169 = sbr.rel (%p167) target = $region16
    $region15: #{encoder_gpt2_forward.10} parent=5 // pred_region
      // Predicated region
      $region17: #{encoder_gpt2_forward.10} parent=15 // pred_check
        %p170 = pneg %p57
      $region18: #{encoder_gpt2_forward.10} parent=15 // pred_check_branch
        %172 = sbr.rel (%p170) target = $region20
      $region19: #{encoder_gpt2_forward.10} parent=15 // pred_region
        %p173 = scmp.lt.s32.totalorder %s17, 1
        %s174 = scalar_select %p173, %s17, 1
        %p175 = scmp.lt.s32.totalorder %s19, 0
        %s176 = scalar_select %p175, %s19, 0
        %s177 = sadd.s32 %s176, %s174
        %s178 = smul.addr %s177, 8
        %s179 = scalar_lea.vmem %s0, %s178
      $region20: #{encoder_gpt2_forward.10} parent=15 // pred_fallthru
        _
      // Predicated region
      $region21: #{encoder_gpt2_forward.10} parent=15 // pred_check
        %p180 = pneg %p87
      $region22: #{encoder_gpt2_forward.10} parent=15 // pred_check_branch
        %182 = sbr.rel (%p180) target = $region24
      $region23: #{encoder_gpt2_forward.10} parent=15 // pred_region
        %s183 = smul.u32 4, %s19
        %p184 = scmp.lt.s32.totalorder %s16, 2
        %s185 = scalar_select %p184, %s16, 2
        %p186 = scmp.lt.s32.totalorder %s183, 3
        %s187 = scalar_select %p186, %s183, 3
        %p188 = scmp.lt.s32.totalorder %s18, 0
        %s189 = scalar_select %p188, %s18, 0
        %s190 = sadd.s32 %s189, %s187
        %s191 = smul.addr %s185, 4
        %s192 = sadd.s32 %s190, %s191
        %s193 = smul.addr %s192, 4
        %s194 = scalar_lea.vmem %s1, %s193
        %s195 = smul.u32 4, %s19
      $region24: #{encoder_gpt2_forward.10} parent=15 // pred_fallthru
        _
      // Predicated region
      $region25: #{encoder_gpt2_forward.10} parent=15 // pred_check
        %p196 = pneg %p115
      $region26: #{encoder_gpt2_forward.10} parent=15 // pred_check_branch
        %198 = sbr.rel (%p196) target = $region28
      $region27: #{encoder_gpt2_forward.10} parent=15 // pred_region
        %p199 = scmp.lt.s32.totalorder %s16, 2
        %s200 = scalar_select %p199, %s16, 2
        %p201 = scmp.lt.s32.totalorder %s18, 0
        %s202 = scalar_select %p201, %s18, 0
        %s203 = sadd.s32 %s202, %s200
        %s204 = scalar_lea.vmem %s2, %s203
      $region28: #{encoder_gpt2_forward.10} parent=15 // pred_fallthru
        _
    $region16: #{encoder_gpt2_forward.10} parent=5 // pred_fallthru
      _
    %p205 = scmp.le.s32.totalorder 1, %s9
    %p206 = scmp.lt.s32.totalorder %s9, 7
    %p207 = pnand %p205, %p206
    %p208 = pneg %p207
    // Predicated region
    $region29: #{encoder_gpt2_forward.10} parent=5 // pred_check
      _
    $region30: #{encoder_gpt2_forward.10} parent=5 // pred_check_branch
      %210 = sbr.rel (%p207) target = $region32
    $region31: #{encoder_gpt2_forward.10} parent=5 // pred_region
      %s211 = ssub.s32 %s9, 1
      %p212 = scmp.lt.s32.totalorder %s21, 1
      %s213 = scalar_select %p212, %s21, 1
      %p214 = scmp.lt.s32.totalorder %s23, 0
      %s215 = scalar_select %p214, %s23, 0
      %s216 = sadd.s32 %s215, %s213
      %s217 = smul.addr %s216, 8
      %s218 = scalar_lea.vmem %s0, %s217
      %p219 = pneg %p63
      %p220 = pneg %p60
      %s221 = smul.u32 4, %s23
      %p222 = scmp.lt.s32.totalorder %s20, 2
      %s223 = scalar_select %p222, %s20, 2
      %p224 = scmp.lt.s32.totalorder %s221, 3
      %s225 = scalar_select %p224, %s221, 3
      %p226 = scmp.lt.s32.totalorder %s22, 0
      %s227 = scalar_select %p226, %s22, 0
      %s228 = sadd.s32 %s227, %s225
      %s229 = smul.addr %s223, 4
      %s230 = sadd.s32 %s228, %s229
      %s231 = smul.addr %s230, 4
      %s232 = scalar_lea.vmem %s1, %s231
      %p233 = pneg %p93
      %p234 = pneg %p90
      %p235 = scmp.lt.s32.totalorder %s20, 2
      %s236 = scalar_select %p235, %s20, 2
      %p237 = scmp.lt.s32.totalorder %s22, 0
      %s238 = scalar_select %p237, %s22, 0
      %s239 = sadd.s32 %s238, %s236
      %s240 = scalar_lea.vmem %s2, %s239
      %p241 = pneg %p121
      %p242 = pneg %p118
      %p243 = pneg %p151
      %p244 = pneg %p148
      %p245 = scmp.lt.s32.totalorder %s20, 2
      %s246 = scalar_select %p245, %s20, 2
      %p247 = scmp.lt.s32.totalorder %s21, 1
      %s248 = scalar_select %p247, %s21, 1
      %p249 = scmp.lt.s32.totalorder %s22, 0
      %s250 = scalar_select %p249, %s22, 0
      %s251 = sadd.s32 %s250, %s248
      %s252 = smul.addr %s246, 2
      %s253 = sadd.s32 %s251, %s252
      %s254 = smul.addr %s253, 4
      %s255 = scalar_lea.vmem %s3, %s254
      %p256 = scmp.lt.s32.totalorder %s21, 1
      %s257 = scalar_select %p256, %s21, 1
      %p258 = scmp.lt.s32.totalorder %s23, 0
      %s259 = scalar_select %p258, %s23, 0
      %s260 = sadd.s32 %s259, %s257
      %s261 = smul.addr %s260, 8
      %s262 = scalar_lea.vmem %s0, %s261
      %s263 = smul.u32 4, %s23
      %p264 = scmp.lt.s32.totalorder %s20, 2
      %s265 = scalar_select %p264, %s20, 2
      %p266 = scmp.lt.s32.totalorder %s263, 3
      %s267 = scalar_select %p266, %s263, 3
      %p268 = scmp.lt.s32.totalorder %s22, 0
      %s269 = scalar_select %p268, %s22, 0
      %s270 = sadd.s32 %s269, %s267
      %s271 = smul.addr %s265, 4
      %s272 = sadd.s32 %s270, %s271
      %s273 = smul.addr %s272, 4
      %s274 = scalar_lea.vmem %s1, %s273
      %s275 = smul.u32 4, %s23
      %p276 = scmp.lt.s32.totalorder %s20, 2
      %s277 = scalar_select %p276, %s20, 2
      %p278 = scmp.lt.s32.totalorder %s22, 0
      %s279 = scalar_select %p278, %s22, 0
      %s280 = sadd.s32 %s279, %s277
      %s281 = scalar_lea.vmem %s2, %s280
      %p282 = scmp.lt.s32.totalorder %s20, 2
      %s283 = scalar_select %p282, %s20, 2
      %p284 = scmp.lt.s32.totalorder %s21, 1
      %s285 = scalar_select %p284, %s21, 1
      %p286 = scmp.lt.s32.totalorder %s22, 0
      %s287 = scalar_select %p286, %s22, 0
      %s288 = sadd.s32 %s287, %s285
      %s289 = smul.addr %s283, 2
      %s290 = sadd.s32 %s288, %s289
      %s291 = smul.addr %s290, 4
      %s292 = scalar_lea.vmem %s3, %s291
      %p294 = scmp.eq.s32.totalorder %s23, 0
      // Predicated region
      $region33: #{encoder_gpt2_forward.10} parent=31 // pred_check
        %p295 = pneg %p294
      $region34: #{encoder_gpt2_forward.10} parent=31 // pred_check_branch
        %297 = sbr.rel (%p295) target = $region36
      $region35: #{encoder_gpt2_forward.10} parent=31 // pred_region
        %vm298 = vcmask 261120
        %299 = vst.msk [vmem:[#allocation2] sm:$0xff] %vm298, 0.0
      $region36: #{encoder_gpt2_forward.10} parent=31 // pred_fallthru
        _
      %v300 = vld [vmem:[#allocation2] sm:$0xff]
      %v301 = vld [vmem:[%s262] sm:$0xff]
      %v302 = vpack.c.bf16 %v301, %v301
      %v303 = vld [vmem:[%s274] sm:$0xf]
      %v304 = vld [vmem:[%s274 + $0x4] sm:$0xf]
      %v305 = vld [vmem:[%s274 + $0x8] sm:$0xf]
      %v306 = vld [vmem:[%s274 + $0xc] sm:$0xf]
      %v311 = vunpack.c.l.b16 %v303
      %v312 = vunpack.c.l.b16 %v304
      %v313 = vunpack.c.l.b16 %v305
      %v314 = vunpack.c.l.b16 %v306
      %v315 = vpack.c.b16 %v312, %v311
      %v316 = vpack.c.b16 %v314, %v313
      %vm319 = vcmask 261120
      %v321 = vsel %vm319, %v302, 0
      %323 = vmatprep.subr.bf16.mxu0 0
      %324 = vmatpush1.bf16.msra.mxu0 %v315
      %325 = vmatprep.subr.bf16.mxu0 0
      %326 = vmatpush1.bf16.msra.mxu0 %v316
      %327 = vmatprep.subr.bf16.mxu0 0
      %328 = vmatpush1.bf16.msra.mxu0 0
      %329 = vmatprep.subr.bf16.mxu0 0
      %330 = vmatpush1.bf16.msra.mxu0 0
      %331 = vmatprep.subr.bf16.mxu0 0
      %332 = vmatpush1.bf16.msra.mxu0 0
      %333 = vmatprep.subr.bf16.mxu0 0
      %334 = vmatpush1.bf16.msra.mxu0 0
      %335 = vmatprep.subr.bf16.mxu0 0
      %336 = vmatpush1.bf16.msra.mxu0 0
      %337 = vmatprep.subr.bf16.mxu0 0
      %338 = vmatpush1.bf16.msra.mxu0 0
      %339 = vmatprep.subr.bf16.mxu0 0
      %340 = vmatpush1.bf16.msra.mxu0 0
      %341 = vmatprep.subr.bf16.mxu0 0
      %342 = vmatpush1.bf16.msra.mxu0 0
      %343 = vmatprep.subr.bf16.mxu0 0
      %344 = vmatpush1.bf16.msra.mxu0 0
      %345 = vmatprep.subr.bf16.mxu0 0
      %346 = vmatpush1.bf16.msra.mxu0 0
      %347 = vmatprep.subr.bf16.mxu0 0
      %348 = vmatpush1.bf16.msra.mxu0 0
      %349 = vmatprep.subr.bf16.mxu0 0
      %350 = vmatpush1.bf16.msra.mxu0 0
      %351 = vmatprep.subr.bf16.mxu0 0
      %352 = vmatpush1.bf16.msra.mxu0 0
      %353 = vmatprep.subr.bf16.mxu0 0
      %354 = vmatpush1.bf16.msra.mxu0 0
      %355 = vmatprep.mubr.bf16.mxu0 0
      %356 = vmatmul.mubr.bf16.gmra.mrb[0].mxu0 %v321
      %v357 = vpop.f32.mrb[0].mxu0
      %v358 = vadd.f32 0.0, %v357
      %v359 = vpop.f32.mrb[0].mxu0
      %v360 = vpop.f32.mrb[0].mxu0
      %v361 = vpop.f32.mrb[0].mxu0
      %362 = vdwg.mxu0
      %v363 = vadd.f32 %v300, %v358
      %364 = vst.msk [vmem:[#allocation2] sm:$0xff] %vm319, %v363
      // Predicated region
      $region37: #{encoder_gpt2_forward.10} parent=31 // pred_check
        %p365 = pneg %p294
      $region38: #{encoder_gpt2_forward.10} parent=31 // pred_check_branch
        %367 = sbr.rel (%p365) target = $region40
      $region39: #{encoder_gpt2_forward.10} parent=31 // pred_region
        %v368 = vld [vmem:[#allocation2] sm:$0xff]
        %v369 = vld [vmem:[%s281] sm:$0x1]
        %v371 = vlaneseq
        %v372 = vshrl.u32 %v371, 7
        %v373 = vsub.s32 0, %v372
        %v374 = vrot.slane %v369, %v373
        %v376 = vadd.f32 %v368, %v374
        %v377 = vpack.c.bf16 %v376, %v376
        %vm378 = vcmask 257024
        %379 = vst.msk [vmem:[%s292] sm:$0xf] %vm378, %v377
      $region40: #{encoder_gpt2_forward.10} parent=31 // pred_fallthru
        _
      %p380 = scmp.lt.s32.totalorder %s20, 2
      %s381 = scalar_select %p380, %s20, 2
      %p382 = scmp.lt.s32.totalorder %s21, 1
      %s383 = scalar_select %p382, %s21, 1
      %p384 = scmp.lt.s32.totalorder %s22, 0
      %s385 = scalar_select %p384, %s22, 0
      %s386 = sadd.s32 %s385, %s383
      %s387 = smul.addr %s381, 2
      %s388 = sadd.s32 %s386, %s387
      %s389 = smul.addr %s388, 4
      %s390 = scalar_lea.vmem %s3, %s389
      // Predicated region
      $region41: #{encoder_gpt2_forward.10} parent=31 // pred_check
        %p391 = pneg %p148
      $region42: #{encoder_gpt2_forward.10} parent=31 // pred_check_branch
        %393 = sbr.rel (%p391) target = $region44
      $region43: #{encoder_gpt2_forward.10} parent=31 // pred_region
        _
      $region44: #{encoder_gpt2_forward.10} parent=31 // pred_fallthru
        _
    $region32: #{encoder_gpt2_forward.10} parent=5 // pred_fallthru
      _
    %p394 = scmp.le.s32.totalorder 2, %s9
    // Predicated region
    $region45: #{encoder_gpt2_forward.10} parent=5 // pred_check
      %p395 = pneg %p394
    $region46: #{encoder_gpt2_forward.10} parent=5 // pred_check_branch
      %397 = sbr.rel (%p395) target = $region48
    $region47: #{encoder_gpt2_forward.10} parent=5 // pred_region
      %s398 = ssub.s32 %s9, 2
      // Predicated region
      $region49: #{encoder_gpt2_forward.10} parent=47 // pred_check
        %p399 = pneg %p154
      $region50: #{encoder_gpt2_forward.10} parent=47 // pred_check_branch
        %401 = sbr.rel (%p399) target = $region52
      $region51: #{encoder_gpt2_forward.10} parent=47 // pred_region
        %p402 = scmp.lt.s32.totalorder %s24, 2
        %s403 = scalar_select %p402, %s24, 2
        %p404 = scmp.lt.s32.totalorder %s25, 1
        %s405 = scalar_select %p404, %s25, 1
        %p406 = scmp.lt.s32.totalorder %s26, 0
        %s407 = scalar_select %p406, %s26, 0
        %s408 = sadd.s32 %s407, %s405
        %s409 = smul.addr %s403, 2
        %s410 = sadd.s32 %s408, %s409
        %s411 = smul.addr %s410, 4
        %s412 = scalar_lea.vmem %s3, %s411
      $region52: #{encoder_gpt2_forward.10} parent=47 // pred_fallthru
        _
    $region48: #{encoder_gpt2_forward.10} parent=5 // pred_fallthru
      _
  $region6: #{encoder_gpt2_forward.10} parent=0 // loop_footer
    %s13 = sadd.s32 1, %s9
  $region7: #{encoder_gpt2_forward.10} parent=0 // loop_footer_branch
    %8 = sbr.rel target = $region3
  $region8: #{encoder_gpt2_forward.10} parent=0 // loop_exit
    _

// kernel: encoder_gpt2_forward.13
$region0: #{encoder_gpt2_forward.13}
  #allocation0 [shape = 'u32[]', space=smem, size = 0x4, offset = 0x4, fixed_abs, tag = 'smem constant byte address 0x4 - core index']
  #allocation1 [shape = 'u32[144,128]{1,0:T(1,128)}', space=vmem, size = 0x12000, scoped, tag = 'internal scratch']
  #allocation2 [shape = 'f32[8,64]{1,0:T(8,128)}', space=vmem, size = 0x1000, scoped, tag = 'scratch operand']
  %s0 = inlined_call_operand.vmem [shape: bf16[16,32], index: 0, kind: input, shape index: {}]
  %s1 = inlined_call_operand.vmem [shape: bf16[32,64], index: 1, kind: input, shape index: {}]
  %s2 = inlined_call_operand.vmem [shape: f32[1,64], index: 2, kind: input, shape index: {}]
  %s3 = inlined_call_operand.vmem [shape: bf16[16,64], index: 3, kind: output, shape index: {}]
  %s4 = sld [smem:[#allocation0]]
  $region53: #{encoder_gpt2_forward.13} parent=0
    _
  %s6 = ssub.s32 1, %s4
  %s7 = scalar_select 0, %s6, %s4
  loop: start=0, step=1, limit=4
  $region2: #{encoder_gpt2_forward.13} parent=0 // loop_pre_header
    _
  $region3: #{encoder_gpt2_forward.13} parent=0 // loop_header
    %s9 = sphi 0, %s13
    %p10 = scmp.ge.s32.totalorder %s9, 4
    %s16 = sphi 0, %s35
    %s17 = sphi 0, %s31
    %s18 = sphi 0, %s27
    %s19 = sphi 0, %s16
    %s20 = sphi 0, %s17
    %s21 = sphi 0, %s18
    %s22 = sphi 0, %s19
    %s23 = sphi 0, %s20
    %s24 = sphi 0, %s21
    %s40 = sphi 0, %s42
    %s43 = sphi 0, %s40
    %s44 = sphi 0, %s43
    %s60 = sphi 0, %s44
    %s68 = sphi 0, %s70
    %s71 = sphi 0, %s68
    %s72 = sphi 0, %s71
    %s88 = sphi 0, %s72
    %s94 = sphi 0, %s96
    %s97 = sphi 0, %s94
    %s98 = sphi 0, %s97
    %s114 = sphi 0, %s98
    %s122 = sphi 0, %s124
    %s125 = sphi 0, %s122
    %s126 = sphi 0, %s125
    %s142 = sphi 0, %s126
  $region4: #{encoder_gpt2_forward.13} parent=0 // loop_header_branch
    %12 = sbr.rel (%p10) target = $region8
  $region5: #{encoder_gpt2_forward.13} parent=0 // loop_body
    %s14 = ssub.s32 %s9, 1
    %s15 = ssub.s32 %s9, 2
    %s25 = sadd.s32 1, %s18
    %p26 = scmp.ge.s32.totalorder %s25, 1
    %s27 = scalar_select %p26, 0, %s25
    %s28 = sadd.s32 1, %s17
    %s29 = scalar_select %p26, %s28, %s17
    %p30 = scmp.ge.s32.totalorder %s29, 1
    %s31 = scalar_select %p30, 0, %s29
    %s32 = sadd.s32 1, %s16
    %s33 = scalar_select %p30, %s32, %s16
    %p34 = scmp.ge.s32.totalorder %s33, 2
    %s35 = scalar_select %p34, 0, %s33
    %s36 = ssub.s32 %s16, %s35
    %s37 = ssub.s32 %s18, %s27
    %s38 = sor.u32 %s36, %s37
    %p39 = scmp.eq.s32.totalorder %s38, 0
    %s41 = sadd.s32 %s40, 1
    %s42 = scalar_select %p39, %s40, %s41
    %p45 = pneg %p39
    %p46 = scmp.eq.s32.totalorder %s9, 1
    %p47 = por %p45, %p46
    %p48 = scmp.ne.s32.totalorder %s40, %s43
    %p49 = scmp.eq.s32.totalorder %s9, 0
    %p50 = por %p48, %p49
    %p51 = scmp.ne.s32.totalorder %s40, %s43
    %p52 = scmp.eq.s32.totalorder %s14, 1
    %p53 = por %p51, %p52
    %p54 = scmp.ne.s32.totalorder %s43, %s44
    %p55 = scmp.eq.s32.totalorder %s14, 0
    %p56 = por %p54, %p55
    %p57 = scmp.ne.s32.totalorder %s43, %s44
    %p58 = scmp.eq.s32.totalorder %s15, 1
    %p59 = por %p57, %p58
    %p61 = scmp.ne.s32.totalorder %s44, %s60
    %p62 = scmp.eq.s32.totalorder %s15, 0
    %p63 = por %p61, %p62
    %s64 = ssub.s32 %s18, %s27
    %s65 = ssub.s32 %s17, %s31
    %s66 = sor.u32 %s64, %s65
    %p67 = scmp.eq.s32.totalorder %s66, 0
    %s69 = sadd.s32 %s68, 1
    %s70 = scalar_select %p67, %s68, %s69
    %p73 = pneg %p67
    %p74 = scmp.eq.s32.totalorder %s9, 1
    %p75 = por %p73, %p74
    %p76 = scmp.ne.s32.totalorder %s68, %s71
    %p77 = scmp.eq.s32.totalorder %s9, 0
    %p78 = por %p76, %p77
    %p79 = scmp.ne.s32.totalorder %s68, %s71
    %p80 = scmp.eq.s32.totalorder %s14, 1
    %p81 = por %p79, %p80
    %p82 = scmp.ne.s32.totalorder %s71, %s72
    %p83 = scmp.eq.s32.totalorder %s14, 0
    %p84 = por %p82, %p83
    %p85 = scmp.ne.s32.totalorder %s71, %s72
    %p86 = scmp.eq.s32.totalorder %s15, 1
    %p87 = por %p85, %p86
    %p89 = scmp.ne.s32.totalorder %s72, %s88
    %p90 = scmp.eq.s32.totalorder %s15, 0
    %p91 = por %p89, %p90
    %s92 = ssub.s32 %s17, %s31
    %p93 = scmp.eq.s32.totalorder %s92, 0
    %s95 = sadd.s32 %s94, 1
    %s96 = scalar_select %p93, %s94, %s95
    %p99 = pneg %p93
    %p100 = scmp.eq.s32.totalorder %s9, 1
    %p101 = por %p99, %p100
    %p102 = scmp.ne.s32.totalorder %s94, %s97
    %p103 = scmp.eq.s32.totalorder %s9, 0
    %p104 = por %p102, %p103
    %p105 = scmp.ne.s32.totalorder %s94, %s97
    %p106 = scmp.eq.s32.totalorder %s14, 1
    %p107 = por %p105, %p106
    %p108 = scmp.ne.s32.totalorder %s97, %s98
    %p109 = scmp.eq.s32.totalorder %s14, 0
    %p110 = por %p108, %p109
    %p111 = scmp.ne.s32.totalorder %s97, %s98
    %p112 = scmp.eq.s32.totalorder %s15, 1
    %p113 = por %p111, %p112
    %p115 = scmp.ne.s32.totalorder %s98, %s114
    %p116 = scmp.eq.s32.totalorder %s15, 0
    %p117 = por %p115, %p116
    %s118 = ssub.s32 %s16, %s35
    %s119 = ssub.s32 %s17, %s31
    %s120 = sor.u32 %s118, %s119
    %p121 = scmp.eq.s32.totalorder %s120, 0
    %s123 = sadd.s32 %s122, 1
    %s124 = scalar_select %p121, %s122, %s123
    %p127 = pneg %p121
    %p128 = scmp.eq.s32.totalorder %s9, 1
    %p129 = por %p127, %p128
    %p130 = scmp.ne.s32.totalorder %s122, %s125
    %p131 = scmp.eq.s32.totalorder %s9, 0
    %p132 = por %p130, %p131
    %p133 = scmp.ne.s32.totalorder %s122, %s125
    %p134 = scmp.eq.s32.totalorder %s14, 1
    %p135 = por %p133, %p134
    %p136 = scmp.ne.s32.totalorder %s125, %s126
    %p137 = scmp.eq.s32.totalorder %s14, 0
    %p138 = por %p136, %p137
    %p139 = scmp.ne.s32.totalorder %s125, %s126
    %p140 = scmp.eq.s32.totalorder %s15, 1
    %p141 = por %p139, %p140
    %p143 = scmp.ne.s32.totalorder %s126, %s142
    %p144 = scmp.eq.s32.totalorder %s15, 0
    %p145 = por %p143, %p144
    %p146 = scmp.le.s32.totalorder 1, %s9
    %p147 = scmp.lt.s32.totalorder %s9, 3
    %p148 = pnand %p146, %p147
    %p149 = pneg %p148
    // Predicated region
    $region9: #{encoder_gpt2_forward.13} parent=5 // pred_check
      _
    $region10: #{encoder_gpt2_forward.13} parent=5 // pred_check_branch
      %151 = sbr.rel (%p148) target = $region12
    $region11: #{encoder_gpt2_forward.13} parent=5 // pred_region
      %s152 = ssub.s32 %s9, 1
      // Predicated region
      $region13: #{encoder_gpt2_forward.13} parent=11 // pred_check
        %p153 = pneg %p84
      $region14: #{encoder_gpt2_forward.13} parent=11 // pred_check_branch
        %155 = sbr.rel (%p153) target = $region16
      $region15: #{encoder_gpt2_forward.13} parent=11 // pred_region
        %s156 = smul.u32 4, %s21
        %p157 = scmp.lt.s32.totalorder %s156, 3
        %s158 = scalar_select %p157, %s156, 3
        %p159 = scmp.lt.s32.totalorder %s20, 0
        %s160 = scalar_select %p159, %s20, 0
        %s161 = sadd.s32 %s160, %s158
        %s162 = smul.addr %s161, 4
        %s163 = scalar_lea.vmem %s1, %s162
        %s164 = smul.u32 4, %s21
      $region16: #{encoder_gpt2_forward.13} parent=11 // pred_fallthru
        _
      // Predicated region
      $region17: #{encoder_gpt2_forward.13} parent=11 // pred_check
        %p165 = pneg %p110
      $region18: #{encoder_gpt2_forward.13} parent=11 // pred_check_branch
        %167 = sbr.rel (%p165) target = $region20
      $region19: #{encoder_gpt2_forward.13} parent=11 // pred_region
        %p168 = scmp.lt.s32.totalorder %s20, 0
        %s169 = scalar_select %p168, %s20, 0
        %s170 = scalar_lea.vmem %s2, %s169
      $region20: #{encoder_gpt2_forward.13} parent=11 // pred_fallthru
        _
    $region12: #{encoder_gpt2_forward.13} parent=5 // pred_fallthru
      _
    %p171 = scmp.lt.s32.totalorder %s9, 2
    // Predicated region
    $region21: #{encoder_gpt2_forward.13} parent=5 // pred_check
      %p172 = pneg %p171
    $region22: #{encoder_gpt2_forward.13} parent=5 // pred_check_branch
      %174 = sbr.rel (%p172) target = $region24
    $region23: #{encoder_gpt2_forward.13} parent=5 // pred_region
      // Predicated region
      $region25: #{encoder_gpt2_forward.13} parent=23 // pred_check
        %p175 = pneg %p50
      $region26: #{encoder_gpt2_forward.13} parent=23 // pred_check_branch
        %177 = sbr.rel (%p175) target = $region28
      $region27: #{encoder_gpt2_forward.13} parent=23 // pred_region
        %p178 = scmp.lt.s32.totalorder %s16, 1
        %s179 = scalar_select %p178, %s16, 1
        %p180 = scmp.lt.s32.totalorder %s18, 0
        %s181 = scalar_select %p180, %s18, 0
        %s182 = sadd.s32 %s181, %s179
        %s183 = smul.addr %s182, 4
        %s184 = scalar_lea.vmem %s0, %s183
      $region28: #{encoder_gpt2_forward.13} parent=23 // pred_fallthru
        _
    $region24: #{encoder_gpt2_forward.13} parent=5 // pred_fallthru
      _
    %p185 = scmp.le.s32.totalorder 1, %s9
    %p186 = scmp.lt.s32.totalorder %s9, 3
    %p187 = pnand %p185, %p186
    %p188 = pneg %p187
    // Predicated region
    $region29: #{encoder_gpt2_forward.13} parent=5 // pred_check
      _
    $region30: #{encoder_gpt2_forward.13} parent=5 // pred_check_branch
      %190 = sbr.rel (%p187) target = $region32
    $region31: #{encoder_gpt2_forward.13} parent=5 // pred_region
      %s191 = ssub.s32 %s9, 1
      %p192 = scmp.lt.s32.totalorder %s19, 1
      %s193 = scalar_select %p192, %s19, 1
      %p194 = scmp.lt.s32.totalorder %s21, 0
      %s195 = scalar_select %p194, %s21, 0
      %s196 = sadd.s32 %s195, %s193
      %s197 = smul.addr %s196, 4
      %s198 = scalar_lea.vmem %s0, %s197
      %p199 = pneg %p56
      %p200 = pneg %p53
      %s201 = smul.u32 4, %s21
      %p202 = scmp.lt.s32.totalorder %s201, 3
      %s203 = scalar_select %p202, %s201, 3
      %p204 = scmp.lt.s32.totalorder %s20, 0
      %s205 = scalar_select %p204, %s20, 0
      %s206 = sadd.s32 %s205, %s203
      %s207 = smul.addr %s206, 4
      %s208 = scalar_lea.vmem %s1, %s207
      %p209 = pneg %p84
      %p210 = pneg %p81
      %p211 = scmp.lt.s32.totalorder %s20, 0
      %s212 = scalar_select %p211, %s20, 0
      %s213 = scalar_lea.vmem %s2, %s212
      %p214 = pneg %p110
      %p215 = pneg %p107
      %p216 = pneg %p138
      %p217 = pneg %p135
      %p218 = scmp.lt.s32.totalorder %s19, 1
      %s219 = scalar_select %p218, %s19, 1
      %p220 = scmp.lt.s32.totalorder %s20, 0
      %s221 = scalar_select %p220, %s20, 0
      %s222 = sadd.s32 %s221, %s219
      %s223 = smul.addr %s222, 4
      %s224 = scalar_lea.vmem %s3, %s223
      %p225 = scmp.lt.s32.totalorder %s19, 1
      %s226 = scalar_select %p225, %s19, 1
      %p227 = scmp.lt.s32.totalorder %s21, 0
      %s228 = scalar_select %p227, %s21, 0
      %s229 = sadd.s32 %s228, %s226
      %s230 = smul.addr %s229, 4
      %s231 = scalar_lea.vmem %s0, %s230
      %s232 = smul.u32 4, %s21
      %p233 = scmp.lt.s32.totalorder %s232, 3
      %s234 = scalar_select %p233, %s232, 3
      %p235 = scmp.lt.s32.totalorder %s20, 0
      %s236 = scalar_select %p235, %s20, 0
      %s237 = sadd.s32 %s236, %s234
      %s238 = smul.addr %s237, 4
      %s239 = scalar_lea.vmem %s1, %s238
      %s240 = smul.u32 4, %s21
      %p241 = scmp.lt.s32.totalorder %s20, 0
      %s242 = scalar_select %p241, %s20, 0
      %s243 = scalar_lea.vmem %s2, %s242
      %p244 = scmp.lt.s32.totalorder %s19, 1
      %s245 = scalar_select %p244, %s19, 1
      %p246 = scmp.lt.s32.totalorder %s20, 0
      %s247 = scalar_select %p246, %s20, 0
      %s248 = sadd.s32 %s247, %s245
      %s249 = smul.addr %s248, 4
      %s250 = scalar_lea.vmem %s3, %s249
      %p252 = scmp.eq.s32.totalorder %s21, 0
      // Predicated region
      $region33: #{encoder_gpt2_forward.13} parent=31 // pred_check
        %p253 = pneg %p252
      $region34: #{encoder_gpt2_forward.13} parent=31 // pred_check_branch
        %255 = sbr.rel (%p253) target = $region36
      $region35: #{encoder_gpt2_forward.13} parent=31 // pred_region
        %vm256 = vcmask 523264
        %257 = vst.msk [vmem:[#allocation2] sm:$0xff] %vm256, 0.0
      $region36: #{encoder_gpt2_forward.13} parent=31 // pred_fallthru
        _
      %v258 = vld [vmem:[#allocation2] sm:$0xff]
      %v259 = vld [vmem:[%s231] sm:$0xf]
      %v260 = vld [vmem:[%s239] sm:$0xf]
      %v261 = vld [vmem:[%s239 + $0x4] sm:$0xf]
      %v262 = vld [vmem:[%s239 + $0x8] sm:$0xf]
      %v263 = vld [vmem:[%s239 + $0xc] sm:$0xf]
      %v268 = vunpack.c.l.b16 %v260
      %v269 = vunpack.c.l.b16 %v261
      %v270 = vunpack.c.l.b16 %v262
      %v271 = vunpack.c.l.b16 %v263
      %v272 = vpack.c.b16 %v269, %v268
      %v273 = vpack.c.b16 %v271, %v270
      %vm276 = vcmask 261120
      %v278 = vsel %vm276, %v259, 0
      %280 = vmatprep.subr.bf16.mxu0 0
      %281 = vmatpush1.bf16.msra.mxu0 %v272
      %282 = vmatprep.subr.bf16.mxu0 0
      %283 = vmatpush1.bf16.msra.mxu0 %v273
      %284 = vmatprep.subr.bf16.mxu0 0
      %285 = vmatpush1.bf16.msra.mxu0 0
      %286 = vmatprep.subr.bf16.mxu0 0
      %287 = vmatpush1.bf16.msra.mxu0 0
      %288 = vmatprep.subr.bf16.mxu0 0
      %289 = vmatpush1.bf16.msra.mxu0 0
      %290 = vmatprep.subr.bf16.mxu0 0
      %291 = vmatpush1.bf16.msra.mxu0 0
      %292 = vmatprep.subr.bf16.mxu0 0
      %293 = vmatpush1.bf16.msra.mxu0 0
      %294 = vmatprep.subr.bf16.mxu0 0
      %295 = vmatpush1.bf16.msra.mxu0 0
      %296 = vmatprep.subr.bf16.mxu0 0
      %297 = vmatpush1.bf16.msra.mxu0 0
      %298 = vmatprep.subr.bf16.mxu0 0
      %299 = vmatpush1.bf16.msra.mxu0 0
      %300 = vmatprep.subr.bf16.mxu0 0
      %301 = vmatpush1.bf16.msra.mxu0 0
      %302 = vmatprep.subr.bf16.mxu0 0
      %303 = vmatpush1.bf16.msra.mxu0 0
      %304 = vmatprep.subr.bf16.mxu0 0
      %305 = vmatpush1.bf16.msra.mxu0 0
      %306 = vmatprep.subr.bf16.mxu0 0
      %307 = vmatpush1.bf16.msra.mxu0 0
      %308 = vmatprep.subr.bf16.mxu0 0
      %309 = vmatpush1.bf16.msra.mxu0 0
      %310 = vmatprep.subr.bf16.mxu0 0
      %311 = vmatpush1.bf16.msra.mxu0 0
      %312 = vmatprep.mubr.bf16.mxu0 0
      %313 = vmatmul.mubr.bf16.gmra.mrb[0].mxu0 %v278
      %v314 = vpop.f32.mrb[0].mxu0
      %v315 = vadd.f32 0.0, %v314
      %v316 = vpop.f32.mrb[0].mxu0
      %v317 = vpop.f32.mrb[0].mxu0
      %v318 = vpop.f32.mrb[0].mxu0
      %319 = vdwg.mxu0
      %v320 = vadd.f32 %v258, %v315
      %vm321 = vcmask 523264
      %322 = vst.msk [vmem:[#allocation2] sm:$0xff] %vm321, %v320
      // Predicated region
      $region37: #{encoder_gpt2_forward.13} parent=31 // pred_check
        %p323 = pneg %p252
      $region38: #{encoder_gpt2_forward.13} parent=31 // pred_check_branch
        %325 = sbr.rel (%p323) target = $region40
      $region39: #{encoder_gpt2_forward.13} parent=31 // pred_region
        %v326 = vld [vmem:[#allocation2] sm:$0xff]
        %v327 = vld [vmem:[%s243] sm:$0x1]
        %v329 = vlaneseq
        %v330 = vshrl.u32 %v329, 7
        %v331 = vsub.s32 0, %v330
        %v332 = vrot.slane %v327, %v331
        %v334 = vadd.f32 %v326, %v332
        %v335 = vmax.f32 %v334, 0.0
        %v336 = vpack.c.bf16 %v335, %v335
        %vm337 = vcmask 519168
        %338 = vst.msk [vmem:[%s250] sm:$0xf] %vm337, %v336
      $region40: #{encoder_gpt2_forward.13} parent=31 // pred_fallthru
        _
      %p339 = scmp.lt.s32.totalorder %s19, 1
      %s340 = scalar_select %p339, %s19, 1
      %p341 = scmp.lt.s32.totalorder %s20, 0
      %s342 = scalar_select %p341, %s20, 0
      %s343 = sadd.s32 %s342, %s340
      %s344 = smul.addr %s343, 4
      %s345 = scalar_lea.vmem %s3, %s344
      // Predicated region
      $region41: #{encoder_gpt2_forward.13} parent=31 // pred_check
        %p346 = pneg %p135
      $region42: #{encoder_gpt2_forward.13} parent=31 // pred_check_branch
        %348 = sbr.rel (%p346) target = $region44
      $region43: #{encoder_gpt2_forward.13} parent=31 // pred_region
        _
      $region44: #{encoder_gpt2_forward.13} parent=31 // pred_fallthru
        _
    $region32: #{encoder_gpt2_forward.13} parent=5 // pred_fallthru
      _
    %p349 = scmp.le.s32.totalorder 2, %s9
    // Predicated region
    $region45: #{encoder_gpt2_forward.13} parent=5 // pred_check
      %p350 = pneg %p349
    $region46: #{encoder_gpt2_forward.13} parent=5 // pred_check_branch
      %352 = sbr.rel (%p350) target = $region48
    $region47: #{encoder_gpt2_forward.13} parent=5 // pred_region
      %s353 = ssub.s32 %s9, 2
      // Predicated region
      $region49: #{encoder_gpt2_forward.13} parent=47 // pred_check
        %p354 = pneg %p141
      $region50: #{encoder_gpt2_forward.13} parent=47 // pred_check_branch
        %356 = sbr.rel (%p354) target = $region52
      $region51: #{encoder_gpt2_forward.13} parent=47 // pred_region
        %p357 = scmp.lt.s32.totalorder %s22, 1
        %s358 = scalar_select %p357, %s22, 1
        %p359 = scmp.lt.s32.totalorder %s23, 0
        %s360 = scalar_select %p359, %s23, 0
        %s361 = sadd.s32 %s360, %s358
        %s362 = smul.addr %s361, 4
        %s363 = scalar_lea.vmem %s3, %s362
      $region52: #{encoder_gpt2_forward.13} parent=47 // pred_fallthru
        _
    $region48: #{encoder_gpt2_forward.13} parent=5 // pred_fallthru
      _
  $region6: #{encoder_gpt2_forward.13} parent=0 // loop_footer
    %s13 = sadd.s32 1, %s9
  $region7: #{encoder_gpt2_forward.13} parent=0 // loop_footer_branch
    %8 = sbr.rel target = $region3
  $region8: #{encoder_gpt2_forward.13} parent=0 // loop_exit
    _

// kernel: encoder_gpt2_forward.12
$region0: #{encoder_gpt2_forward.12}
  #allocation0 [shape = 'u32[]', space=smem, size = 0x4, offset = 0x4, fixed_abs, tag = 'smem constant byte address 0x4 - core index']
  #allocation1 [shape = 'u32[144,128]{1,0:T(1,128)}', space=vmem, size = 0x12000, scoped, tag = 'internal scratch']
  #allocation2 [shape = 'f32[8,32]{1,0:T(8,128)}', space=vmem, size = 0x1000, scoped, tag = 'scratch operand']
  %s0 = inlined_call_operand.vmem [shape: bf16[16,32], index: 0, kind: input, shape index: {}]
  %s1 = inlined_call_operand.vmem [shape: bf16[32,32], index: 1, kind: input, shape index: {}]
  %s2 = inlined_call_operand.vmem [shape: f32[1,32], index: 2, kind: input, shape index: {}]
  %s3 = inlined_call_operand.vmem [shape: f32[16,32], index: 3, kind: input, shape index: {}]
  %s4 = inlined_call_operand.vmem [shape: f32[1,32], index: 4, kind: input, shape index: {}]
  %s5 = inlined_call_operand.vmem [shape: f32[1,32], index: 5, kind: input, shape index: {}]
  %s6 = inlined_call_operand.vmem [shape: f32[16,32], index: 6, kind: output, shape index: {0}]
  %s7 = inlined_call_operand.vmem [shape: bf16[16,32], index: 7, kind: output, shape index: {1}]
  %8 = xla_tuple %s6, %s7
  %s9 = sld [smem:[#allocation0]]
  $region73: #{encoder_gpt2_forward.12} parent=0
    _
  %s11 = ssub.s32 1, %s9
  %s12 = scalar_select 0, %s11, %s9
  loop: start=0, step=1, limit=4
  $region2: #{encoder_gpt2_forward.12} parent=0 // loop_pre_header
    _
  $region3: #{encoder_gpt2_forward.12} parent=0 // loop_header
    %s14 = sphi 0, %s18
    %p15 = scmp.ge.s32.totalorder %s14, 4
    %s21 = sphi 0, %s33
    %s22 = sphi 0, %s29
    %s23 = sphi 0, %s21
    %s24 = sphi 0, %s22
    %s25 = sphi 0, %s23
    %s26 = sphi 0, %s24
    %s38 = sphi 0, %s40
    %s41 = sphi 0, %s38
    %s42 = sphi 0, %s41
    %s58 = sphi 0, %s42
    %s64 = sphi 0, %s66
    %s67 = sphi 0, %s64
    %s68 = sphi 0, %s67
    %s84 = sphi 0, %s68
    %s88 = sphi 0, %s88
    %s90 = sphi 0, %s88
    %s91 = sphi 0, %s90
    %s105 = sphi 0, %s91
    %s111 = sphi 0, %s113
    %s114 = sphi 0, %s111
    %s115 = sphi 0, %s114
    %s131 = sphi 0, %s115
    %s135 = sphi 0, %s135
    %s137 = sphi 0, %s135
    %s138 = sphi 0, %s137
    %s152 = sphi 0, %s138
    %s156 = sphi 0, %s156
    %s158 = sphi 0, %s156
    %s159 = sphi 0, %s158
    %s173 = sphi 0, %s159
    %s179 = sphi 0, %s181
    %s182 = sphi 0, %s179
    %s183 = sphi 0, %s182
    %s199 = sphi 0, %s183
    %s205 = sphi 0, %s207
    %s208 = sphi 0, %s205
    %s209 = sphi 0, %s208
    %s225 = sphi 0, %s209
  $region4: #{encoder_gpt2_forward.12} parent=0 // loop_header_branch
    %17 = sbr.rel (%p15) target = $region8
  $region5: #{encoder_gpt2_forward.12} parent=0 // loop_body
    %s19 = ssub.s32 %s14, 1
    %s20 = ssub.s32 %s14, 2
    %s27 = sadd.s32 1, %s22
    %p28 = scmp.ge.s32.totalorder %s27, 1
    %s29 = scalar_select %p28, 0, %s27
    %s30 = sadd.s32 1, %s21
    %s31 = scalar_select %p28, %s30, %s21
    %p32 = scmp.ge.s32.totalorder %s31, 2
    %s33 = scalar_select %p32, 0, %s31
    %s34 = ssub.s32 %s21, %s33
    %s35 = ssub.s32 %s22, %s29
    %s36 = sor.u32 %s34, %s35
    %p37 = scmp.eq.s32.totalorder %s36, 0
    %s39 = sadd.s32 %s38, 1
    %s40 = scalar_select %p37, %s38, %s39
    %p43 = pneg %p37
    %p44 = scmp.eq.s32.totalorder %s14, 1
    %p45 = por %p43, %p44
    %p46 = scmp.ne.s32.totalorder %s38, %s41
    %p47 = scmp.eq.s32.totalorder %s14, 0
    %p48 = por %p46, %p47
    %p49 = scmp.ne.s32.totalorder %s38, %s41
    %p50 = scmp.eq.s32.totalorder %s19, 1
    %p51 = por %p49, %p50
    %p52 = scmp.ne.s32.totalorder %s41, %s42
    %p53 = scmp.eq.s32.totalorder %s19, 0
    %p54 = por %p52, %p53
    %p55 = scmp.ne.s32.totalorder %s41, %s42
    %p56 = scmp.eq.s32.totalorder %s20, 1
    %p57 = por %p55, %p56
    %p59 = scmp.ne.s32.totalorder %s42, %s58
    %p60 = scmp.eq.s32.totalorder %s20, 0
    %p61 = por %p59, %p60
    %s62 = ssub.s32 %s22, %s29
    %p63 = scmp.eq.s32.totalorder %s62, 0
    %s65 = sadd.s32 %s64, 1
    %s66 = scalar_select %p63, %s64, %s65
    %p69 = pneg %p63
    %p70 = scmp.eq.s32.totalorder %s14, 1
    %p71 = por %p69, %p70
    %p72 = scmp.ne.s32.totalorder %s64, %s67
    %p73 = scmp.eq.s32.totalorder %s14, 0
    %p74 = por %p72, %p73
    %p75 = scmp.ne.s32.totalorder %s64, %s67
    %p76 = scmp.eq.s32.totalorder %s19, 1
    %p77 = por %p75, %p76
    %p78 = scmp.ne.s32.totalorder %s67, %s68
    %p79 = scmp.eq.s32.totalorder %s19, 0
    %p80 = por %p78, %p79
    %p81 = scmp.ne.s32.totalorder %s67, %s68
    %p82 = scmp.eq.s32.totalorder %s20, 1
    %p83 = por %p81, %p82
    %p85 = scmp.ne.s32.totalorder %s68, %s84
    %p86 = scmp.eq.s32.totalorder %s20, 0
    %p87 = por %p85, %p86
    %s89 = sadd.s32 %s88, 1
    %p92 = scmp.eq.s32.totalorder %s14, 1
    %p93 = scmp.ne.s32.totalorder %s88, %s90
    %p94 = scmp.eq.s32.totalorder %s14, 0
    %p95 = por %p93, %p94
    %p96 = scmp.ne.s32.totalorder %s88, %s90
    %p97 = scmp.eq.s32.totalorder %s19, 1
    %p98 = por %p96, %p97
    %p99 = scmp.ne.s32.totalorder %s90, %s91
    %p100 = scmp.eq.s32.totalorder %s19, 0
    %p101 = por %p99, %p100
    %p102 = scmp.ne.s32.totalorder %s90, %s91
    %p103 = scmp.eq.s32.totalorder %s20, 1
    %p104 = por %p102, %p103
    %p106 = scmp.ne.s32.totalorder %s91, %s105
    %p107 = scmp.eq.s32.totalorder %s20, 0
    %p108 = por %p106, %p107
    %s109 = ssub.s32 %s21, %s33
    %p110 = scmp.eq.s32.totalorder %s109, 0
    %s112 = sadd.s32 %s111, 1
    %s113 = scalar_select %p110, %s111, %s112
    %p116 = pneg %p110
    %p117 = scmp.eq.s32.totalorder %s14, 1
    %p118 = por %p116, %p117
    %p119 = scmp.ne.s32.totalorder %s111, %s114
    %p120 = scmp.eq.s32.totalorder %s14, 0
    %p121 = por %p119, %p120
    %p122 = scmp.ne.s32.totalorder %s111, %s114
    %p123 = scmp.eq.s32.totalorder %s19, 1
    %p124 = por %p122, %p123
    %p125 = scmp.ne.s32.totalorder %s114, %s115
    %p126 = scmp.eq.s32.totalorder %s19, 0
    %p127 = por %p125, %p126
    %p128 = scmp.ne.s32.totalorder %s114, %s115
    %p129 = scmp.eq.s32.totalorder %s20, 1
    %p130 = por %p128, %p129
    %p132 = scmp.ne.s32.totalorder %s115, %s131
    %p133 = scmp.eq.s32.totalorder %s20, 0
    %p134 = por %p132, %p133
    %s136 = sadd.s32 %s135, 1
    %p139 = scmp.eq.s32.totalorder %s14, 1
    %p140 = scmp.ne.s32.totalorder %s135, %s137
    %p141 = scmp.eq.s32.totalorder %s14, 0
    %p142 = por %p140, %p141
    %p143 = scmp.ne.s32.totalorder %s135, %s137
    %p144 = scmp.eq.s32.totalorder %s19, 1
    %p145 = por %p143, %p144
    %p146 = scmp.ne.s32.totalorder %s137, %s138
    %p147 = scmp.eq.s32.totalorder %s19, 0
    %p148 = por %p146, %p147
    %p149 = scmp.ne.s32.totalorder %s137, %s138
    %p150 = scmp.eq.s32.totalorder %s20, 1
    %p151 = por %p149, %p150
    %p153 = scmp.ne.s32.totalorder %s138, %s152
    %p154 = scmp.eq.s32.totalorder %s20, 0
    %p155 = por %p153, %p154
    %s157 = sadd.s32 %s156, 1
    %p160 = scmp.eq.s32.totalorder %s14, 1
    %p161 = scmp.ne.s32.totalorder %s156, %s158
    %p162 = scmp.eq.s32.totalorder %s14, 0
    %p163 = por %p161, %p162
    %p164 = scmp.ne.s32.totalorder %s156, %s158
    %p165 = scmp.eq.s32.totalorder %s19, 1
    %p166 = por %p164, %p165
    %p167 = scmp.ne.s32.totalorder %s158, %s159
    %p168 = scmp.eq.s32.totalorder %s19, 0
    %p169 = por %p167, %p168
    %p170 = scmp.ne.s32.totalorder %s158, %s159
    %p171 = scmp.eq.s32.totalorder %s20, 1
    %p172 = por %p170, %p171
    %p174 = scmp.ne.s32.totalorder %s159, %s173
    %p175 = scmp.eq.s32.totalorder %s20, 0
    %p176 = por %p174, %p175
    %s177 = ssub.s32 %s21, %s33
    %p178 = scmp.eq.s32.totalorder %s177, 0
    %s180 = sadd.s32 %s179, 1
    %s181 = scalar_select %p178, %s179, %s180
    %p184 = pneg %p178
    %p185 = scmp.eq.s32.totalorder %s14, 1
    %p186 = por %p184, %p185
    %p187 = scmp.ne.s32.totalorder %s179, %s182
    %p188 = scmp.eq.s32.totalorder %s14, 0
    %p189 = por %p187, %p188
    %p190 = scmp.ne.s32.totalorder %s179, %s182
    %p191 = scmp.eq.s32.totalorder %s19, 1
    %p192 = por %p190, %p191
    %p193 = scmp.ne.s32.totalorder %s182, %s183
    %p194 = scmp.eq.s32.totalorder %s19, 0
    %p195 = por %p193, %p194
    %p196 = scmp.ne.s32.totalorder %s182, %s183
    %p197 = scmp.eq.s32.totalorder %s20, 1
    %p198 = por %p196, %p197
    %p200 = scmp.ne.s32.totalorder %s183, %s199
    %p201 = scmp.eq.s32.totalorder %s20, 0
    %p202 = por %p200, %p201
    %s203 = ssub.s32 %s21, %s33
    %p204 = scmp.eq.s32.totalorder %s203, 0
    %s206 = sadd.s32 %s205, 1
    %s207 = scalar_select %p204, %s205, %s206
    %p210 = pneg %p204
    %p211 = scmp.eq.s32.totalorder %s14, 1
    %p212 = por %p210, %p211
    %p213 = scmp.ne.s32.totalorder %s205, %s208
    %p214 = scmp.eq.s32.totalorder %s14, 0
    %p215 = por %p213, %p214
    %p216 = scmp.ne.s32.totalorder %s205, %s208
    %p217 = scmp.eq.s32.totalorder %s19, 1
    %p218 = por %p216, %p217
    %p219 = scmp.ne.s32.totalorder %s208, %s209
    %p220 = scmp.eq.s32.totalorder %s19, 0
    %p221 = por %p219, %p220
    %p222 = scmp.ne.s32.totalorder %s208, %s209
    %p223 = scmp.eq.s32.totalorder %s20, 1
    %p224 = por %p222, %p223
    %p226 = scmp.ne.s32.totalorder %s209, %s225
    %p227 = scmp.eq.s32.totalorder %s20, 0
    %p228 = por %p226, %p227
    %p229 = scmp.le.s32.totalorder 1, %s14
    %p230 = scmp.lt.s32.totalorder %s14, 3
    %p231 = pnand %p229, %p230
    %p232 = pneg %p231
    // Predicated region
    $region9: #{encoder_gpt2_forward.12} parent=5 // pred_check
      _
    $region10: #{encoder_gpt2_forward.12} parent=5 // pred_check_branch
      %234 = sbr.rel (%p231) target = $region12
    $region11: #{encoder_gpt2_forward.12} parent=5 // pred_region
      %s235 = ssub.s32 %s14, 1
      // Predicated region
      $region13: #{encoder_gpt2_forward.12} parent=11 // pred_check
        %p236 = pneg %p80
      $region14: #{encoder_gpt2_forward.12} parent=11 // pred_check_branch
        %238 = sbr.rel (%p236) target = $region16
      $region15: #{encoder_gpt2_forward.12} parent=11 // pred_region
        %s239 = smul.u32 4, %s24
        %p240 = scmp.lt.s32.totalorder %s239, 3
        %s241 = scalar_select %p240, %s239, 3
        %s242 = smul.addr %s241, 4
        %s243 = scalar_lea.vmem %s1, %s242
        %s244 = smul.u32 4, %s24
      $region16: #{encoder_gpt2_forward.12} parent=11 // pred_fallthru
        _
      // Predicated region
      $region17: #{encoder_gpt2_forward.12} parent=11 // pred_check
        %p245 = pneg %p101
      $region18: #{encoder_gpt2_forward.12} parent=11 // pred_check_branch
        %247 = sbr.rel (%p245) target = $region20
      $region19: #{encoder_gpt2_forward.12} parent=11 // pred_region
        _
      $region20: #{encoder_gpt2_forward.12} parent=11 // pred_fallthru
        _
      // Predicated region
      $region21: #{encoder_gpt2_forward.12} parent=11 // pred_check
        %p248 = pneg %p148
      $region22: #{encoder_gpt2_forward.12} parent=11 // pred_check_branch
        %250 = sbr.rel (%p248) target = $region24
      $region23: #{encoder_gpt2_forward.12} parent=11 // pred_region
        _
      $region24: #{encoder_gpt2_forward.12} parent=11 // pred_fallthru
        _
      // Predicated region
      $region25: #{encoder_gpt2_forward.12} parent=11 // pred_check
        %p251 = pneg %p169
      $region26: #{encoder_gpt2_forward.12} parent=11 // pred_check_branch
        %253 = sbr.rel (%p251) target = $region28
      $region27: #{encoder_gpt2_forward.12} parent=11 // pred_region
        _
      $region28: #{encoder_gpt2_forward.12} parent=11 // pred_fallthru
        _
    $region12: #{encoder_gpt2_forward.12} parent=5 // pred_fallthru
      _
    %p254 = scmp.lt.s32.totalorder %s14, 2
    // Predicated region
    $region29: #{encoder_gpt2_forward.12} parent=5 // pred_check
      %p255 = pneg %p254
    $region30: #{encoder_gpt2_forward.12} parent=5 // pred_check_branch
      %257 = sbr.rel (%p255) target = $region32
    $region31: #{encoder_gpt2_forward.12} parent=5 // pred_region
      // Predicated region
      $region33: #{encoder_gpt2_forward.12} parent=31 // pred_check
        %p258 = pneg %p48
      $region34: #{encoder_gpt2_forward.12} parent=31 // pred_check_branch
        %260 = sbr.rel (%p258) target = $region36
      $region35: #{encoder_gpt2_forward.12} parent=31 // pred_region
        %p261 = scmp.lt.s32.totalorder %s21, 1
        %s262 = scalar_select %p261, %s21, 1
        %p263 = scmp.lt.s32.totalorder %s22, 0
        %s264 = scalar_select %p263, %s22, 0
        %s265 = sadd.s32 %s264, %s262
        %s266 = smul.addr %s265, 4
        %s267 = scalar_lea.vmem %s0, %s266
      $region36: #{encoder_gpt2_forward.12} parent=31 // pred_fallthru
        _
      // Predicated region
      $region37: #{encoder_gpt2_forward.12} parent=31 // pred_check
        %p268 = pneg %p121
      $region38: #{encoder_gpt2_forward.12} parent=31 // pred_check_branch
        %270 = sbr.rel (%p268) target = $region40
      $region39: #{encoder_gpt2_forward.12} parent=31 // pred_region
        %p271 = scmp.lt.s32.totalorder %s21, 1
        %s272 = scalar_select %p271, %s21, 1
        %s273 = smul.addr %s272, 8
        %s274 = scalar_lea.vmem %s3, %s273
      $region40: #{encoder_gpt2_forward.12} parent=31 // pred_fallthru
        _
    $region32: #{encoder_gpt2_forward.12} parent=5 // pred_fallthru
      _
    %p275 = scmp.le.s32.totalorder 1, %s14
    %p276 = scmp.lt.s32.totalorder %s14, 3
    %p277 = pnand %p275, %p276
    %p278 = pneg %p277
    // Predicated region
    $region41: #{encoder_gpt2_forward.12} parent=5 // pred_check
      _
    $region42: #{encoder_gpt2_forward.12} parent=5 // pred_check_branch
      %280 = sbr.rel (%p277) target = $region44
    $region43: #{encoder_gpt2_forward.12} parent=5 // pred_region
      %s281 = ssub.s32 %s14, 1
      %p282 = scmp.lt.s32.totalorder %s23, 1
      %s283 = scalar_select %p282, %s23, 1
      %p284 = scmp.lt.s32.totalorder %s24, 0
      %s285 = scalar_select %p284, %s24, 0
      %s286 = sadd.s32 %s285, %s283
      %s287 = smul.addr %s286, 4
      %s288 = scalar_lea.vmem %s0, %s287
      %p289 = pneg %p54
      %p290 = pneg %p51
      %s291 = smul.u32 4, %s24
      %p292 = scmp.lt.s32.totalorder %s291, 3
      %s293 = scalar_select %p292, %s291, 3
      %s294 = smul.addr %s293, 4
      %s295 = scalar_lea.vmem %s1, %s294
      %p296 = pneg %p80
      %p297 = pneg %p77
      %p298 = pneg %p101
      %p299 = pneg %p98
      %p300 = scmp.lt.s32.totalorder %s23, 1
      %s301 = scalar_select %p300, %s23, 1
      %s302 = smul.addr %s301, 8
      %s303 = scalar_lea.vmem %s3, %s302
      %p304 = pneg %p127
      %p305 = pneg %p124
      %p306 = pneg %p148
      %p307 = pneg %p145
      %p308 = pneg %p169
      %p309 = pneg %p166
      %p310 = pneg %p195
      %p311 = pneg %p192
      %p312 = scmp.lt.s32.totalorder %s23, 1
      %s313 = scalar_select %p312, %s23, 1
      %s314 = smul.addr %s313, 8
      %s315 = scalar_lea.vmem %s6, %s314
      %p316 = pneg %p221
      %p317 = pneg %p218
      %p318 = scmp.lt.s32.totalorder %s23, 1
      %s319 = scalar_select %p318, %s23, 1
      %s320 = smul.addr %s319, 4
      %s321 = scalar_lea.vmem %s7, %s320
      %p322 = scmp.lt.s32.totalorder %s23, 1
      %s323 = scalar_select %p322, %s23, 1
      %p324 = scmp.lt.s32.totalorder %s24, 0
      %s325 = scalar_select %p324, %s24, 0
      %s326 = sadd.s32 %s325, %s323
      %s327 = smul.addr %s326, 4
      %s328 = scalar_lea.vmem %s0, %s327
      %s329 = smul.u32 4, %s24
      %p330 = scmp.lt.s32.totalorder %s329, 3
      %s331 = scalar_select %p330, %s329, 3
      %s332 = smul.addr %s331, 4
      %s333 = scalar_lea.vmem %s1, %s332
      %s334 = smul.u32 4, %s24
      %p335 = scmp.lt.s32.totalorder %s23, 1
      %s336 = scalar_select %p335, %s23, 1
      %s337 = smul.addr %s336, 8
      %s338 = scalar_lea.vmem %s3, %s337
      %p339 = scmp.lt.s32.totalorder %s23, 1
      %s340 = scalar_select %p339, %s23, 1
      %s341 = smul.addr %s340, 8
      %s342 = scalar_lea.vmem %s6, %s341
      %p343 = scmp.lt.s32.totalorder %s23, 1
      %s344 = scalar_select %p343, %s23, 1
      %s345 = smul.addr %s344, 4
      %s346 = scalar_lea.vmem %s7, %s345
      %p348 = scmp.eq.s32.totalorder %s24, 0
      // Predicated region
      $region45: #{encoder_gpt2_forward.12} parent=43 // pred_check
        %p349 = pneg %p348
      $region46: #{encoder_gpt2_forward.12} parent=43 // pred_check_branch
        %351 = sbr.rel (%p349) target = $region48
      $region47: #{encoder_gpt2_forward.12} parent=43 // pred_region
        %vm352 = vcmask 261120
        %353 = vst.msk [vmem:[#allocation2] sm:$0xff] %vm352, 0.0
      $region48: #{encoder_gpt2_forward.12} parent=43 // pred_fallthru
        _
      %v354 = vld [vmem:[#allocation2] sm:$0xff]
      %v355 = vld [vmem:[%s328] sm:$0xf]
      %v356 = vld [vmem:[%s333] sm:$0xf]
      %v357 = vld [vmem:[%s333 + $0x4] sm:$0xf]
      %v358 = vld [vmem:[%s333 + $0x8] sm:$0xf]
      %v359 = vld [vmem:[%s333 + $0xc] sm:$0xf]
      %v364 = vunpack.c.l.b16 %v356
      %v365 = vunpack.c.l.b16 %v357
      %v366 = vunpack.c.l.b16 %v358
      %v367 = vunpack.c.l.b16 %v359
      %v368 = vpack.c.b16 %v365, %v364
      %v369 = vpack.c.b16 %v367, %v366
      %vm372 = vcmask 261120
      %v374 = vsel %vm372, %v355, 0
      %376 = vmatprep.subr.bf16.mxu0 0
      %377 = vmatpush1.bf16.msra.mxu0 %v368
      %378 = vmatprep.subr.bf16.mxu0 0
      %379 = vmatpush1.bf16.msra.mxu0 %v369
      %380 = vmatprep.subr.bf16.mxu0 0
      %381 = vmatpush1.bf16.msra.mxu0 0
      %382 = vmatprep.subr.bf16.mxu0 0
      %383 = vmatpush1.bf16.msra.mxu0 0
      %384 = vmatprep.subr.bf16.mxu0 0
      %385 = vmatpush1.bf16.msra.mxu0 0
      %386 = vmatprep.subr.bf16.mxu0 0
      %387 = vmatpush1.bf16.msra.mxu0 0
      %388 = vmatprep.subr.bf16.mxu0 0
      %389 = vmatpush1.bf16.msra.mxu0 0
      %390 = vmatprep.subr.bf16.mxu0 0
      %391 = vmatpush1.bf16.msra.mxu0 0
      %392 = vmatprep.subr.bf16.mxu0 0
      %393 = vmatpush1.bf16.msra.mxu0 0
      %394 = vmatprep.subr.bf16.mxu0 0
      %395 = vmatpush1.bf16.msra.mxu0 0
      %396 = vmatprep.subr.bf16.mxu0 0
      %397 = vmatpush1.bf16.msra.mxu0 0
      %398 = vmatprep.subr.bf16.mxu0 0
      %399 = vmatpush1.bf16.msra.mxu0 0
      %400 = vmatprep.subr.bf16.mxu0 0
      %401 = vmatpush1.bf16.msra.mxu0 0
      %402 = vmatprep.subr.bf16.mxu0 0
      %403 = vmatpush1.bf16.msra.mxu0 0
      %404 = vmatprep.subr.bf16.mxu0 0
      %405 = vmatpush1.bf16.msra.mxu0 0
      %406 = vmatprep.subr.bf16.mxu0 0
      %407 = vmatpush1.bf16.msra.mxu0 0
      %408 = vmatprep.mubr.bf16.mxu0 0
      %409 = vmatmul.mubr.bf16.gmra.mrb[0].mxu0 %v374
      %v410 = vpop.f32.mrb[0].mxu0
      %v411 = vadd.f32 0.0, %v410
      %v412 = vpop.f32.mrb[0].mxu0
      %v413 = vpop.f32.mrb[0].mxu0
      %v414 = vpop.f32.mrb[0].mxu0
      %415 = vdwg.mxu0
      %v416 = vadd.f32 %v354, %v411
      %417 = vst.msk [vmem:[#allocation2] sm:$0xff] %vm372, %v416
      // Predicated region
      $region49: #{encoder_gpt2_forward.12} parent=43 // pred_check
        %p418 = pneg %p348
      $region50: #{encoder_gpt2_forward.12} parent=43 // pred_check_branch
        %420 = sbr.rel (%p418) target = $region52
      $region51: #{encoder_gpt2_forward.12} parent=43 // pred_region
        %v421 = vld [vmem:[#allocation2] sm:$0xff]
        %v422 = vld [vmem:[%s2] sm:$0x1]
        %v424 = vlaneseq
        %v425 = vshrl.u32 %v424, 7
        %v426 = vsub.s32 0, %v425
        %v427 = vrot.slane %v422, %v426
        %v429 = vadd.f32 %v421, %v427
        %v430 = vld [vmem:[%s338] sm:$0xff]
        %v431 = vadd.f32 %v429, %v430
        %432 = vst.msk [vmem:[%s342] sm:$0xff] %vm372, %v431
        %v433 = vsel %vm372, %v431, 0.0
        %434 = vadd.xlane.f32.xlu0 %v433
        %v435 = vpop.xlane.xlu0 %434
        %v436 = vrcp.pop 32.0
        %v437 = vmul.f32 %v435, %v436
        %v438 = vsub.f32 %v431, %v437
        %v439 = vmul.f32 %v438, %v438
        %v440 = vsel %vm372, %v439, 0.0
        %441 = vadd.xlane.f32.xlu0 %v440
        %v442 = vpop.xlane.xlu0 %441
        %v443 = vmul.f32 %v442, %v436
        %v444 = vadd.f32 %v443, 1e-05
        %v445 = vrsqrt.pop %v444
        %v446 = vmul.f32 %v438, %v445
        %v447 = vld [vmem:[%s4] sm:$0x1]
        %v449 = vlaneseq
        %v450 = vshrl.u32 %v449, 7
        %v451 = vsub.s32 0, %v450
        %v452 = vrot.slane %v447, %v451
        %v454 = vmul.f32 %v446, %v452
        %v455 = vld [vmem:[%s5] sm:$0x1]
        %v457 = vlaneseq
        %v458 = vshrl.u32 %v457, 7
        %v459 = vsub.s32 0, %v458
        %v460 = vrot.slane %v455, %v459
        %v462 = vadd.f32 %v454, %v460
        %v463 = vpack.c.bf16 %v462, %v462
        %vm464 = vcmask 257024
        %465 = vst.msk [vmem:[%s346] sm:$0xf] %vm464, %v463
      $region52: #{encoder_gpt2_forward.12} parent=43 // pred_fallthru
        _
      %p466 = scmp.lt.s32.totalorder %s23, 1
      %s467 = scalar_select %p466, %s23, 1
      %s468 = smul.addr %s467, 8
      %s469 = scalar_lea.vmem %s6, %s468
      %p470 = scmp.lt.s32.totalorder %s23, 1
      %s471 = scalar_select %p470, %s23, 1
      %s472 = smul.addr %s471, 4
      %s473 = scalar_lea.vmem %s7, %s472
      // Predicated region
      $region53: #{encoder_gpt2_forward.12} parent=43 // pred_check
        %p474 = pneg %p192
      $region54: #{encoder_gpt2_forward.12} parent=43 // pred_check_branch
        %476 = sbr.rel (%p474) target = $region56
      $region55: #{encoder_gpt2_forward.12} parent=43 // pred_region
        _
      $region56: #{encoder_gpt2_forward.12} parent=43 // pred_fallthru
        _
      // Predicated region
      $region57: #{encoder_gpt2_forward.12} parent=43 // pred_check
        %p477 = pneg %p218
      $region58: #{encoder_gpt2_forward.12} parent=43 // pred_check_branch
        %479 = sbr.rel (%p477) target = $region60
      $region59: #{encoder_gpt2_forward.12} parent=43 // pred_region
        _
      $region60: #{encoder_gpt2_forward.12} parent=43 // pred_fallthru
        _
    $region44: #{encoder_gpt2_forward.12} parent=5 // pred_fallthru
      _
    %p480 = scmp.le.s32.totalorder 2, %s14
    // Predicated region
    $region61: #{encoder_gpt2_forward.12} parent=5 // pred_check
      %p481 = pneg %p480
    $region62: #{encoder_gpt2_forward.12} parent=5 // pred_check_branch
      %483 = sbr.rel (%p481) target = $region64
    $region63: #{encoder_gpt2_forward.12} parent=5 // pred_region
      %s484 = ssub.s32 %s14, 2
      // Predicated region
      $region65: #{encoder_gpt2_forward.12} parent=63 // pred_check
        %p485 = pneg %p198
      $region66: #{encoder_gpt2_forward.12} parent=63 // pred_check_branch
        %487 = sbr.rel (%p485) target = $region68
      $region67: #{encoder_gpt2_forward.12} parent=63 // pred_region
        %p488 = scmp.lt.s32.totalorder %s25, 1
        %s489 = scalar_select %p488, %s25, 1
        %s490 = smul.addr %s489, 8
        %s491 = scalar_lea.vmem %s6, %s490
      $region68: #{encoder_gpt2_forward.12} parent=63 // pred_fallthru
        _
      // Predicated region
      $region69: #{encoder_gpt2_forward.12} parent=63 // pred_check
        %p492 = pneg %p224
      $region70: #{encoder_gpt2_forward.12} parent=63 // pred_check_branch
        %494 = sbr.rel (%p492) target = $region72
      $region71: #{encoder_gpt2_forward.12} parent=63 // pred_region
        %p495 = scmp.lt.s32.totalorder %s25, 1
        %s496 = scalar_select %p495, %s25, 1
        %s497 = smul.addr %s496, 4
        %s498 = scalar_lea.vmem %s7, %s497
      $region72: #{encoder_gpt2_forward.12} parent=63 // pred_fallthru
        _
    $region64: #{encoder_gpt2_forward.12} parent=5 // pred_fallthru
      _
  $region6: #{encoder_gpt2_forward.12} parent=0 // loop_footer
    %s18 = sadd.s32 1, %s14
  $region7: #{encoder_gpt2_forward.12} parent=0 // loop_footer_branch
    %13 = sbr.rel target = $region3
  $region8: #{encoder_gpt2_forward.12} parent=0 // loop_exit
    _

// kernel: encoder_gpt2_forward.11
$region0: #{encoder_gpt2_forward.11}
  #allocation0 [shape = 'u32[]', space=smem, size = 0x4, offset = 0x4, fixed_abs, tag = 'smem constant byte address 0x4 - core index']
  #allocation1 [shape = 'u32[144,128]{1,0:T(1,128)}', space=vmem, size = 0x12000, scoped, tag = 'internal scratch']
  #allocation2 [shape = 'f32[4,8,1]{2,1,0:T(8,128)}', space=vmem, size = 0x4000, scoped, tag = 'scratch operand']
  #allocation3 [shape = 'f32[4,8,1]{2,1,0:T(8,128)}', space=vmem, size = 0x4000, scoped, tag = 'scratch operand']
  #allocation4 [shape = 'f32[8,32]{1,0:T(8,128)}', space=vmem, size = 0x1000, scoped, tag = 'scratch operand']
  %s0 = inlined_call_operand.vmem [shape: bf16[3,2,8,32], index: 0, kind: input, shape index: {}, may-alias: {0,1,2}]
  %s1 = inlined_call_operand.vmem [shape: bf16[3,2,8,32], index: 1, kind: input, shape index: {}, may-alias: {0,1,2}]
  %s2 = inlined_call_operand.vmem [shape: bf16[3,2,8,32], index: 2, kind: input, shape index: {}, may-alias: {0,1,2}]
  %s3 = inlined_call_operand.vmem [shape: f32[1,1,8,8], index: 3, kind: input, shape index: {}]
  %s4 = inlined_call_operand.vmem [shape: bf16[2,8,32], index: 4, kind: output, shape index: {}]
  %s5 = sld [smem:[#allocation0]]
  $region57: #{encoder_gpt2_forward.11} parent=0
    _
  %s7 = ssub.s32 1, %s5
  %s8 = scalar_select 0, %s7, %s5
  loop: start=0, step=1, limit=4
  $region2: #{encoder_gpt2_forward.11} parent=0 // loop_pre_header
    _
  $region3: #{encoder_gpt2_forward.11} parent=0 // loop_header
    %s10 = sphi 0, %s14
    %p11 = scmp.ge.s32.totalorder %s10, 4
    %s17 = sphi 0, %s43
    %s18 = sphi 0, %s39
    %s19 = sphi 0, %s35
    %s20 = sphi 0, %s31
    %s21 = sphi 0, %s17
    %s22 = sphi 0, %s18
    %s23 = sphi 0, %s19
    %s24 = sphi 0, %s20
    %s25 = sphi 0, %s21
    %s26 = sphi 0, %s22
    %s27 = sphi 0, %s23
    %s28 = sphi 0, %s24
    %s50 = sphi 0, %s52
    %s53 = sphi 0, %s50
    %s54 = sphi 0, %s53
    %s70 = sphi 0, %s54
    %s80 = sphi 0, %s82
    %s83 = sphi 0, %s80
    %s84 = sphi 0, %s83
    %s100 = sphi 0, %s84
    %s110 = sphi 0, %s112
    %s113 = sphi 0, %s110
    %s114 = sphi 0, %s113
    %s130 = sphi 0, %s114
    %s138 = sphi 0, %s140
    %s141 = sphi 0, %s138
    %s142 = sphi 0, %s141
    %s158 = sphi 0, %s142
    %s168 = sphi 0, %s170
    %s171 = sphi 0, %s168
    %s172 = sphi 0, %s171
    %s188 = sphi 0, %s172
  $region4: #{encoder_gpt2_forward.11} parent=0 // loop_header_branch
    %13 = sbr.rel (%p11) target = $region8
  $region5: #{encoder_gpt2_forward.11} parent=0 // loop_body
    %s15 = ssub.s32 %s10, 1
    %s16 = ssub.s32 %s10, 2
    %s29 = sadd.s32 1, %s20
    %p30 = scmp.ge.s32.totalorder %s29, 1
    %s31 = scalar_select %p30, 0, %s29
    %s32 = sadd.s32 1, %s19
    %s33 = scalar_select %p30, %s32, %s19
    %p34 = scmp.ge.s32.totalorder %s33, 1
    %s35 = scalar_select %p34, 0, %s33
    %s36 = sadd.s32 1, %s18
    %s37 = scalar_select %p34, %s36, %s18
    %p38 = scmp.ge.s32.totalorder %s37, 1
    %s39 = scalar_select %p38, 0, %s37
    %s40 = sadd.s32 1, %s17
    %s41 = scalar_select %p38, %s40, %s17
    %p42 = scmp.ge.s32.totalorder %s41, 2
    %s43 = scalar_select %p42, 0, %s41
    %s44 = ssub.s32 %s17, %s43
    %s45 = ssub.s32 %s19, %s35
    %s46 = sor.u32 %s44, %s45
    %s47 = ssub.s32 %s18, %s39
    %s48 = sor.u32 %s46, %s47
    %p49 = scmp.eq.s32.totalorder %s48, 0
    %s51 = sadd.s32 %s50, 1
    %s52 = scalar_select %p49, %s50, %s51
    %p55 = pneg %p49
    %p56 = scmp.eq.s32.totalorder %s10, 1
    %p57 = por %p55, %p56
    %p58 = scmp.ne.s32.totalorder %s50, %s53
    %p59 = scmp.eq.s32.totalorder %s10, 0
    %p60 = por %p58, %p59
    %p61 = scmp.ne.s32.totalorder %s50, %s53
    %p62 = scmp.eq.s32.totalorder %s15, 1
    %p63 = por %p61, %p62
    %p64 = scmp.ne.s32.totalorder %s53, %s54
    %p65 = scmp.eq.s32.totalorder %s15, 0
    %p66 = por %p64, %p65
    %p67 = scmp.ne.s32.totalorder %s53, %s54
    %p68 = scmp.eq.s32.totalorder %s16, 1
    %p69 = por %p67, %p68
    %p71 = scmp.ne.s32.totalorder %s54, %s70
    %p72 = scmp.eq.s32.totalorder %s16, 0
    %p73 = por %p71, %p72
    %s74 = ssub.s32 %s17, %s43
    %s75 = ssub.s32 %s20, %s31
    %s76 = sor.u32 %s74, %s75
    %s77 = ssub.s32 %s18, %s39
    %s78 = sor.u32 %s76, %s77
    %p79 = scmp.eq.s32.totalorder %s78, 0
    %s81 = sadd.s32 %s80, 1
    %s82 = scalar_select %p79, %s80, %s81
    %p85 = pneg %p79
    %p86 = scmp.eq.s32.totalorder %s10, 1
    %p87 = por %p85, %p86
    %p88 = scmp.ne.s32.totalorder %s80, %s83
    %p89 = scmp.eq.s32.totalorder %s10, 0
    %p90 = por %p88, %p89
    %p91 = scmp.ne.s32.totalorder %s80, %s83
    %p92 = scmp.eq.s32.totalorder %s15, 1
    %p93 = por %p91, %p92
    %p94 = scmp.ne.s32.totalorder %s83, %s84
    %p95 = scmp.eq.s32.totalorder %s15, 0
    %p96 = por %p94, %p95
    %p97 = scmp.ne.s32.totalorder %s83, %s84
    %p98 = scmp.eq.s32.totalorder %s16, 1
    %p99 = por %p97, %p98
    %p101 = scmp.ne.s32.totalorder %s84, %s100
    %p102 = scmp.eq.s32.totalorder %s16, 0
    %p103 = por %p101, %p102
    %s104 = ssub.s32 %s17, %s43
    %s105 = ssub.s32 %s20, %s31
    %s106 = sor.u32 %s104, %s105
    %s107 = ssub.s32 %s18, %s39
    %s108 = sor.u32 %s106, %s107
    %p109 = scmp.eq.s32.totalorder %s108, 0
    %s111 = sadd.s32 %s110, 1
    %s112 = scalar_select %p109, %s110, %s111
    %p115 = pneg %p109
    %p116 = scmp.eq.s32.totalorder %s10, 1
    %p117 = por %p115, %p116
    %p118 = scmp.ne.s32.totalorder %s110, %s113
    %p119 = scmp.eq.s32.totalorder %s10, 0
    %p120 = por %p118, %p119
    %p121 = scmp.ne.s32.totalorder %s110, %s113
    %p122 = scmp.eq.s32.totalorder %s15, 1
    %p123 = por %p121, %p122
    %p124 = scmp.ne.s32.totalorder %s113, %s114
    %p125 = scmp.eq.s32.totalorder %s15, 0
    %p126 = por %p124, %p125
    %p127 = scmp.ne.s32.totalorder %s113, %s114
    %p128 = scmp.eq.s32.totalorder %s16, 1
    %p129 = por %p127, %p128
    %p131 = scmp.ne.s32.totalorder %s114, %s130
    %p132 = scmp.eq.s32.totalorder %s16, 0
    %p133 = por %p131, %p132
    %s134 = ssub.s32 %s19, %s35
    %s135 = ssub.s32 %s20, %s31
    %s136 = sor.u32 %s134, %s135
    %p137 = scmp.eq.s32.totalorder %s136, 0
    %s139 = sadd.s32 %s138, 1
    %s140 = scalar_select %p137, %s138, %s139
    %p143 = pneg %p137
    %p144 = scmp.eq.s32.totalorder %s10, 1
    %p145 = por %p143, %p144
    %p146 = scmp.ne.s32.totalorder %s138, %s141
    %p147 = scmp.eq.s32.totalorder %s10, 0
    %p148 = por %p146, %p147
    %p149 = scmp.ne.s32.totalorder %s138, %s141
    %p150 = scmp.eq.s32.totalorder %s15, 1
    %p151 = por %p149, %p150
    %p152 = scmp.ne.s32.totalorder %s141, %s142
    %p153 = scmp.eq.s32.totalorder %s15, 0
    %p154 = por %p152, %p153
    %p155 = scmp.ne.s32.totalorder %s141, %s142
    %p156 = scmp.eq.s32.totalorder %s16, 1
    %p157 = por %p155, %p156
    %p159 = scmp.ne.s32.totalorder %s142, %s158
    %p160 = scmp.eq.s32.totalorder %s16, 0
    %p161 = por %p159, %p160
    %s162 = ssub.s32 %s17, %s43
    %s163 = ssub.s32 %s19, %s35
    %s164 = sor.u32 %s162, %s163
    %s165 = ssub.s32 %s18, %s39
    %s166 = sor.u32 %s164, %s165
    %p167 = scmp.eq.s32.totalorder %s166, 0
    %s169 = sadd.s32 %s168, 1
    %s170 = scalar_select %p167, %s168, %s169
    %p173 = pneg %p167
    %p174 = scmp.eq.s32.totalorder %s10, 1
    %p175 = por %p173, %p174
    %p176 = scmp.ne.s32.totalorder %s168, %s171
    %p177 = scmp.eq.s32.totalorder %s10, 0
    %p178 = por %p176, %p177
    %p179 = scmp.ne.s32.totalorder %s168, %s171
    %p180 = scmp.eq.s32.totalorder %s15, 1
    %p181 = por %p179, %p180
    %p182 = scmp.ne.s32.totalorder %s171, %s172
    %p183 = scmp.eq.s32.totalorder %s15, 0
    %p184 = por %p182, %p183
    %p185 = scmp.ne.s32.totalorder %s171, %s172
    %p186 = scmp.eq.s32.totalorder %s16, 1
    %p187 = por %p185, %p186
    %p189 = scmp.ne.s32.totalorder %s172, %s188
    %p190 = scmp.eq.s32.totalorder %s16, 0
    %p191 = por %p189, %p190
    %p192 = scmp.le.s32.totalorder 1, %s10
    %p193 = scmp.lt.s32.totalorder %s10, 3
    %p194 = pnand %p192, %p193
    %p195 = pneg %p194
    // Predicated region
    $region9: #{encoder_gpt2_forward.11} parent=5 // pred_check
      _
    $region10: #{encoder_gpt2_forward.11} parent=5 // pred_check_branch
      %197 = sbr.rel (%p194) target = $region12
    $region11: #{encoder_gpt2_forward.11} parent=5 // pred_region
      %s198 = ssub.s32 %s10, 1
      // Predicated region
      $region13: #{encoder_gpt2_forward.11} parent=11 // pred_check
        %p199 = pneg %p154
      $region14: #{encoder_gpt2_forward.11} parent=11 // pred_check_branch
        %201 = sbr.rel (%p199) target = $region16
      $region15: #{encoder_gpt2_forward.11} parent=11 // pred_region
        %p202 = scmp.lt.s32.totalorder %s23, 0
        %s203 = scalar_select %p202, %s23, 0
        %p204 = scmp.lt.s32.totalorder %s24, 0
        %s205 = scalar_select %p204, %s24, 0
        %s206 = sadd.s32 %s205, %s203
        %s207 = smul.addr %s206, 8
        %s208 = scalar_lea.vmem %s3, %s207
      $region16: #{encoder_gpt2_forward.11} parent=11 // pred_fallthru
        _
    $region12: #{encoder_gpt2_forward.11} parent=5 // pred_fallthru
      _
    %p209 = scmp.lt.s32.totalorder %s10, 2
    // Predicated region
    $region17: #{encoder_gpt2_forward.11} parent=5 // pred_check
      %p210 = pneg %p209
    $region18: #{encoder_gpt2_forward.11} parent=5 // pred_check_branch
      %212 = sbr.rel (%p210) target = $region20
    $region19: #{encoder_gpt2_forward.11} parent=5 // pred_region
      // Predicated region
      $region21: #{encoder_gpt2_forward.11} parent=19 // pred_check
        %p213 = pneg %p60
      $region22: #{encoder_gpt2_forward.11} parent=19 // pred_check_branch
        %215 = sbr.rel (%p213) target = $region24
      $region23: #{encoder_gpt2_forward.11} parent=19 // pred_region
        %p216 = scmp.lt.s32.totalorder %s17, 1
        %s217 = scalar_select %p216, %s17, 1
        %p218 = scmp.lt.s32.totalorder %s19, 0
        %s219 = scalar_select %p218, %s19, 0
        %p220 = scmp.lt.s32.totalorder %s18, 0
        %s221 = scalar_select %p220, %s18, 0
        %s222 = sadd.s32 %s221, %s219
        %s223 = sadd.s32 %s222, %s217
        %s224 = smul.addr %s223, 4
        %s225 = scalar_lea.vmem %s0, %s224
      $region24: #{encoder_gpt2_forward.11} parent=19 // pred_fallthru
        _
      // Predicated region
      $region25: #{encoder_gpt2_forward.11} parent=19 // pred_check
        %p226 = pneg %p90
      $region26: #{encoder_gpt2_forward.11} parent=19 // pred_check_branch
        %228 = sbr.rel (%p226) target = $region28
      $region27: #{encoder_gpt2_forward.11} parent=19 // pred_region
        %p229 = scmp.lt.s32.totalorder %s17, 1
        %s230 = scalar_select %p229, %s17, 1
        %p231 = scmp.lt.s32.totalorder %s20, 0
        %s232 = scalar_select %p231, %s20, 0
        %p233 = scmp.lt.s32.totalorder %s18, 0
        %s234 = scalar_select %p233, %s18, 0
        %s235 = sadd.s32 %s234, %s232
        %s236 = sadd.s32 %s235, %s230
        %s237 = sadd.s32 %s236, 2
        %s238 = smul.addr %s237, 4
        %s239 = scalar_lea.vmem %s1, %s238
      $region28: #{encoder_gpt2_forward.11} parent=19 // pred_fallthru
        _
      // Predicated region
      $region29: #{encoder_gpt2_forward.11} parent=19 // pred_check
        %p240 = pneg %p120
      $region30: #{encoder_gpt2_forward.11} parent=19 // pred_check_branch
        %242 = sbr.rel (%p240) target = $region32
      $region31: #{encoder_gpt2_forward.11} parent=19 // pred_region
        %p243 = scmp.lt.s32.totalorder %s17, 1
        %s244 = scalar_select %p243, %s17, 1
        %p245 = scmp.lt.s32.totalorder %s20, 0
        %s246 = scalar_select %p245, %s20, 0
        %p247 = scmp.lt.s32.totalorder %s18, 0
        %s248 = scalar_select %p247, %s18, 0
        %s249 = sadd.s32 %s248, %s246
        %s250 = sadd.s32 %s249, %s244
        %s251 = sadd.s32 %s250, 4
        %s252 = smul.addr %s251, 4
        %s253 = scalar_lea.vmem %s2, %s252
      $region32: #{encoder_gpt2_forward.11} parent=19 // pred_fallthru
        _
    $region20: #{encoder_gpt2_forward.11} parent=5 // pred_fallthru
      _
    %p254 = scmp.le.s32.totalorder 1, %s10
    %p255 = scmp.lt.s32.totalorder %s10, 3
    %p256 = pnand %p254, %p255
    %p257 = pneg %p256
    // Predicated region
    $region33: #{encoder_gpt2_forward.11} parent=5 // pred_check
      _
    $region34: #{encoder_gpt2_forward.11} parent=5 // pred_check_branch
      %259 = sbr.rel (%p256) target = $region36
    $region35: #{encoder_gpt2_forward.11} parent=5 // pred_region
      %s260 = ssub.s32 %s10, 1
      %p261 = scmp.lt.s32.totalorder %s21, 1
      %s262 = scalar_select %p261, %s21, 1
      %p263 = scmp.lt.s32.totalorder %s23, 0
      %s264 = scalar_select %p263, %s23, 0
      %p265 = scmp.lt.s32.totalorder %s22, 0
      %s266 = scalar_select %p265, %s22, 0
      %s267 = sadd.s32 %s266, %s264
      %s268 = sadd.s32 %s267, %s262
      %s269 = smul.addr %s268, 4
      %s270 = scalar_lea.vmem %s0, %s269
      %p271 = pneg %p66
      %p272 = pneg %p63
      %p273 = scmp.lt.s32.totalorder %s21, 1
      %s274 = scalar_select %p273, %s21, 1
      %p275 = scmp.lt.s32.totalorder %s24, 0
      %s276 = scalar_select %p275, %s24, 0
      %p277 = scmp.lt.s32.totalorder %s22, 0
      %s278 = scalar_select %p277, %s22, 0
      %s279 = sadd.s32 %s278, %s276
      %s280 = sadd.s32 %s279, %s274
      %s281 = sadd.s32 %s280, 2
      %s282 = smul.addr %s281, 4
      %s283 = scalar_lea.vmem %s1, %s282
      %p284 = pneg %p96
      %p285 = pneg %p93
      %p286 = scmp.lt.s32.totalorder %s21, 1
      %s287 = scalar_select %p286, %s21, 1
      %p288 = scmp.lt.s32.totalorder %s24, 0
      %s289 = scalar_select %p288, %s24, 0
      %p290 = scmp.lt.s32.totalorder %s22, 0
      %s291 = scalar_select %p290, %s22, 0
      %s292 = sadd.s32 %s291, %s289
      %s293 = sadd.s32 %s292, %s287
      %s294 = sadd.s32 %s293, 4
      %s295 = smul.addr %s294, 4
      %s296 = scalar_lea.vmem %s2, %s295
      %p297 = pneg %p126
      %p298 = pneg %p123
      %p299 = scmp.lt.s32.totalorder %s23, 0
      %s300 = scalar_select %p299, %s23, 0
      %p301 = scmp.lt.s32.totalorder %s24, 0
      %s302 = scalar_select %p301, %s24, 0
      %s303 = sadd.s32 %s302, %s300
      %s304 = smul.addr %s303, 8
      %s305 = scalar_lea.vmem %s3, %s304
      %p306 = pneg %p154
      %p307 = pneg %p151
      %p308 = pneg %p184
      %p309 = pneg %p181
      %p310 = scmp.lt.s32.totalorder %s21, 1
      %s311 = scalar_select %p310, %s21, 1
      %p312 = scmp.lt.s32.totalorder %s23, 0
      %s313 = scalar_select %p312, %s23, 0
      %p314 = scmp.lt.s32.totalorder %s22, 0
      %s315 = scalar_select %p314, %s22, 0
      %s316 = sadd.s32 %s315, %s313
      %s317 = sadd.s32 %s316, %s311
      %s318 = smul.addr %s317, 4
      %s319 = scalar_lea.vmem %s4, %s318
      %p320 = scmp.lt.s32.totalorder %s21, 1
      %s321 = scalar_select %p320, %s21, 1
      %p322 = scmp.lt.s32.totalorder %s23, 0
      %s323 = scalar_select %p322, %s23, 0
      %p324 = scmp.lt.s32.totalorder %s22, 0
      %s325 = scalar_select %p324, %s22, 0
      %s326 = sadd.s32 %s325, %s323
      %s327 = sadd.s32 %s326, %s321
      %s328 = smul.addr %s327, 4
      %s329 = scalar_lea.vmem %s0, %s328
      %p330 = scmp.lt.s32.totalorder %s21, 1
      %s331 = scalar_select %p330, %s21, 1
      %p332 = scmp.lt.s32.totalorder %s24, 0
      %s333 = scalar_select %p332, %s24, 0
      %p334 = scmp.lt.s32.totalorder %s22, 0
      %s335 = scalar_select %p334, %s22, 0
      %s336 = sadd.s32 %s335, %s333
      %s337 = sadd.s32 %s336, %s331
      %s338 = sadd.s32 %s337, 2
      %s339 = smul.addr %s338, 4
      %s340 = scalar_lea.vmem %s1, %s339
      %p341 = scmp.lt.s32.totalorder %s21, 1
      %s342 = scalar_select %p341, %s21, 1
      %p343 = scmp.lt.s32.totalorder %s24, 0
      %s344 = scalar_select %p343, %s24, 0
      %p345 = scmp.lt.s32.totalorder %s22, 0
      %s346 = scalar_select %p345, %s22, 0
      %s347 = sadd.s32 %s346, %s344
      %s348 = sadd.s32 %s347, %s342
      %s349 = sadd.s32 %s348, 4
      %s350 = smul.addr %s349, 4
      %s351 = scalar_lea.vmem %s2, %s350
      %p352 = scmp.lt.s32.totalorder %s23, 0
      %s353 = scalar_select %p352, %s23, 0
      %p354 = scmp.lt.s32.totalorder %s24, 0
      %s355 = scalar_select %p354, %s24, 0
      %s356 = sadd.s32 %s355, %s353
      %s357 = smul.addr %s356, 8
      %s358 = scalar_lea.vmem %s3, %s357
      %p359 = scmp.lt.s32.totalorder %s21, 1
      %s360 = scalar_select %p359, %s21, 1
      %p361 = scmp.lt.s32.totalorder %s23, 0
      %s362 = scalar_select %p361, %s23, 0
      %p363 = scmp.lt.s32.totalorder %s22, 0
      %s364 = scalar_select %p363, %s22, 0
      %s365 = sadd.s32 %s364, %s362
      %s366 = sadd.s32 %s365, %s360
      %s367 = smul.addr %s366, 4
      %s368 = scalar_lea.vmem %s4, %s367
      %p370 = scmp.eq.s32.totalorder %s24, 0
      // Predicated region
      $region37: #{encoder_gpt2_forward.11} parent=35 // pred_check
        %p371 = pneg %p370
      $region38: #{encoder_gpt2_forward.11} parent=35 // pred_check_branch
        %373 = sbr.rel (%p371) target = $region40
      $region39: #{encoder_gpt2_forward.11} parent=35 // pred_region
        %vm374 = vcmask 7168
        %375 = vst.msk [vmem:[#allocation2] sm:$0xff] %vm374, -inf
        %376 = vst.msk [vmem:[#allocation2 + $0x8] sm:$0xff] %vm374, -inf
        %377 = vst.msk [vmem:[#allocation2 + $0x10] sm:$0xff] %vm374, -inf
        %378 = vst.msk [vmem:[#allocation2 + $0x18] sm:$0xff] %vm374, -inf
        %379 = vst.msk [vmem:[#allocation3] sm:$0xff] %vm374, 0.0
        %380 = vst.msk [vmem:[#allocation3 + $0x8] sm:$0xff] %vm374, 0.0
        %381 = vst.msk [vmem:[#allocation3 + $0x10] sm:$0xff] %vm374, 0.0
        %382 = vst.msk [vmem:[#allocation3 + $0x18] sm:$0xff] %vm374, 0.0
        %vm383 = vcmask 261120
        %384 = vst.msk [vmem:[#allocation4] sm:$0xff] %vm383, 0.0
      $region40: #{encoder_gpt2_forward.11} parent=35 // pred_fallthru
        _
      %v385 = vld [vmem:[%s329] sm:$0xf]
      %v386 = vld [vmem:[%s340] sm:$0xf]
      %v387 = vld [vmem:[%s351] sm:$0xf]
      %v388 = vld [vmem:[%s358] sm:$0xff]
      %vm389 = vcmask 64512
      %v391 = vsel %vm389, %v385, 0
      %v394 = vsel %vm389, %v386, 0
      %396 = vmatprep.subr.bf16.mxu0 0
      %397 = vmatpush1.bf16.xpose.msra.mxu0 %v394
      %398 = vmatprep.subr.bf16.mxu0 0
      %399 = vmatpush1.bf16.xpose.msra.mxu0 0
      %400 = vmatprep.subr.bf16.mxu0 0
      %401 = vmatpush1.bf16.xpose.msra.mxu0 0
      %402 = vmatprep.subr.bf16.mxu0 0
      %403 = vmatpush1.bf16.xpose.msra.mxu0 0
      %404 = vmatprep.subr.bf16.mxu0 0
      %405 = vmatpush1.bf16.xpose.msra.mxu0 0
      %406 = vmatprep.subr.bf16.mxu0 0
      %407 = vmatpush1.bf16.xpose.msra.mxu0 0
      %408 = vmatprep.subr.bf16.mxu0 0
      %409 = vmatpush1.bf16.xpose.msra.mxu0 0
      %410 = vmatprep.subr.bf16.mxu0 0
      %411 = vmatpush1.bf16.xpose.msra.mxu0 0
      %412 = vmatprep.subr.bf16.mxu0 0
      %413 = vmatpush1.bf16.xpose.msra.mxu0 0
      %414 = vmatprep.subr.bf16.mxu0 0
      %415 = vmatpush1.bf16.xpose.msra.mxu0 0
      %416 = vmatprep.subr.bf16.mxu0 0
      %417 = vmatpush1.bf16.xpose.msra.mxu0 0
      %418 = vmatprep.subr.bf16.mxu0 0
      %419 = vmatpush1.bf16.xpose.msra.mxu0 0
      %420 = vmatprep.subr.bf16.mxu0 0
      %421 = vmatpush1.bf16.xpose.msra.mxu0 0
      %422 = vmatprep.subr.bf16.mxu0 0
      %423 = vmatpush1.bf16.xpose.msra.mxu0 0
      %424 = vmatprep.subr.bf16.mxu0 0
      %425 = vmatpush1.bf16.xpose.msra.mxu0 0
      %426 = vmatprep.subr.bf16.mxu0 0
      %427 = vmatpush1.bf16.xpose.msra.mxu0 0
      %428 = vmatprep.mubr.bf16.mxu0 0
      %429 = vmatmul.mubr.bf16.gmra.mrb[0].mxu0 %v391
      %v430 = vpop.f32.mrb[0].mxu0
      %v431 = vadd.f32 0.0, %v430
      %v432 = vpop.f32.mrb[0].mxu0
      %v433 = vpop.f32.mrb[0].mxu0
      %v434 = vpop.f32.mrb[0].mxu0
      %435 = vdwg.mxu0
      %v436 = vmul.f32 %v431, 0.35355338
      %v437 = vadd.f32 %v436, %v388
      %v438 = vld [vmem:[#allocation2] sm:$0xff]
      %v439 = vsel %vm389, %v437, -inf
      %440 = vmax.xlane.f32.xlu0 %v439
      %v441 = vpop.xlane.xlu0 %440
      %v442 = vmax.f32 %v438, %v441
      %v443 = vsub.f32 %v438, %v442
      %v444 = vmul.f32 %v443, 1.442695
      %v445 = vpow.pop %v444
      %447 = vset.pattern.permute.xlu0 0
      %448 = vperm.xlu0 %447, %v442
      %v449 = vpop.permute.xlu0 %448
      %v451 = vsub.f32 %v437, %v449
      %v452 = vmul.f32 %v451, 1.442695
      %v453 = vpow.pop %v452
      %v454 = vld [vmem:[#allocation3] sm:$0xff]
      %v455 = vmul.f32 %v445, %v454
      %v456 = vsel %vm389, %v453, 0.0
      %457 = vadd.xlane.f32.xlu0 %v456
      %v458 = vpop.xlane.xlu0 %457
      %v459 = vadd.f32 %v455, %v458
      %vm460 = vcmask 7168
      %461 = vst.msk [vmem:[#allocation3] sm:$0xff] %vm460, %v459
      %v462 = vld [vmem:[#allocation4] sm:$0xff]
      %464 = vset.pattern.permute.xlu0 0
      %465 = vperm.xlu0 %464, %v445
      %v466 = vpop.permute.xlu0 %465
      %v468 = vmul.f32 %v466, %v462
      %v469 = vpack.c.bf16 %v453, %v453
      %v471 = vsel %vm389, %v469, 0
      %vm473 = vcmask 1043456
      %v475 = vsel %vm473, %v387, 0
      %477 = vmatprep.subr.bf16.mxu0 0
      %478 = vmatpush1.bf16.msra.mxu0 %v475
      %479 = vmatprep.subr.bf16.mxu0 0
      %480 = vmatpush1.bf16.msra.mxu0 0
      %481 = vmatprep.subr.bf16.mxu0 0
      %482 = vmatpush1.bf16.msra.mxu0 0
      %483 = vmatprep.subr.bf16.mxu0 0
      %484 = vmatpush1.bf16.msra.mxu0 0
      %485 = vmatprep.subr.bf16.mxu0 0
      %486 = vmatpush1.bf16.msra.mxu0 0
      %487 = vmatprep.subr.bf16.mxu0 0
      %488 = vmatpush1.bf16.msra.mxu0 0
      %489 = vmatprep.subr.bf16.mxu0 0
      %490 = vmatpush1.bf16.msra.mxu0 0
      %491 = vmatprep.subr.bf16.mxu0 0
      %492 = vmatpush1.bf16.msra.mxu0 0
      %493 = vmatprep.subr.bf16.mxu0 0
      %494 = vmatpush1.bf16.msra.mxu0 0
      %495 = vmatprep.subr.bf16.mxu0 0
      %496 = vmatpush1.bf16.msra.mxu0 0
      %497 = vmatprep.subr.bf16.mxu0 0
      %498 = vmatpush1.bf16.msra.mxu0 0
      %499 = vmatprep.subr.bf16.mxu0 0
      %500 = vmatpush1.bf16.msra.mxu0 0
      %501 = vmatprep.subr.bf16.mxu0 0
      %502 = vmatpush1.bf16.msra.mxu0 0
      %503 = vmatprep.subr.bf16.mxu0 0
      %504 = vmatpush1.bf16.msra.mxu0 0
      %505 = vmatprep.subr.bf16.mxu0 0
      %506 = vmatpush1.bf16.msra.mxu0 0
      %507 = vmatprep.subr.bf16.mxu0 0
      %508 = vmatpush1.bf16.msra.mxu0 0
      %509 = vmatprep.mubr.bf16.mxu0 0
      %510 = vmatmul.mubr.bf16.gmra.mrb[0].mxu0 %v471
      %v511 = vpop.f32.mrb[0].mxu0
      %v512 = vadd.f32 0.0, %v511
      %v513 = vpop.f32.mrb[0].mxu0
      %v514 = vpop.f32.mrb[0].mxu0
      %v515 = vpop.f32.mrb[0].mxu0
      %516 = vdwg.mxu0
      %v517 = vadd.f32 %v468, %v512
      %518 = vst.msk [vmem:[#allocation4] sm:$0xff] %vm389, %v517
      %519 = vst.msk [vmem:[#allocation2] sm:$0xff] %vm460, %v442
      %v521 = vunpack.c.l.b16 %v385
      %v522 = vpack.c.b16 %v521, %v521
      %523 = vrot.lane.b32.xlu0 %v522, 120
      %v524 = vpop.permute.xlu0 %523
      %v526 = vunpack.c.l.b16 %v386
      %v527 = vpack.c.b16 %v526, %v526
      %528 = vrot.lane.b32.xlu0 %v527, 120
      %v529 = vpop.permute.xlu0 %528
      %v531 = vsel %vm389, %v524, 0
      %v534 = vsel %vm389, %v529, 0
      %536 = vmatprep.subr.bf16.mxu0 0
      %537 = vmatpush1.bf16.xpose.msra.mxu0 %v534
      %538 = vmatprep.subr.bf16.mxu0 0
      %539 = vmatpush1.bf16.xpose.msra.mxu0 0
      %540 = vmatprep.subr.bf16.mxu0 0
      %541 = vmatpush1.bf16.xpose.msra.mxu0 0
      %542 = vmatprep.subr.bf16.mxu0 0
      %543 = vmatpush1.bf16.xpose.msra.mxu0 0
      %544 = vmatprep.subr.bf16.mxu0 0
      %545 = vmatpush1.bf16.xpose.msra.mxu0 0
      %546 = vmatprep.subr.bf16.mxu0 0
      %547 = vmatpush1.bf16.xpose.msra.mxu0 0
      %548 = vmatprep.subr.bf16.mxu0 0
      %549 = vmatpush1.bf16.xpose.msra.mxu0 0
      %550 = vmatprep.subr.bf16.mxu0 0
      %551 = vmatpush1.bf16.xpose.msra.mxu0 0
      %552 = vmatprep.subr.bf16.mxu0 0
      %553 = vmatpush1.bf16.xpose.msra.mxu0 0
      %554 = vmatprep.subr.bf16.mxu0 0
      %555 = vmatpush1.bf16.xpose.msra.mxu0 0
      %556 = vmatprep.subr.bf16.mxu0 0
      %557 = vmatpush1.bf16.xpose.msra.mxu0 0
      %558 = vmatprep.subr.bf16.mxu0 0
      %559 = vmatpush1.bf16.xpose.msra.mxu0 0
      %560 = vmatprep.subr.bf16.mxu0 0
      %561 = vmatpush1.bf16.xpose.msra.mxu0 0
      %562 = vmatprep.subr.bf16.mxu0 0
      %563 = vmatpush1.bf16.xpose.msra.mxu0 0
      %564 = vmatprep.subr.bf16.mxu0 0
      %565 = vmatpush1.bf16.xpose.msra.mxu0 0
      %566 = vmatprep.subr.bf16.mxu0 0
      %567 = vmatpush1.bf16.xpose.msra.mxu0 0
      %568 = vmatprep.mubr.bf16.mxu0 0
      %569 = vmatmul.mubr.bf16.gmra.mrb[0].mxu0 %v531
      %v570 = vpop.f32.mrb[0].mxu0
      %v571 = vadd.f32 0.0, %v570
      %v572 = vpop.f32.mrb[0].mxu0
      %v573 = vpop.f32.mrb[0].mxu0
      %v574 = vpop.f32.mrb[0].mxu0
      %575 = vdwg.mxu0
      %v576 = vmul.f32 %v571, 0.35355338
      %v577 = vadd.f32 %v576, %v388
      %s578 = scalar_lea.vmem [#allocation2], 8
      %v579 = vld [vmem:[%s578] sm:$0xff]
      %v580 = vsel %vm389, %v577, -inf
      %581 = vmax.xlane.f32.xlu0 %v580
      %v582 = vpop.xlane.xlu0 %581
      %v583 = vmax.f32 %v579, %v582
      %v584 = vsub.f32 %v579, %v583
      %v585 = vmul.f32 %v584, 1.442695
      %v586 = vpow.pop %v585
      %588 = vset.pattern.permute.xlu0 0
      %589 = vperm.xlu0 %588, %v583
      %v590 = vpop.permute.xlu0 %589
      %v592 = vsub.f32 %v577, %v590
      %v593 = vmul.f32 %v592, 1.442695
      %v594 = vpow.pop %v593
      %s595 = scalar_lea.vmem [#allocation3], 8
      %v596 = vld [vmem:[%s595] sm:$0xff]
      %v597 = vmul.f32 %v586, %v596
      %v598 = vsel %vm389, %v594, 0.0
      %599 = vadd.xlane.f32.xlu0 %v598
      %v600 = vpop.xlane.xlu0 %599
      %v601 = vadd.f32 %v597, %v600
      %602 = vst.msk [vmem:[%s595] sm:$0xff] %vm460, %v601
      %v603 = vld [vmem:[#allocation4] sm:$0xff]
      %605 = vset.pattern.permute.xlu0 0
      %606 = vperm.xlu0 %605, %v586
      %v607 = vpop.permute.xlu0 %606
      %v609 = vmul.f32 %v607, %v603
      %v610 = vpack.c.bf16 %v594, %v594
      %v612 = vunpack.c.l.b16 %v387
      %v613 = vpack.c.b16 %v612, %v612
      %614 = vrot.lane.b32.xlu0 %v613, 120
      %v615 = vpop.permute.xlu0 %614
      %v617 = vsel %vm389, %v610, 0
      %v620 = vsel %vm473, %v615, 0
      %622 = vmatprep.subr.bf16.mxu0 0
      %623 = vmatpush1.bf16.msra.mxu0 %v620
      %624 = vmatprep.subr.bf16.mxu0 0
      %625 = vmatpush1.bf16.msra.mxu0 0
      %626 = vmatprep.subr.bf16.mxu0 0
      %627 = vmatpush1.bf16.msra.mxu0 0
      %628 = vmatprep.subr.bf16.mxu0 0
      %629 = vmatpush1.bf16.msra.mxu0 0
      %630 = vmatprep.subr.bf16.mxu0 0
      %631 = vmatpush1.bf16.msra.mxu0 0
      %632 = vmatprep.subr.bf16.mxu0 0
      %633 = vmatpush1.bf16.msra.mxu0 0
      %634 = vmatprep.subr.bf16.mxu0 0
      %635 = vmatpush1.bf16.msra.mxu0 0
      %636 = vmatprep.subr.bf16.mxu0 0
      %637 = vmatpush1.bf16.msra.mxu0 0
      %638 = vmatprep.subr.bf16.mxu0 0
      %639 = vmatpush1.bf16.msra.mxu0 0
      %640 = vmatprep.subr.bf16.mxu0 0
      %641 = vmatpush1.bf16.msra.mxu0 0
      %642 = vmatprep.subr.bf16.mxu0 0
      %643 = vmatpush1.bf16.msra.mxu0 0
      %644 = vmatprep.subr.bf16.mxu0 0
      %645 = vmatpush1.bf16.msra.mxu0 0
      %646 = vmatprep.subr.bf16.mxu0 0
      %647 = vmatpush1.bf16.msra.mxu0 0
      %648 = vmatprep.subr.bf16.mxu0 0
      %649 = vmatpush1.bf16.msra.mxu0 0
      %650 = vmatprep.subr.bf16.mxu0 0
      %651 = vmatpush1.bf16.msra.mxu0 0
      %652 = vmatprep.subr.bf16.mxu0 0
      %653 = vmatpush1.bf16.msra.mxu0 0
      %654 = vmatprep.mubr.bf16.mxu0 0
      %655 = vmatmul.mubr.bf16.gmra.mrb[0].mxu0 %v617
      %v656 = vpop.f32.mrb[0].mxu0
      %v657 = vadd.f32 0.0, %v656
      %v658 = vpop.f32.mrb[0].mxu0
      %v659 = vpop.f32.mrb[0].mxu0
      %v660 = vpop.f32.mrb[0].mxu0
      %661 = vdwg.mxu0
      %663 = vrot.lane.b32.xlu0 %v657, 8
      %v664 = vpop.permute.xlu0 %663
      %v666 = vadd.f32 %v609, %v664
      %vm667 = vcmask 130112
      %668 = vst.msk [vmem:[#allocation4] sm:$0xff] %vm667, %v666
      %669 = vst.msk [vmem:[%s578] sm:$0xff] %vm460, %v583
      %670 = vrot.lane.b32.xlu0 %v522, 112
      %v671 = vpop.permute.xlu0 %670
      %672 = vrot.lane.b32.xlu0 %v527, 112
      %v673 = vpop.permute.xlu0 %672
      %v675 = vsel %vm389, %v671, 0
      %v678 = vsel %vm389, %v673, 0
      %680 = vmatprep.subr.bf16.mxu0 0
      %681 = vmatpush1.bf16.xpose.msra.mxu0 %v678
      %682 = vmatprep.subr.bf16.mxu0 0
      %683 = vmatpush1.bf16.xpose.msra.mxu0 0
      %684 = vmatprep.subr.bf16.mxu0 0
      %685 = vmatpush1.bf16.xpose.msra.mxu0 0
      %686 = vmatprep.subr.bf16.mxu0 0
      %687 = vmatpush1.bf16.xpose.msra.mxu0 0
      %688 = vmatprep.subr.bf16.mxu0 0
      %689 = vmatpush1.bf16.xpose.msra.mxu0 0
      %690 = vmatprep.subr.bf16.mxu0 0
      %691 = vmatpush1.bf16.xpose.msra.mxu0 0
      %692 = vmatprep.subr.bf16.mxu0 0
      %693 = vmatpush1.bf16.xpose.msra.mxu0 0
      %694 = vmatprep.subr.bf16.mxu0 0
      %695 = vmatpush1.bf16.xpose.msra.mxu0 0
      %696 = vmatprep.subr.bf16.mxu0 0
      %697 = vmatpush1.bf16.xpose.msra.mxu0 0
      %698 = vmatprep.subr.bf16.mxu0 0
      %699 = vmatpush1.bf16.xpose.msra.mxu0 0
      %700 = vmatprep.subr.bf16.mxu0 0
      %701 = vmatpush1.bf16.xpose.msra.mxu0 0
      %702 = vmatprep.subr.bf16.mxu0 0
      %703 = vmatpush1.bf16.xpose.msra.mxu0 0
      %704 = vmatprep.subr.bf16.mxu0 0
      %705 = vmatpush1.bf16.xpose.msra.mxu0 0
      %706 = vmatprep.subr.bf16.mxu0 0
      %707 = vmatpush1.bf16.xpose.msra.mxu0 0
      %708 = vmatprep.subr.bf16.mxu0 0
      %709 = vmatpush1.bf16.xpose.msra.mxu0 0
      %710 = vmatprep.subr.bf16.mxu0 0
      %711 = vmatpush1.bf16.xpose.msra.mxu0 0
      %712 = vmatprep.mubr.bf16.mxu0 0
      %713 = vmatmul.mubr.bf16.gmra.mrb[0].mxu0 %v675
      %v714 = vpop.f32.mrb[0].mxu0
      %v715 = vadd.f32 0.0, %v714
      %v716 = vpop.f32.mrb[0].mxu0
      %v717 = vpop.f32.mrb[0].mxu0
      %v718 = vpop.f32.mrb[0].mxu0
      %719 = vdwg.mxu0
      %v720 = vmul.f32 %v715, 0.35355338
      %v721 = vadd.f32 %v720, %v388
      %s722 = scalar_lea.vmem [#allocation2], 16
      %v723 = vld [vmem:[%s722] sm:$0xff]
      %v724 = vsel %vm389, %v721, -inf
      %725 = vmax.xlane.f32.xlu0 %v724
      %v726 = vpop.xlane.xlu0 %725
      %v727 = vmax.f32 %v723, %v726
      %v728 = vsub.f32 %v723, %v727
      %v729 = vmul.f32 %v728, 1.442695
      %v730 = vpow.pop %v729
      %732 = vset.pattern.permute.xlu0 0
      %733 = vperm.xlu0 %732, %v727
      %v734 = vpop.permute.xlu0 %733
      %v736 = vsub.f32 %v721, %v734
      %v737 = vmul.f32 %v736, 1.442695
      %v738 = vpow.pop %v737
      %s739 = scalar_lea.vmem [#allocation3], 16
      %v740 = vld [vmem:[%s739] sm:$0xff]
      %v741 = vmul.f32 %v730, %v740
      %v742 = vsel %vm389, %v738, 0.0
      %743 = vadd.xlane.f32.xlu0 %v742
      %v744 = vpop.xlane.xlu0 %743
      %v745 = vadd.f32 %v741, %v744
      %746 = vst.msk [vmem:[%s739] sm:$0xff] %vm460, %v745
      %v747 = vld [vmem:[#allocation4] sm:$0xff]
      %749 = vset.pattern.permute.xlu0 0
      %750 = vperm.xlu0 %749, %v730
      %v751 = vpop.permute.xlu0 %750
      %v753 = vmul.f32 %v751, %v747
      %v754 = vpack.c.bf16 %v738, %v738
      %755 = vrot.lane.b32.xlu0 %v613, 112
      %v756 = vpop.permute.xlu0 %755
      %v758 = vsel %vm389, %v754, 0
      %v761 = vsel %vm473, %v756, 0
      %763 = vmatprep.subr.bf16.mxu0 0
      %764 = vmatpush1.bf16.msra.mxu0 %v761
      %765 = vmatprep.subr.bf16.mxu0 0
      %766 = vmatpush1.bf16.msra.mxu0 0
      %767 = vmatprep.subr.bf16.mxu0 0
      %768 = vmatpush1.bf16.msra.mxu0 0
      %769 = vmatprep.subr.bf16.mxu0 0
      %770 = vmatpush1.bf16.msra.mxu0 0
      %771 = vmatprep.subr.bf16.mxu0 0
      %772 = vmatpush1.bf16.msra.mxu0 0
      %773 = vmatprep.subr.bf16.mxu0 0
      %774 = vmatpush1.bf16.msra.mxu0 0
      %775 = vmatprep.subr.bf16.mxu0 0
      %776 = vmatpush1.bf16.msra.mxu0 0
      %777 = vmatprep.subr.bf16.mxu0 0
      %778 = vmatpush1.bf16.msra.mxu0 0
      %779 = vmatprep.subr.bf16.mxu0 0
      %780 = vmatpush1.bf16.msra.mxu0 0
      %781 = vmatprep.subr.bf16.mxu0 0
      %782 = vmatpush1.bf16.msra.mxu0 0
      %783 = vmatprep.subr.bf16.mxu0 0
      %784 = vmatpush1.bf16.msra.mxu0 0
      %785 = vmatprep.subr.bf16.mxu0 0
      %786 = vmatpush1.bf16.msra.mxu0 0
      %787 = vmatprep.subr.bf16.mxu0 0
      %788 = vmatpush1.bf16.msra.mxu0 0
      %789 = vmatprep.subr.bf16.mxu0 0
      %790 = vmatpush1.bf16.msra.mxu0 0
      %791 = vmatprep.subr.bf16.mxu0 0
      %792 = vmatpush1.bf16.msra.mxu0 0
      %793 = vmatprep.subr.bf16.mxu0 0
      %794 = vmatpush1.bf16.msra.mxu0 0
      %795 = vmatprep.mubr.bf16.mxu0 0
      %796 = vmatmul.mubr.bf16.gmra.mrb[0].mxu0 %v758
      %v797 = vpop.f32.mrb[0].mxu0
      %v798 = vadd.f32 0.0, %v797
      %v799 = vpop.f32.mrb[0].mxu0
      %v800 = vpop.f32.mrb[0].mxu0
      %v801 = vpop.f32.mrb[0].mxu0
      %802 = vdwg.mxu0
      %804 = vrot.lane.b32.xlu0 %v798, 16
      %v805 = vpop.permute.xlu0 %804
      %v807 = vadd.f32 %v753, %v805
      %vm808 = vcmask 195712
      %809 = vst.msk [vmem:[#allocation4] sm:$0xff] %vm808, %v807
      %810 = vst.msk [vmem:[%s722] sm:$0xff] %vm460, %v727
      %811 = vrot.lane.b32.xlu0 %v522, 104
      %v812 = vpop.permute.xlu0 %811
      %813 = vrot.lane.b32.xlu0 %v527, 104
      %v814 = vpop.permute.xlu0 %813
      %v816 = vsel %vm389, %v812, 0
      %v819 = vsel %vm389, %v814, 0
      %821 = vmatprep.subr.bf16.mxu0 0
      %822 = vmatpush1.bf16.xpose.msra.mxu0 %v819
      %823 = vmatprep.subr.bf16.mxu0 0
      %824 = vmatpush1.bf16.xpose.msra.mxu0 0
      %825 = vmatprep.subr.bf16.mxu0 0
      %826 = vmatpush1.bf16.xpose.msra.mxu0 0
      %827 = vmatprep.subr.bf16.mxu0 0
      %828 = vmatpush1.bf16.xpose.msra.mxu0 0
      %829 = vmatprep.subr.bf16.mxu0 0
      %830 = vmatpush1.bf16.xpose.msra.mxu0 0
      %831 = vmatprep.subr.bf16.mxu0 0
      %832 = vmatpush1.bf16.xpose.msra.mxu0 0
      %833 = vmatprep.subr.bf16.mxu0 0
      %834 = vmatpush1.bf16.xpose.msra.mxu0 0
      %835 = vmatprep.subr.bf16.mxu0 0
      %836 = vmatpush1.bf16.xpose.msra.mxu0 0
      %837 = vmatprep.subr.bf16.mxu0 0
      %838 = vmatpush1.bf16.xpose.msra.mxu0 0
      %839 = vmatprep.subr.bf16.mxu0 0
      %840 = vmatpush1.bf16.xpose.msra.mxu0 0
      %841 = vmatprep.subr.bf16.mxu0 0
      %842 = vmatpush1.bf16.xpose.msra.mxu0 0
      %843 = vmatprep.subr.bf16.mxu0 0
      %844 = vmatpush1.bf16.xpose.msra.mxu0 0
      %845 = vmatprep.subr.bf16.mxu0 0
      %846 = vmatpush1.bf16.xpose.msra.mxu0 0
      %847 = vmatprep.subr.bf16.mxu0 0
      %848 = vmatpush1.bf16.xpose.msra.mxu0 0
      %849 = vmatprep.subr.bf16.mxu0 0
      %850 = vmatpush1.bf16.xpose.msra.mxu0 0
      %851 = vmatprep.subr.bf16.mxu0 0
      %852 = vmatpush1.bf16.xpose.msra.mxu0 0
      %853 = vmatprep.mubr.bf16.mxu0 0
      %854 = vmatmul.mubr.bf16.gmra.mrb[0].mxu0 %v816
      %v855 = vpop.f32.mrb[0].mxu0
      %v856 = vadd.f32 0.0, %v855
      %v857 = vpop.f32.mrb[0].mxu0
      %v858 = vpop.f32.mrb[0].mxu0
      %v859 = vpop.f32.mrb[0].mxu0
      %860 = vdwg.mxu0
      %v861 = vmul.f32 %v856, 0.35355338
      %v862 = vadd.f32 %v861, %v388
      %s863 = scalar_lea.vmem [#allocation2], 24
      %v864 = vld [vmem:[%s863] sm:$0xff]
      %v865 = vsel %vm389, %v862, -inf
      %866 = vmax.xlane.f32.xlu0 %v865
      %v867 = vpop.xlane.xlu0 %866
      %v868 = vmax.f32 %v864, %v867
      %v869 = vsub.f32 %v864, %v868
      %v870 = vmul.f32 %v869, 1.442695
      %v871 = vpow.pop %v870
      %873 = vset.pattern.permute.xlu0 0
      %874 = vperm.xlu0 %873, %v868
      %v875 = vpop.permute.xlu0 %874
      %v877 = vsub.f32 %v862, %v875
      %v878 = vmul.f32 %v877, 1.442695
      %v879 = vpow.pop %v878
      %s880 = scalar_lea.vmem [#allocation3], 24
      %v881 = vld [vmem:[%s880] sm:$0xff]
      %v882 = vmul.f32 %v871, %v881
      %v883 = vsel %vm389, %v879, 0.0
      %884 = vadd.xlane.f32.xlu0 %v883
      %v885 = vpop.xlane.xlu0 %884
      %v886 = vadd.f32 %v882, %v885
      %887 = vst.msk [vmem:[%s880] sm:$0xff] %vm460, %v886
      %v888 = vld [vmem:[#allocation4] sm:$0xff]
      %890 = vset.pattern.permute.xlu0 0
      %891 = vperm.xlu0 %890, %v871
      %v892 = vpop.permute.xlu0 %891
      %v894 = vmul.f32 %v892, %v888
      %v895 = vpack.c.bf16 %v879, %v879
      %896 = vrot.lane.b32.xlu0 %v613, 104
      %v897 = vpop.permute.xlu0 %896
      %v899 = vsel %vm389, %v895, 0
      %v902 = vsel %vm473, %v897, 0
      %904 = vmatprep.subr.bf16.mxu0 0
      %905 = vmatpush1.bf16.msra.mxu0 %v902
      %906 = vmatprep.subr.bf16.mxu0 0
      %907 = vmatpush1.bf16.msra.mxu0 0
      %908 = vmatprep.subr.bf16.mxu0 0
      %909 = vmatpush1.bf16.msra.mxu0 0
      %910 = vmatprep.subr.bf16.mxu0 0
      %911 = vmatpush1.bf16.msra.mxu0 0
      %912 = vmatprep.subr.bf16.mxu0 0
      %913 = vmatpush1.bf16.msra.mxu0 0
      %914 = vmatprep.subr.bf16.mxu0 0
      %915 = vmatpush1.bf16.msra.mxu0 0
      %916 = vmatprep.subr.bf16.mxu0 0
      %917 = vmatpush1.bf16.msra.mxu0 0
      %918 = vmatprep.subr.bf16.mxu0 0
      %919 = vmatpush1.bf16.msra.mxu0 0
      %920 = vmatprep.subr.bf16.mxu0 0
      %921 = vmatpush1.bf16.msra.mxu0 0
      %922 = vmatprep.subr.bf16.mxu0 0
      %923 = vmatpush1.bf16.msra.mxu0 0
      %924 = vmatprep.subr.bf16.mxu0 0
      %925 = vmatpush1.bf16.msra.mxu0 0
      %926 = vmatprep.subr.bf16.mxu0 0
      %927 = vmatpush1.bf16.msra.mxu0 0
      %928 = vmatprep.subr.bf16.mxu0 0
      %929 = vmatpush1.bf16.msra.mxu0 0
      %930 = vmatprep.subr.bf16.mxu0 0
      %931 = vmatpush1.bf16.msra.mxu0 0
      %932 = vmatprep.subr.bf16.mxu0 0
      %933 = vmatpush1.bf16.msra.mxu0 0
      %934 = vmatprep.subr.bf16.mxu0 0
      %935 = vmatpush1.bf16.msra.mxu0 0
      %936 = vmatprep.mubr.bf16.mxu0 0
      %937 = vmatmul.mubr.bf16.gmra.mrb[0].mxu0 %v899
      %v938 = vpop.f32.mrb[0].mxu0
      %v939 = vadd.f32 0.0, %v938
      %v940 = vpop.f32.mrb[0].mxu0
      %v941 = vpop.f32.mrb[0].mxu0
      %v942 = vpop.f32.mrb[0].mxu0
      %943 = vdwg.mxu0
      %945 = vrot.lane.b32.xlu0 %v939, 24
      %v946 = vpop.permute.xlu0 %945
      %v948 = vadd.f32 %v894, %v946
      %vm949 = vcmask 261312
      %950 = vst.msk [vmem:[#allocation4] sm:$0xff] %vm949, %v948
      %951 = vst.msk [vmem:[%s863] sm:$0xff] %vm460, %v868
      // Predicated region
      $region41: #{encoder_gpt2_forward.11} parent=35 // pred_check
        %p952 = pneg %p370
      $region42: #{encoder_gpt2_forward.11} parent=35 // pred_check_branch
        %954 = sbr.rel (%p952) target = $region44
      $region43: #{encoder_gpt2_forward.11} parent=35 // pred_region
        %v955 = vld [vmem:[#allocation4] sm:$0xff]
        %v956 = vld [vmem:[#allocation3] sm:$0xff]
        %958 = vset.pattern.permute.xlu0 0
        %959 = vperm.xlu0 %958, %v956
        %v960 = vpop.permute.xlu0 %959
        %v962 = vrcp.pop %v960
        %v963 = vmul.f32 %v955, %v962
        %964 = vst.msk [vmem:[#allocation4] sm:$0xff] %vm389, %v963
        %v965 = vld [vmem:[#allocation4] sm:$0xff]
        %v966 = vld [vmem:[%s595] sm:$0xff]
        %968 = vset.pattern.permute.xlu0 0
        %969 = vperm.xlu0 %968, %v966
        %v970 = vpop.permute.xlu0 %969
        %v972 = vrcp.pop %v970
        %v973 = vmul.f32 %v965, %v972
        %974 = vst.msk [vmem:[#allocation4] sm:$0xff] %vm667, %v973
        %v975 = vld [vmem:[#allocation4] sm:$0xff]
        %v976 = vld [vmem:[%s739] sm:$0xff]
        %978 = vset.pattern.permute.xlu0 0
        %979 = vperm.xlu0 %978, %v976
        %v980 = vpop.permute.xlu0 %979
        %v982 = vrcp.pop %v980
        %v983 = vmul.f32 %v975, %v982
        %984 = vst.msk [vmem:[#allocation4] sm:$0xff] %vm808, %v983
        %v985 = vld [vmem:[#allocation4] sm:$0xff]
        %v986 = vld [vmem:[%s880] sm:$0xff]
        %988 = vset.pattern.permute.xlu0 0
        %989 = vperm.xlu0 %988, %v986
        %v990 = vpop.permute.xlu0 %989
        %v992 = vrcp.pop %v990
        %v993 = vmul.f32 %v985, %v992
        %994 = vst.msk [vmem:[#allocation4] sm:$0xff] %vm949, %v993
        %v995 = vld [vmem:[#allocation4] sm:$0xff]
        %v996 = vpack.c.bf16 %v995, %v995
        %vm997 = vcmask 257024
        %998 = vst.msk [vmem:[%s368] sm:$0xf] %vm997, %v996
      $region44: #{encoder_gpt2_forward.11} parent=35 // pred_fallthru
        _
      %p999 = scmp.lt.s32.totalorder %s21, 1
      %s1000 = scalar_select %p999, %s21, 1
      %p1001 = scmp.lt.s32.totalorder %s23, 0
      %s1002 = scalar_select %p1001, %s23, 0
      %p1003 = scmp.lt.s32.totalorder %s22, 0
      %s1004 = scalar_select %p1003, %s22, 0
      %s1005 = sadd.s32 %s1004, %s1002
      %s1006 = sadd.s32 %s1005, %s1000
      %s1007 = smul.addr %s1006, 4
      %s1008 = scalar_lea.vmem %s4, %s1007
      // Predicated region
      $region45: #{encoder_gpt2_forward.11} parent=35 // pred_check
        %p1009 = pneg %p181
      $region46: #{encoder_gpt2_forward.11} parent=35 // pred_check_branch
        %1011 = sbr.rel (%p1009) target = $region48
      $region47: #{encoder_gpt2_forward.11} parent=35 // pred_region
        _
      $region48: #{encoder_gpt2_forward.11} parent=35 // pred_fallthru
        _
    $region36: #{encoder_gpt2_forward.11} parent=5 // pred_fallthru
      _
    %p1012 = scmp.le.s32.totalorder 2, %s10
    // Predicated region
    $region49: #{encoder_gpt2_forward.11} parent=5 // pred_check
      %p1013 = pneg %p1012
    $region50: #{encoder_gpt2_forward.11} parent=5 // pred_check_branch
      %1015 = sbr.rel (%p1013) target = $region52
    $region51: #{encoder_gpt2_forward.11} parent=5 // pred_region
      %s1016 = ssub.s32 %s10, 2
      // Predicated region
      $region53: #{encoder_gpt2_forward.11} parent=51 // pred_check
        %p1017 = pneg %p187
      $region54: #{encoder_gpt2_forward.11} parent=51 // pred_check_branch
        %1019 = sbr.rel (%p1017) target = $region56
      $region55: #{encoder_gpt2_forward.11} parent=51 // pred_region
        %p1020 = scmp.lt.s32.totalorder %s25, 1
        %s1021 = scalar_select %p1020, %s25, 1
        %p1022 = scmp.lt.s32.totalorder %s27, 0
        %s1023 = scalar_select %p1022, %s27, 0
        %p1024 = scmp.lt.s32.totalorder %s26, 0
        %s1025 = scalar_select %p1024, %s26, 0
        %s1026 = sadd.s32 %s1025, %s1023
        %s1027 = sadd.s32 %s1026, %s1021
        %s1028 = smul.addr %s1027, 4
        %s1029 = scalar_lea.vmem %s4, %s1028
      $region56: #{encoder_gpt2_forward.11} parent=51 // pred_fallthru
        _
    $region52: #{encoder_gpt2_forward.11} parent=5 // pred_fallthru
      _
  $region6: #{encoder_gpt2_forward.11} parent=0 // loop_footer
    %s14 = sadd.s32 1, %s10
  $region7: #{encoder_gpt2_forward.11} parent=0 // loop_footer_branch
    %9 = sbr.rel target = $region3
  $region8: #{encoder_gpt2_forward.11} parent=0 // loop_exit
    _

// kernel: encoder_gpt2_forward.19
$region0: #{encoder_gpt2_forward.19}
  #allocation0 [shape = 'u32[]', space=smem, size = 0x4, offset = 0x4, fixed_abs, tag = 'smem constant byte address 0x4 - core index']
  #allocation1 [shape = 'u32[144,128]{1,0:T(1,128)}', space=vmem, size = 0x12000, scoped, tag = 'internal scratch']
  #allocation2 [shape = 'f32[8,32]{1,0:T(8,128)}', space=vmem, size = 0x1000, scoped, tag = 'scratch operand']
  %s0 = inlined_call_operand.vmem [shape: bf16[16,64], index: 0, kind: input, shape index: {}]
  %s1 = inlined_call_operand.vmem [shape: bf16[64,32], index: 1, kind: input, shape index: {}]
  %s2 = inlined_call_operand.vmem [shape: f32[1,32], index: 2, kind: input, shape index: {}]
  %s3 = inlined_call_operand.vmem [shape: f32[16,32], index: 3, kind: input, shape index: {}]
  %s4 = inlined_call_operand.vmem [shape: f32[1,32], index: 4, kind: input, shape index: {}]
  %s5 = inlined_call_operand.vmem [shape: f32[1,32], index: 5, kind: input, shape index: {}]
  %s6 = inlined_call_operand.hbm [shape: f32[16,32], index: 6, kind: output, shape index: {}]
  %s7 = sld [smem:[#allocation0]]
  $region65: #{encoder_gpt2_forward.19} parent=0
    _
  %s9 = ssub.s32 1, %s7
  %s10 = scalar_select 0, %s9, %s7
  $region1: #{encoder_gpt2_forward.19} parent=0
    #allocation3 [shape = 'u8[8192]{0}', space=vmem, size = 0x2000, scoped, tag = 'output window, operand 0']
    #allocation4 [shape = 's32[2]{0}', space=sflag, size = 0x8, scoped, tag = 'scoped memory for encoder_gpt2_forward.19']
    %11 = vsyncpa [#allocation4], 0
    %s12 = scalar_lea.sflag [#allocation4], 1
    %13 = vsyncpa %s12, 0
    loop: start=0, step=1, limit=4
    $region2: #{encoder_gpt2_forward.19} parent=1 // loop_pre_header
      _
    $region3: #{encoder_gpt2_forward.19} parent=1 // loop_header
      %s15 = sphi 0, %s19
      %p16 = scmp.ge.s32.totalorder %s15, 4
      %s22 = sphi 0, %s34
      %s23 = sphi 0, %s30
      %s24 = sphi 0, %s22
      %s25 = sphi 0, %s23
      %s26 = sphi 0, %s24
      %s27 = sphi 0, %s25
      %s39 = sphi 0, %s41
      %s42 = sphi 0, %s39
      %s43 = sphi 0, %s42
      %s59 = sphi 0, %s43
      %s65 = sphi 0, %s67
      %s68 = sphi 0, %s65
      %s69 = sphi 0, %s68
      %s85 = sphi 0, %s69
      %s89 = sphi 0, %s89
      %s91 = sphi 0, %s89
      %s92 = sphi 0, %s91
      %s106 = sphi 0, %s92
      %s112 = sphi 0, %s114
      %s115 = sphi 0, %s112
      %s116 = sphi 0, %s115
      %s132 = sphi 0, %s116
      %s136 = sphi 0, %s136
      %s138 = sphi 0, %s136
      %s139 = sphi 0, %s138
      %s153 = sphi 0, %s139
      %s157 = sphi 0, %s157
      %s159 = sphi 0, %s157
      %s160 = sphi 0, %s159
      %s174 = sphi 0, %s160
      %s180 = sphi 0, %s182
      %s183 = sphi 0, %s180
      %s184 = sphi 0, %s183
      %s200 = sphi 0, %s184
    $region4: #{encoder_gpt2_forward.19} parent=1 // loop_header_branch
      %18 = sbr.rel (%p16) target = $region8
    $region5: #{encoder_gpt2_forward.19} parent=1 // loop_body
      %s20 = ssub.s32 %s15, 1
      %s21 = ssub.s32 %s15, 2
      %s28 = sadd.s32 1, %s23
      %p29 = scmp.ge.s32.totalorder %s28, 1
      %s30 = scalar_select %p29, 0, %s28
      %s31 = sadd.s32 1, %s22
      %s32 = scalar_select %p29, %s31, %s22
      %p33 = scmp.ge.s32.totalorder %s32, 2
      %s34 = scalar_select %p33, 0, %s32
      %s35 = ssub.s32 %s22, %s34
      %s36 = ssub.s32 %s23, %s30
      %s37 = sor.u32 %s35, %s36
      %p38 = scmp.eq.s32.totalorder %s37, 0
      %s40 = sadd.s32 %s39, 1
      %s41 = scalar_select %p38, %s39, %s40
      %p44 = pneg %p38
      %p45 = scmp.eq.s32.totalorder %s15, 1
      %p46 = por %p44, %p45
      %p47 = scmp.ne.s32.totalorder %s39, %s42
      %p48 = scmp.eq.s32.totalorder %s15, 0
      %p49 = por %p47, %p48
      %p50 = scmp.ne.s32.totalorder %s39, %s42
      %p51 = scmp.eq.s32.totalorder %s20, 1
      %p52 = por %p50, %p51
      %p53 = scmp.ne.s32.totalorder %s42, %s43
      %p54 = scmp.eq.s32.totalorder %s20, 0
      %p55 = por %p53, %p54
      %p56 = scmp.ne.s32.totalorder %s42, %s43
      %p57 = scmp.eq.s32.totalorder %s21, 1
      %p58 = por %p56, %p57
      %p60 = scmp.ne.s32.totalorder %s43, %s59
      %p61 = scmp.eq.s32.totalorder %s21, 0
      %p62 = por %p60, %p61
      %s63 = ssub.s32 %s23, %s30
      %p64 = scmp.eq.s32.totalorder %s63, 0
      %s66 = sadd.s32 %s65, 1
      %s67 = scalar_select %p64, %s65, %s66
      %p70 = pneg %p64
      %p71 = scmp.eq.s32.totalorder %s15, 1
      %p72 = por %p70, %p71
      %p73 = scmp.ne.s32.totalorder %s65, %s68
      %p74 = scmp.eq.s32.totalorder %s15, 0
      %p75 = por %p73, %p74
      %p76 = scmp.ne.s32.totalorder %s65, %s68
      %p77 = scmp.eq.s32.totalorder %s20, 1
      %p78 = por %p76, %p77
      %p79 = scmp.ne.s32.totalorder %s68, %s69
      %p80 = scmp.eq.s32.totalorder %s20, 0
      %p81 = por %p79, %p80
      %p82 = scmp.ne.s32.totalorder %s68, %s69
      %p83 = scmp.eq.s32.totalorder %s21, 1
      %p84 = por %p82, %p83
      %p86 = scmp.ne.s32.totalorder %s69, %s85
      %p87 = scmp.eq.s32.totalorder %s21, 0
      %p88 = por %p86, %p87
      %s90 = sadd.s32 %s89, 1
      %p93 = scmp.eq.s32.totalorder %s15, 1
      %p94 = scmp.ne.s32.totalorder %s89, %s91
      %p95 = scmp.eq.s32.totalorder %s15, 0
      %p96 = por %p94, %p95
      %p97 = scmp.ne.s32.totalorder %s89, %s91
      %p98 = scmp.eq.s32.totalorder %s20, 1
      %p99 = por %p97, %p98
      %p100 = scmp.ne.s32.totalorder %s91, %s92
      %p101 = scmp.eq.s32.totalorder %s20, 0
      %p102 = por %p100, %p101
      %p103 = scmp.ne.s32.totalorder %s91, %s92
      %p104 = scmp.eq.s32.totalorder %s21, 1
      %p105 = por %p103, %p104
      %p107 = scmp.ne.s32.totalorder %s92, %s106
      %p108 = scmp.eq.s32.totalorder %s21, 0
      %p109 = por %p107, %p108
      %s110 = ssub.s32 %s22, %s34
      %p111 = scmp.eq.s32.totalorder %s110, 0
      %s113 = sadd.s32 %s112, 1
      %s114 = scalar_select %p111, %s112, %s113
      %p117 = pneg %p111
      %p118 = scmp.eq.s32.totalorder %s15, 1
      %p119 = por %p117, %p118
      %p120 = scmp.ne.s32.totalorder %s112, %s115
      %p121 = scmp.eq.s32.totalorder %s15, 0
      %p122 = por %p120, %p121
      %p123 = scmp.ne.s32.totalorder %s112, %s115
      %p124 = scmp.eq.s32.totalorder %s20, 1
      %p125 = por %p123, %p124
      %p126 = scmp.ne.s32.totalorder %s115, %s116
      %p127 = scmp.eq.s32.totalorder %s20, 0
      %p128 = por %p126, %p127
      %p129 = scmp.ne.s32.totalorder %s115, %s116
      %p130 = scmp.eq.s32.totalorder %s21, 1
      %p131 = por %p129, %p130
      %p133 = scmp.ne.s32.totalorder %s116, %s132
      %p134 = scmp.eq.s32.totalorder %s21, 0
      %p135 = por %p133, %p134
      %s137 = sadd.s32 %s136, 1
      %p140 = scmp.eq.s32.totalorder %s15, 1
      %p141 = scmp.ne.s32.totalorder %s136, %s138
      %p142 = scmp.eq.s32.totalorder %s15, 0
      %p143 = por %p141, %p142
      %p144 = scmp.ne.s32.totalorder %s136, %s138
      %p145 = scmp.eq.s32.totalorder %s20, 1
      %p146 = por %p144, %p145
      %p147 = scmp.ne.s32.totalorder %s138, %s139
      %p148 = scmp.eq.s32.totalorder %s20, 0
      %p149 = por %p147, %p148
      %p150 = scmp.ne.s32.totalorder %s138, %s139
      %p151 = scmp.eq.s32.totalorder %s21, 1
      %p152 = por %p150, %p151
      %p154 = scmp.ne.s32.totalorder %s139, %s153
      %p155 = scmp.eq.s32.totalorder %s21, 0
      %p156 = por %p154, %p155
      %s158 = sadd.s32 %s157, 1
      %p161 = scmp.eq.s32.totalorder %s15, 1
      %p162 = scmp.ne.s32.totalorder %s157, %s159
      %p163 = scmp.eq.s32.totalorder %s15, 0
      %p164 = por %p162, %p163
      %p165 = scmp.ne.s32.totalorder %s157, %s159
      %p166 = scmp.eq.s32.totalorder %s20, 1
      %p167 = por %p165, %p166
      %p168 = scmp.ne.s32.totalorder %s159, %s160
      %p169 = scmp.eq.s32.totalorder %s20, 0
      %p170 = por %p168, %p169
      %p171 = scmp.ne.s32.totalorder %s159, %s160
      %p172 = scmp.eq.s32.totalorder %s21, 1
      %p173 = por %p171, %p172
      %p175 = scmp.ne.s32.totalorder %s160, %s174
      %p176 = scmp.eq.s32.totalorder %s21, 0
      %p177 = por %p175, %p176
      %s178 = ssub.s32 %s22, %s34
      %p179 = scmp.eq.s32.totalorder %s178, 0
      %s181 = sadd.s32 %s180, 1
      %s182 = scalar_select %p179, %s180, %s181
      %p185 = pneg %p179
      %p186 = scmp.eq.s32.totalorder %s15, 1
      %p187 = por %p185, %p186
      %p188 = scmp.ne.s32.totalorder %s180, %s183
      %p189 = scmp.eq.s32.totalorder %s15, 0
      %p190 = por %p188, %p189
      %p191 = scmp.ne.s32.totalorder %s180, %s183
      %p192 = scmp.eq.s32.totalorder %s20, 1
      %p193 = por %p191, %p192
      %p194 = scmp.ne.s32.totalorder %s183, %s184
      %p195 = scmp.eq.s32.totalorder %s20, 0
      %p196 = por %p194, %p195
      %p197 = scmp.ne.s32.totalorder %s183, %s184
      %p198 = scmp.eq.s32.totalorder %s21, 1
      %p199 = por %p197, %p198
      %p201 = scmp.ne.s32.totalorder %s184, %s200
      %p202 = scmp.eq.s32.totalorder %s21, 0
      %p203 = por %p201, %p202
      %p204 = scmp.le.s32.totalorder 1, %s15
      %p205 = scmp.lt.s32.totalorder %s15, 3
      %p206 = pnand %p204, %p205
      %p207 = pneg %p206
      // Predicated region
      $region9: #{encoder_gpt2_forward.19} parent=5 // pred_check
        _
      $region10: #{encoder_gpt2_forward.19} parent=5 // pred_check_branch
        %209 = sbr.rel (%p206) target = $region12
      $region11: #{encoder_gpt2_forward.19} parent=5 // pred_region
        %s210 = ssub.s32 %s15, 1
        // Predicated region
        $region13: #{encoder_gpt2_forward.19} parent=11 // pred_check
          %p211 = pneg %p81
        $region14: #{encoder_gpt2_forward.19} parent=11 // pred_check_branch
          %213 = sbr.rel (%p211) target = $region16
        $region15: #{encoder_gpt2_forward.19} parent=11 // pred_region
          %s214 = smul.u32 8, %s25
          %p215 = scmp.lt.s32.totalorder %s214, 7
          %s216 = scalar_select %p215, %s214, 7
          %s217 = smul.addr %s216, 4
          %s218 = scalar_lea.vmem %s1, %s217
          %s219 = smul.u32 8, %s25
        $region16: #{encoder_gpt2_forward.19} parent=11 // pred_fallthru
          _
        // Predicated region
        $region17: #{encoder_gpt2_forward.19} parent=11 // pred_check
          %p220 = pneg %p102
        $region18: #{encoder_gpt2_forward.19} parent=11 // pred_check_branch
          %222 = sbr.rel (%p220) target = $region20
        $region19: #{encoder_gpt2_forward.19} parent=11 // pred_region
          _
        $region20: #{encoder_gpt2_forward.19} parent=11 // pred_fallthru
          _
        // Predicated region
        $region21: #{encoder_gpt2_forward.19} parent=11 // pred_check
          %p223 = pneg %p149
        $region22: #{encoder_gpt2_forward.19} parent=11 // pred_check_branch
          %225 = sbr.rel (%p223) target = $region24
        $region23: #{encoder_gpt2_forward.19} parent=11 // pred_region
          _
        $region24: #{encoder_gpt2_forward.19} parent=11 // pred_fallthru
          _
        // Predicated region
        $region25: #{encoder_gpt2_forward.19} parent=11 // pred_check
          %p226 = pneg %p170
        $region26: #{encoder_gpt2_forward.19} parent=11 // pred_check_branch
          %228 = sbr.rel (%p226) target = $region28
        $region27: #{encoder_gpt2_forward.19} parent=11 // pred_region
          _
        $region28: #{encoder_gpt2_forward.19} parent=11 // pred_fallthru
          _
      $region12: #{encoder_gpt2_forward.19} parent=5 // pred_fallthru
        _
      %p229 = scmp.lt.s32.totalorder %s15, 2
      // Predicated region
      $region29: #{encoder_gpt2_forward.19} parent=5 // pred_check
        %p230 = pneg %p229
      $region30: #{encoder_gpt2_forward.19} parent=5 // pred_check_branch
        %232 = sbr.rel (%p230) target = $region32
      $region31: #{encoder_gpt2_forward.19} parent=5 // pred_region
        // Predicated region
        $region33: #{encoder_gpt2_forward.19} parent=31 // pred_check
          %p233 = pneg %p49
        $region34: #{encoder_gpt2_forward.19} parent=31 // pred_check_branch
          %235 = sbr.rel (%p233) target = $region36
        $region35: #{encoder_gpt2_forward.19} parent=31 // pred_region
          %p236 = scmp.lt.s32.totalorder %s22, 1
          %s237 = scalar_select %p236, %s22, 1
          %p238 = scmp.lt.s32.totalorder %s23, 0
          %s239 = scalar_select %p238, %s23, 0
          %s240 = sadd.s32 %s239, %s237
          %s241 = smul.addr %s240, 4
          %s242 = scalar_lea.vmem %s0, %s241
        $region36: #{encoder_gpt2_forward.19} parent=31 // pred_fallthru
          _
        // Predicated region
        $region37: #{encoder_gpt2_forward.19} parent=31 // pred_check
          %p243 = pneg %p122
        $region38: #{encoder_gpt2_forward.19} parent=31 // pred_check_branch
          %245 = sbr.rel (%p243) target = $region40
        $region39: #{encoder_gpt2_forward.19} parent=31 // pred_region
          %p246 = scmp.lt.s32.totalorder %s22, 1
          %s247 = scalar_select %p246, %s22, 1
          %s248 = smul.addr %s247, 8
          %s249 = scalar_lea.vmem %s3, %s248
        $region40: #{encoder_gpt2_forward.19} parent=31 // pred_fallthru
          _
      $region32: #{encoder_gpt2_forward.19} parent=5 // pred_fallthru
        _
      %p250 = scmp.le.s32.totalorder 1, %s15
      %p251 = scmp.lt.s32.totalorder %s15, 3
      %p252 = pnand %p250, %p251
      %p253 = pneg %p252
      // Predicated region
      $region41: #{encoder_gpt2_forward.19} parent=5 // pred_check
        _
      $region42: #{encoder_gpt2_forward.19} parent=5 // pred_check_branch
        %255 = sbr.rel (%p252) target = $region44
      $region43: #{encoder_gpt2_forward.19} parent=5 // pred_region
        %s256 = ssub.s32 %s15, 1
        %p257 = scmp.lt.s32.totalorder %s24, 1
        %s258 = scalar_select %p257, %s24, 1
        %p259 = scmp.lt.s32.totalorder %s25, 0
        %s260 = scalar_select %p259, %s25, 0
        %s261 = sadd.s32 %s260, %s258
        %s262 = smul.addr %s261, 4
        %s263 = scalar_lea.vmem %s0, %s262
        %p264 = pneg %p55
        %p265 = pneg %p52
        %s266 = smul.u32 8, %s25
        %p267 = scmp.lt.s32.totalorder %s266, 7
        %s268 = scalar_select %p267, %s266, 7
        %s269 = smul.addr %s268, 4
        %s270 = scalar_lea.vmem %s1, %s269
        %p271 = pneg %p81
        %p272 = pneg %p78
        %p273 = pneg %p102
        %p274 = pneg %p99
        %p275 = scmp.lt.s32.totalorder %s24, 1
        %s276 = scalar_select %p275, %s24, 1
        %s277 = smul.addr %s276, 8
        %s278 = scalar_lea.vmem %s3, %s277
        %p279 = pneg %p128
        %p280 = pneg %p125
        %p281 = pneg %p149
        %p282 = pneg %p146
        %p283 = pneg %p170
        %p284 = pneg %p167
        %p285 = pneg %p196
        %p286 = pneg %p193
        %s287 = sand.u32 %s183, 1
        %s288 = scalar_lea.sflag [#allocation4], %s287
        %s289 = sand.u32 %s183, 1
        %s290 = smul.addr %s289, 8
        %s291 = scalar_lea.vmem [#allocation3], %s290
        %p292 = scmp.lt.s32.totalorder %s24, 1
        %s293 = scalar_select %p292, %s24, 1
        %p294 = scmp.lt.s32.totalorder %s25, 0
        %s295 = scalar_select %p294, %s25, 0
        %s296 = sadd.s32 %s295, %s293
        %s297 = smul.addr %s296, 4
        %s298 = scalar_lea.vmem %s0, %s297
        %s299 = smul.u32 8, %s25
        %p300 = scmp.lt.s32.totalorder %s299, 7
        %s301 = scalar_select %p300, %s299, 7
        %s302 = smul.addr %s301, 4
        %s303 = scalar_lea.vmem %s1, %s302
        %s304 = smul.u32 8, %s25
        %p305 = scmp.lt.s32.totalorder %s24, 1
        %s306 = scalar_select %p305, %s24, 1
        %s307 = smul.addr %s306, 8
        %s308 = scalar_lea.vmem %s3, %s307
        %p310 = scmp.eq.s32.totalorder %s25, 0
        // Predicated region
        $region45: #{encoder_gpt2_forward.19} parent=43 // pred_check
          %p311 = pneg %p310
        $region46: #{encoder_gpt2_forward.19} parent=43 // pred_check_branch
          %313 = sbr.rel (%p311) target = $region48
        $region47: #{encoder_gpt2_forward.19} parent=43 // pred_region
          %vm314 = vcmask 261120
          %315 = vst.msk [vmem:[#allocation2] sm:$0xff] %vm314, 0.0
        $region48: #{encoder_gpt2_forward.19} parent=43 // pred_fallthru
          _
        %v316 = vld [vmem:[#allocation2] sm:$0xff]
        %v317 = vld [vmem:[%s298] sm:$0xf]
        %v318 = vld [vmem:[%s303] sm:$0xf]
        %v319 = vld [vmem:[%s303 + $0x4] sm:$0xf]
        %v320 = vld [vmem:[%s303 + $0x8] sm:$0xf]
        %v321 = vld [vmem:[%s303 + $0xc] sm:$0xf]
        %v322 = vld [vmem:[%s303 + $0x10] sm:$0xf]
        %v323 = vld [vmem:[%s303 + $0x14] sm:$0xf]
        %v324 = vld [vmem:[%s303 + $0x18] sm:$0xf]
        %v325 = vld [vmem:[%s303 + $0x1c] sm:$0xf]
        %v334 = vunpack.c.l.b16 %v318
        %v335 = vunpack.c.l.b16 %v319
        %v336 = vunpack.c.l.b16 %v320
        %v337 = vunpack.c.l.b16 %v321
        %v338 = vunpack.c.l.b16 %v322
        %v339 = vunpack.c.l.b16 %v323
        %v340 = vunpack.c.l.b16 %v324
        %v341 = vunpack.c.l.b16 %v325
        %v342 = vpack.c.b16 %v335, %v334
        %v343 = vpack.c.b16 %v337, %v336
        %v344 = vpack.c.b16 %v339, %v338
        %v345 = vpack.c.b16 %v341, %v340
        %vm350 = vcmask 523264
        %v352 = vsel %vm350, %v317, 0
        %354 = vmatprep.subr.bf16.mxu0 0
        %355 = vmatpush1.bf16.msra.mxu0 %v342
        %356 = vmatprep.subr.bf16.mxu0 0
        %357 = vmatpush1.bf16.msra.mxu0 %v343
        %358 = vmatprep.subr.bf16.mxu0 0
        %359 = vmatpush1.bf16.msra.mxu0 %v344
        %360 = vmatprep.subr.bf16.mxu0 0
        %361 = vmatpush1.bf16.msra.mxu0 %v345
        %362 = vmatprep.subr.bf16.mxu0 0
        %363 = vmatpush1.bf16.msra.mxu0 0
        %364 = vmatprep.subr.bf16.mxu0 0
        %365 = vmatpush1.bf16.msra.mxu0 0
        %366 = vmatprep.subr.bf16.mxu0 0
        %367 = vmatpush1.bf16.msra.mxu0 0
        %368 = vmatprep.subr.bf16.mxu0 0
        %369 = vmatpush1.bf16.msra.mxu0 0
        %370 = vmatprep.subr.bf16.mxu0 0
        %371 = vmatpush1.bf16.msra.mxu0 0
        %372 = vmatprep.subr.bf16.mxu0 0
        %373 = vmatpush1.bf16.msra.mxu0 0
        %374 = vmatprep.subr.bf16.mxu0 0
        %375 = vmatpush1.bf16.msra.mxu0 0
        %376 = vmatprep.subr.bf16.mxu0 0
        %377 = vmatpush1.bf16.msra.mxu0 0
        %378 = vmatprep.subr.bf16.mxu0 0
        %379 = vmatpush1.bf16.msra.mxu0 0
        %380 = vmatprep.subr.bf16.mxu0 0
        %381 = vmatpush1.bf16.msra.mxu0 0
        %382 = vmatprep.subr.bf16.mxu0 0
        %383 = vmatpush1.bf16.msra.mxu0 0
        %384 = vmatprep.subr.bf16.mxu0 0
        %385 = vmatpush1.bf16.msra.mxu0 0
        %386 = vmatprep.mubr.bf16.mxu0 0
        %387 = vmatmul.mubr.bf16.gmra.mrb[0].mxu0 %v352
        %v388 = vpop.f32.mrb[0].mxu0
        %v389 = vadd.f32 0.0, %v388
        %v390 = vpop.f32.mrb[0].mxu0
        %v391 = vpop.f32.mrb[0].mxu0
        %v392 = vpop.f32.mrb[0].mxu0
        %393 = vdwg.mxu0
        %v394 = vadd.f32 %v316, %v389
        %vm395 = vcmask 261120
        %396 = vst.msk [vmem:[#allocation2] sm:$0xff] %vm395, %v394
        // Predicated region
        $region49: #{encoder_gpt2_forward.19} parent=43 // pred_check
          %p397 = pneg %p310
        $region50: #{encoder_gpt2_forward.19} parent=43 // pred_check_branch
          %399 = sbr.rel (%p397) target = $region52
        $region51: #{encoder_gpt2_forward.19} parent=43 // pred_region
          %v400 = vld [vmem:[#allocation2] sm:$0xff]
          %v401 = vld [vmem:[%s2] sm:$0x1]
          %v403 = vlaneseq
          %v404 = vshrl.u32 %v403, 7
          %v405 = vsub.s32 0, %v404
          %v406 = vrot.slane %v401, %v405
          %v408 = vadd.f32 %v400, %v406
          %v409 = vld [vmem:[%s308] sm:$0xff]
          %v410 = vadd.f32 %v408, %v409
          %v411 = vsel %vm395, %v410, 0.0
          %412 = vadd.xlane.f32.xlu0 %v411
          %v413 = vpop.xlane.xlu0 %412
          %v414 = vrcp.pop 32.0
          %v415 = vmul.f32 %v413, %v414
          %v416 = vsub.f32 %v410, %v415
          %v417 = vmul.f32 %v416, %v416
          %v418 = vsel %vm395, %v417, 0.0
          %419 = vadd.xlane.f32.xlu0 %v418
          %v420 = vpop.xlane.xlu0 %419
          %v421 = vmul.f32 %v420, %v414
          %v422 = vadd.f32 %v421, 1e-05
          %v423 = vrsqrt.pop %v422
          %v424 = vmul.f32 %v416, %v423
          %v425 = vld [vmem:[%s4] sm:$0x1]
          %v427 = vlaneseq
          %v428 = vshrl.u32 %v427, 7
          %v429 = vsub.s32 0, %v428
          %v430 = vrot.slane %v425, %v429
          %v432 = vmul.f32 %v424, %v430
          %v433 = vld [vmem:[%s5] sm:$0x1]
          %v435 = vlaneseq
          %v436 = vshrl.u32 %v435, 7
          %v437 = vsub.s32 0, %v436
          %v438 = vrot.slane %v433, %v437
          %v440 = vadd.f32 %v432, %v438
          %441 = vst.msk [vmem:[%s291] sm:$0xff] %vm395, %v440
        $region52: #{encoder_gpt2_forward.19} parent=43 // pred_fallthru
          _
        %s442 = sand.u32 %s183, 1
        %s443 = scalar_lea.sflag [#allocation4], %s442
        %s444 = sand.u32 %s183, 1
        %s445 = smul.addr %s444, 8
        %s446 = scalar_lea.vmem [#allocation3], %s445
        // Predicated region
        $region53: #{encoder_gpt2_forward.19} parent=43 // pred_check
          %p447 = pneg %p193
        $region54: #{encoder_gpt2_forward.19} parent=43 // pred_check_branch
          %449 = sbr.rel (%p447) target = $region56
        $region55: #{encoder_gpt2_forward.19} parent=43 // pred_region
          %s451 = ssub.s32 128, 128
          %452 = vsyncadd %s443, %s451
          %s453 = smul.addr %s24, 128
          %s454 = scalar_lea.hbm %s6, %s453
          %s456 = sshll.u32 %s446, 4
          %s457 = int_to_ptr.vmem [resolvable:$true] %s456
          %459 = dma.vmem_to_hbm [thread:$0]  %s457, 128, %s454, %s443
        $region56: #{encoder_gpt2_forward.19} parent=43 // pred_fallthru
          _
      $region44: #{encoder_gpt2_forward.19} parent=5 // pred_fallthru
        _
      %p460 = scmp.le.s32.totalorder 2, %s15
      // Predicated region
      $region57: #{encoder_gpt2_forward.19} parent=5 // pred_check
        %p461 = pneg %p460
      $region58: #{encoder_gpt2_forward.19} parent=5 // pred_check_branch
        %463 = sbr.rel (%p461) target = $region60
      $region59: #{encoder_gpt2_forward.19} parent=5 // pred_region
        %s464 = ssub.s32 %s15, 2
        // Predicated region
        $region61: #{encoder_gpt2_forward.19} parent=59 // pred_check
          %p465 = pneg %p199
        $region62: #{encoder_gpt2_forward.19} parent=59 // pred_check_branch
          %467 = sbr.rel (%p465) target = $region64
        $region63: #{encoder_gpt2_forward.19} parent=59 // pred_region
          %s468 = sand.u32 %s184, 1
          %s469 = scalar_lea.sflag [#allocation4], %s468
          %s470 = sand.u32 %s184, 1
          %s471 = smul.addr %s470, 8
          %s472 = scalar_lea.vmem [#allocation3], %s471
          %473 = dma.done %s469, 128
        $region64: #{encoder_gpt2_forward.19} parent=59 // pred_fallthru
          _
      $region60: #{encoder_gpt2_forward.19} parent=5 // pred_fallthru
        _
    $region6: #{encoder_gpt2_forward.19} parent=1 // loop_footer
      %s19 = sadd.s32 1, %s15
    $region7: #{encoder_gpt2_forward.19} parent=1 // loop_footer_branch
      %14 = sbr.rel target = $region3
    $region8: #{encoder_gpt2_forward.19} parent=1 // loop_exit
      _
    %474 = vsyncpa [#allocation4], 1
    %s475 = scalar_lea.sflag [#allocation4], 1
    %476 = vsyncpa %s475, 1

// kernel: encoder_gpt2_forward.14
$region0: #{encoder_gpt2_forward.14}
  #allocation0 [shape = 'u32[]', space=smem, size = 0x4, offset = 0x4, fixed_abs, tag = 'smem constant byte address 0x4 - core index']
  #allocation1 [shape = 'u32[144,128]{1,0:T(1,128)}', space=vmem, size = 0x12000, scoped, tag = 'internal scratch']
  #allocation2 [shape = 'f32[8,32]{1,0:T(8,128)}', space=vmem, size = 0x1000, scoped, tag = 'scratch operand']
  %s0 = inlined_call_operand.vmem [shape: bf16[16,64], index: 0, kind: input, shape index: {}]
  %s1 = inlined_call_operand.vmem [shape: bf16[64,32], index: 1, kind: input, shape index: {}]
  %s2 = inlined_call_operand.vmem [shape: f32[1,32], index: 2, kind: input, shape index: {}]
  %s3 = inlined_call_operand.vmem [shape: f32[16,32], index: 3, kind: input, shape index: {}]
  %s4 = inlined_call_operand.vmem [shape: f32[1,32], index: 4, kind: input, shape index: {}]
  %s5 = inlined_call_operand.vmem [shape: f32[1,32], index: 5, kind: input, shape index: {}]
  %s6 = inlined_call_operand.vmem [shape: f32[16,32], index: 6, kind: output, shape index: {}]
  %s7 = sld [smem:[#allocation0]]
  $region65: #{encoder_gpt2_forward.14} parent=0
    _
  %s9 = ssub.s32 1, %s7
  %s10 = scalar_select 0, %s9, %s7
  loop: start=0, step=1, limit=4
  $region2: #{encoder_gpt2_forward.14} parent=0 // loop_pre_header
    _
  $region3: #{encoder_gpt2_forward.14} parent=0 // loop_header
    %s12 = sphi 0, %s16
    %p13 = scmp.ge.s32.totalorder %s12, 4
    %s19 = sphi 0, %s31
    %s20 = sphi 0, %s27
    %s21 = sphi 0, %s19
    %s22 = sphi 0, %s20
    %s23 = sphi 0, %s21
    %s24 = sphi 0, %s22
    %s36 = sphi 0, %s38
    %s39 = sphi 0, %s36
    %s40 = sphi 0, %s39
    %s56 = sphi 0, %s40
    %s62 = sphi 0, %s64
    %s65 = sphi 0, %s62
    %s66 = sphi 0, %s65
    %s82 = sphi 0, %s66
    %s86 = sphi 0, %s86
    %s88 = sphi 0, %s86
    %s89 = sphi 0, %s88
    %s103 = sphi 0, %s89
    %s109 = sphi 0, %s111
    %s112 = sphi 0, %s109
    %s113 = sphi 0, %s112
    %s129 = sphi 0, %s113
    %s133 = sphi 0, %s133
    %s135 = sphi 0, %s133
    %s136 = sphi 0, %s135
    %s150 = sphi 0, %s136
    %s154 = sphi 0, %s154
    %s156 = sphi 0, %s154
    %s157 = sphi 0, %s156
    %s171 = sphi 0, %s157
    %s177 = sphi 0, %s179
    %s180 = sphi 0, %s177
    %s181 = sphi 0, %s180
    %s197 = sphi 0, %s181
  $region4: #{encoder_gpt2_forward.14} parent=0 // loop_header_branch
    %15 = sbr.rel (%p13) target = $region8
  $region5: #{encoder_gpt2_forward.14} parent=0 // loop_body
    %s17 = ssub.s32 %s12, 1
    %s18 = ssub.s32 %s12, 2
    %s25 = sadd.s32 1, %s20
    %p26 = scmp.ge.s32.totalorder %s25, 1
    %s27 = scalar_select %p26, 0, %s25
    %s28 = sadd.s32 1, %s19
    %s29 = scalar_select %p26, %s28, %s19
    %p30 = scmp.ge.s32.totalorder %s29, 2
    %s31 = scalar_select %p30, 0, %s29
    %s32 = ssub.s32 %s19, %s31
    %s33 = ssub.s32 %s20, %s27
    %s34 = sor.u32 %s32, %s33
    %p35 = scmp.eq.s32.totalorder %s34, 0
    %s37 = sadd.s32 %s36, 1
    %s38 = scalar_select %p35, %s36, %s37
    %p41 = pneg %p35
    %p42 = scmp.eq.s32.totalorder %s12, 1
    %p43 = por %p41, %p42
    %p44 = scmp.ne.s32.totalorder %s36, %s39
    %p45 = scmp.eq.s32.totalorder %s12, 0
    %p46 = por %p44, %p45
    %p47 = scmp.ne.s32.totalorder %s36, %s39
    %p48 = scmp.eq.s32.totalorder %s17, 1
    %p49 = por %p47, %p48
    %p50 = scmp.ne.s32.totalorder %s39, %s40
    %p51 = scmp.eq.s32.totalorder %s17, 0
    %p52 = por %p50, %p51
    %p53 = scmp.ne.s32.totalorder %s39, %s40
    %p54 = scmp.eq.s32.totalorder %s18, 1
    %p55 = por %p53, %p54
    %p57 = scmp.ne.s32.totalorder %s40, %s56
    %p58 = scmp.eq.s32.totalorder %s18, 0
    %p59 = por %p57, %p58
    %s60 = ssub.s32 %s20, %s27
    %p61 = scmp.eq.s32.totalorder %s60, 0
    %s63 = sadd.s32 %s62, 1
    %s64 = scalar_select %p61, %s62, %s63
    %p67 = pneg %p61
    %p68 = scmp.eq.s32.totalorder %s12, 1
    %p69 = por %p67, %p68
    %p70 = scmp.ne.s32.totalorder %s62, %s65
    %p71 = scmp.eq.s32.totalorder %s12, 0
    %p72 = por %p70, %p71
    %p73 = scmp.ne.s32.totalorder %s62, %s65
    %p74 = scmp.eq.s32.totalorder %s17, 1
    %p75 = por %p73, %p74
    %p76 = scmp.ne.s32.totalorder %s65, %s66
    %p77 = scmp.eq.s32.totalorder %s17, 0
    %p78 = por %p76, %p77
    %p79 = scmp.ne.s32.totalorder %s65, %s66
    %p80 = scmp.eq.s32.totalorder %s18, 1
    %p81 = por %p79, %p80
    %p83 = scmp.ne.s32.totalorder %s66, %s82
    %p84 = scmp.eq.s32.totalorder %s18, 0
    %p85 = por %p83, %p84
    %s87 = sadd.s32 %s86, 1
    %p90 = scmp.eq.s32.totalorder %s12, 1
    %p91 = scmp.ne.s32.totalorder %s86, %s88
    %p92 = scmp.eq.s32.totalorder %s12, 0
    %p93 = por %p91, %p92
    %p94 = scmp.ne.s32.totalorder %s86, %s88
    %p95 = scmp.eq.s32.totalorder %s17, 1
    %p96 = por %p94, %p95
    %p97 = scmp.ne.s32.totalorder %s88, %s89
    %p98 = scmp.eq.s32.totalorder %s17, 0
    %p99 = por %p97, %p98
    %p100 = scmp.ne.s32.totalorder %s88, %s89
    %p101 = scmp.eq.s32.totalorder %s18, 1
    %p102 = por %p100, %p101
    %p104 = scmp.ne.s32.totalorder %s89, %s103
    %p105 = scmp.eq.s32.totalorder %s18, 0
    %p106 = por %p104, %p105
    %s107 = ssub.s32 %s19, %s31
    %p108 = scmp.eq.s32.totalorder %s107, 0
    %s110 = sadd.s32 %s109, 1
    %s111 = scalar_select %p108, %s109, %s110
    %p114 = pneg %p108
    %p115 = scmp.eq.s32.totalorder %s12, 1
    %p116 = por %p114, %p115
    %p117 = scmp.ne.s32.totalorder %s109, %s112
    %p118 = scmp.eq.s32.totalorder %s12, 0
    %p119 = por %p117, %p118
    %p120 = scmp.ne.s32.totalorder %s109, %s112
    %p121 = scmp.eq.s32.totalorder %s17, 1
    %p122 = por %p120, %p121
    %p123 = scmp.ne.s32.totalorder %s112, %s113
    %p124 = scmp.eq.s32.totalorder %s17, 0
    %p125 = por %p123, %p124
    %p126 = scmp.ne.s32.totalorder %s112, %s113
    %p127 = scmp.eq.s32.totalorder %s18, 1
    %p128 = por %p126, %p127
    %p130 = scmp.ne.s32.totalorder %s113, %s129
    %p131 = scmp.eq.s32.totalorder %s18, 0
    %p132 = por %p130, %p131
    %s134 = sadd.s32 %s133, 1
    %p137 = scmp.eq.s32.totalorder %s12, 1
    %p138 = scmp.ne.s32.totalorder %s133, %s135
    %p139 = scmp.eq.s32.totalorder %s12, 0
    %p140 = por %p138, %p139
    %p141 = scmp.ne.s32.totalorder %s133, %s135
    %p142 = scmp.eq.s32.totalorder %s17, 1
    %p143 = por %p141, %p142
    %p144 = scmp.ne.s32.totalorder %s135, %s136
    %p145 = scmp.eq.s32.totalorder %s17, 0
    %p146 = por %p144, %p145
    %p147 = scmp.ne.s32.totalorder %s135, %s136
    %p148 = scmp.eq.s32.totalorder %s18, 1
    %p149 = por %p147, %p148
    %p151 = scmp.ne.s32.totalorder %s136, %s150
    %p152 = scmp.eq.s32.totalorder %s18, 0
    %p153 = por %p151, %p152
    %s155 = sadd.s32 %s154, 1
    %p158 = scmp.eq.s32.totalorder %s12, 1
    %p159 = scmp.ne.s32.totalorder %s154, %s156
    %p160 = scmp.eq.s32.totalorder %s12, 0
    %p161 = por %p159, %p160
    %p162 = scmp.ne.s32.totalorder %s154, %s156
    %p163 = scmp.eq.s32.totalorder %s17, 1
    %p164 = por %p162, %p163
    %p165 = scmp.ne.s32.totalorder %s156, %s157
    %p166 = scmp.eq.s32.totalorder %s17, 0
    %p167 = por %p165, %p166
    %p168 = scmp.ne.s32.totalorder %s156, %s157
    %p169 = scmp.eq.s32.totalorder %s18, 1
    %p170 = por %p168, %p169
    %p172 = scmp.ne.s32.totalorder %s157, %s171
    %p173 = scmp.eq.s32.totalorder %s18, 0
    %p174 = por %p172, %p173
    %s175 = ssub.s32 %s19, %s31
    %p176 = scmp.eq.s32.totalorder %s175, 0
    %s178 = sadd.s32 %s177, 1
    %s179 = scalar_select %p176, %s177, %s178
    %p182 = pneg %p176
    %p183 = scmp.eq.s32.totalorder %s12, 1
    %p184 = por %p182, %p183
    %p185 = scmp.ne.s32.totalorder %s177, %s180
    %p186 = scmp.eq.s32.totalorder %s12, 0
    %p187 = por %p185, %p186
    %p188 = scmp.ne.s32.totalorder %s177, %s180
    %p189 = scmp.eq.s32.totalorder %s17, 1
    %p190 = por %p188, %p189
    %p191 = scmp.ne.s32.totalorder %s180, %s181
    %p192 = scmp.eq.s32.totalorder %s17, 0
    %p193 = por %p191, %p192
    %p194 = scmp.ne.s32.totalorder %s180, %s181
    %p195 = scmp.eq.s32.totalorder %s18, 1
    %p196 = por %p194, %p195
    %p198 = scmp.ne.s32.totalorder %s181, %s197
    %p199 = scmp.eq.s32.totalorder %s18, 0
    %p200 = por %p198, %p199
    %p201 = scmp.le.s32.totalorder 1, %s12
    %p202 = scmp.lt.s32.totalorder %s12, 3
    %p203 = pnand %p201, %p202
    %p204 = pneg %p203
    // Predicated region
    $region9: #{encoder_gpt2_forward.14} parent=5 // pred_check
      _
    $region10: #{encoder_gpt2_forward.14} parent=5 // pred_check_branch
      %206 = sbr.rel (%p203) target = $region12
    $region11: #{encoder_gpt2_forward.14} parent=5 // pred_region
      %s207 = ssub.s32 %s12, 1
      // Predicated region
      $region13: #{encoder_gpt2_forward.14} parent=11 // pred_check
        %p208 = pneg %p78
      $region14: #{encoder_gpt2_forward.14} parent=11 // pred_check_branch
        %210 = sbr.rel (%p208) target = $region16
      $region15: #{encoder_gpt2_forward.14} parent=11 // pred_region
        %s211 = smul.u32 8, %s22
        %p212 = scmp.lt.s32.totalorder %s211, 7
        %s213 = scalar_select %p212, %s211, 7
        %s214 = smul.addr %s213, 4
        %s215 = scalar_lea.vmem %s1, %s214
        %s216 = smul.u32 8, %s22
      $region16: #{encoder_gpt2_forward.14} parent=11 // pred_fallthru
        _
      // Predicated region
      $region17: #{encoder_gpt2_forward.14} parent=11 // pred_check
        %p217 = pneg %p99
      $region18: #{encoder_gpt2_forward.14} parent=11 // pred_check_branch
        %219 = sbr.rel (%p217) target = $region20
      $region19: #{encoder_gpt2_forward.14} parent=11 // pred_region
        _
      $region20: #{encoder_gpt2_forward.14} parent=11 // pred_fallthru
        _
      // Predicated region
      $region21: #{encoder_gpt2_forward.14} parent=11 // pred_check
        %p220 = pneg %p146
      $region22: #{encoder_gpt2_forward.14} parent=11 // pred_check_branch
        %222 = sbr.rel (%p220) target = $region24
      $region23: #{encoder_gpt2_forward.14} parent=11 // pred_region
        _
      $region24: #{encoder_gpt2_forward.14} parent=11 // pred_fallthru
        _
      // Predicated region
      $region25: #{encoder_gpt2_forward.14} parent=11 // pred_check
        %p223 = pneg %p167
      $region26: #{encoder_gpt2_forward.14} parent=11 // pred_check_branch
        %225 = sbr.rel (%p223) target = $region28
      $region27: #{encoder_gpt2_forward.14} parent=11 // pred_region
        _
      $region28: #{encoder_gpt2_forward.14} parent=11 // pred_fallthru
        _
    $region12: #{encoder_gpt2_forward.14} parent=5 // pred_fallthru
      _
    %p226 = scmp.lt.s32.totalorder %s12, 2
    // Predicated region
    $region29: #{encoder_gpt2_forward.14} parent=5 // pred_check
      %p227 = pneg %p226
    $region30: #{encoder_gpt2_forward.14} parent=5 // pred_check_branch
      %229 = sbr.rel (%p227) target = $region32
    $region31: #{encoder_gpt2_forward.14} parent=5 // pred_region
      // Predicated region
      $region33: #{encoder_gpt2_forward.14} parent=31 // pred_check
        %p230 = pneg %p46
      $region34: #{encoder_gpt2_forward.14} parent=31 // pred_check_branch
        %232 = sbr.rel (%p230) target = $region36
      $region35: #{encoder_gpt2_forward.14} parent=31 // pred_region
        %p233 = scmp.lt.s32.totalorder %s19, 1
        %s234 = scalar_select %p233, %s19, 1
        %p235 = scmp.lt.s32.totalorder %s20, 0
        %s236 = scalar_select %p235, %s20, 0
        %s237 = sadd.s32 %s236, %s234
        %s238 = smul.addr %s237, 4
        %s239 = scalar_lea.vmem %s0, %s238
      $region36: #{encoder_gpt2_forward.14} parent=31 // pred_fallthru
        _
      // Predicated region
      $region37: #{encoder_gpt2_forward.14} parent=31 // pred_check
        %p240 = pneg %p119
      $region38: #{encoder_gpt2_forward.14} parent=31 // pred_check_branch
        %242 = sbr.rel (%p240) target = $region40
      $region39: #{encoder_gpt2_forward.14} parent=31 // pred_region
        %p243 = scmp.lt.s32.totalorder %s19, 1
        %s244 = scalar_select %p243, %s19, 1
        %s245 = smul.addr %s244, 8
        %s246 = scalar_lea.vmem %s3, %s245
      $region40: #{encoder_gpt2_forward.14} parent=31 // pred_fallthru
        _
    $region32: #{encoder_gpt2_forward.14} parent=5 // pred_fallthru
      _
    %p247 = scmp.le.s32.totalorder 1, %s12
    %p248 = scmp.lt.s32.totalorder %s12, 3
    %p249 = pnand %p247, %p248
    %p250 = pneg %p249
    // Predicated region
    $region41: #{encoder_gpt2_forward.14} parent=5 // pred_check
      _
    $region42: #{encoder_gpt2_forward.14} parent=5 // pred_check_branch
      %252 = sbr.rel (%p249) target = $region44
    $region43: #{encoder_gpt2_forward.14} parent=5 // pred_region
      %s253 = ssub.s32 %s12, 1
      %p254 = scmp.lt.s32.totalorder %s21, 1
      %s255 = scalar_select %p254, %s21, 1
      %p256 = scmp.lt.s32.totalorder %s22, 0
      %s257 = scalar_select %p256, %s22, 0
      %s258 = sadd.s32 %s257, %s255
      %s259 = smul.addr %s258, 4
      %s260 = scalar_lea.vmem %s0, %s259
      %p261 = pneg %p52
      %p262 = pneg %p49
      %s263 = smul.u32 8, %s22
      %p264 = scmp.lt.s32.totalorder %s263, 7
      %s265 = scalar_select %p264, %s263, 7
      %s266 = smul.addr %s265, 4
      %s267 = scalar_lea.vmem %s1, %s266
      %p268 = pneg %p78
      %p269 = pneg %p75
      %p270 = pneg %p99
      %p271 = pneg %p96
      %p272 = scmp.lt.s32.totalorder %s21, 1
      %s273 = scalar_select %p272, %s21, 1
      %s274 = smul.addr %s273, 8
      %s275 = scalar_lea.vmem %s3, %s274
      %p276 = pneg %p125
      %p277 = pneg %p122
      %p278 = pneg %p146
      %p279 = pneg %p143
      %p280 = pneg %p167
      %p281 = pneg %p164
      %p282 = pneg %p193
      %p283 = pneg %p190
      %p284 = scmp.lt.s32.totalorder %s21, 1
      %s285 = scalar_select %p284, %s21, 1
      %s286 = smul.addr %s285, 8
      %s287 = scalar_lea.vmem %s6, %s286
      %p288 = scmp.lt.s32.totalorder %s21, 1
      %s289 = scalar_select %p288, %s21, 1
      %p290 = scmp.lt.s32.totalorder %s22, 0
      %s291 = scalar_select %p290, %s22, 0
      %s292 = sadd.s32 %s291, %s289
      %s293 = smul.addr %s292, 4
      %s294 = scalar_lea.vmem %s0, %s293
      %s295 = smul.u32 8, %s22
      %p296 = scmp.lt.s32.totalorder %s295, 7
      %s297 = scalar_select %p296, %s295, 7
      %s298 = smul.addr %s297, 4
      %s299 = scalar_lea.vmem %s1, %s298
      %s300 = smul.u32 8, %s22
      %p301 = scmp.lt.s32.totalorder %s21, 1
      %s302 = scalar_select %p301, %s21, 1
      %s303 = smul.addr %s302, 8
      %s304 = scalar_lea.vmem %s3, %s303
      %p305 = scmp.lt.s32.totalorder %s21, 1
      %s306 = scalar_select %p305, %s21, 1
      %s307 = smul.addr %s306, 8
      %s308 = scalar_lea.vmem %s6, %s307
      %p310 = scmp.eq.s32.totalorder %s22, 0
      // Predicated region
      $region45: #{encoder_gpt2_forward.14} parent=43 // pred_check
        %p311 = pneg %p310
      $region46: #{encoder_gpt2_forward.14} parent=43 // pred_check_branch
        %313 = sbr.rel (%p311) target = $region48
      $region47: #{encoder_gpt2_forward.14} parent=43 // pred_region
        %vm314 = vcmask 261120
        %315 = vst.msk [vmem:[#allocation2] sm:$0xff] %vm314, 0.0
      $region48: #{encoder_gpt2_forward.14} parent=43 // pred_fallthru
        _
      %v316 = vld [vmem:[#allocation2] sm:$0xff]
      %v317 = vld [vmem:[%s294] sm:$0xf]
      %v318 = vld [vmem:[%s299] sm:$0xf]
      %v319 = vld [vmem:[%s299 + $0x4] sm:$0xf]
      %v320 = vld [vmem:[%s299 + $0x8] sm:$0xf]
      %v321 = vld [vmem:[%s299 + $0xc] sm:$0xf]
      %v322 = vld [vmem:[%s299 + $0x10] sm:$0xf]
      %v323 = vld [vmem:[%s299 + $0x14] sm:$0xf]
      %v324 = vld [vmem:[%s299 + $0x18] sm:$0xf]
      %v325 = vld [vmem:[%s299 + $0x1c] sm:$0xf]
      %v334 = vunpack.c.l.b16 %v318
      %v335 = vunpack.c.l.b16 %v319
      %v336 = vunpack.c.l.b16 %v320
      %v337 = vunpack.c.l.b16 %v321
      %v338 = vunpack.c.l.b16 %v322
      %v339 = vunpack.c.l.b16 %v323
      %v340 = vunpack.c.l.b16 %v324
      %v341 = vunpack.c.l.b16 %v325
      %v342 = vpack.c.b16 %v335, %v334
      %v343 = vpack.c.b16 %v337, %v336
      %v344 = vpack.c.b16 %v339, %v338
      %v345 = vpack.c.b16 %v341, %v340
      %vm350 = vcmask 523264
      %v352 = vsel %vm350, %v317, 0
      %354 = vmatprep.subr.bf16.mxu0 0
      %355 = vmatpush1.bf16.msra.mxu0 %v342
      %356 = vmatprep.subr.bf16.mxu0 0
      %357 = vmatpush1.bf16.msra.mxu0 %v343
      %358 = vmatprep.subr.bf16.mxu0 0
      %359 = vmatpush1.bf16.msra.mxu0 %v344
      %360 = vmatprep.subr.bf16.mxu0 0
      %361 = vmatpush1.bf16.msra.mxu0 %v345
      %362 = vmatprep.subr.bf16.mxu0 0
      %363 = vmatpush1.bf16.msra.mxu0 0
      %364 = vmatprep.subr.bf16.mxu0 0
      %365 = vmatpush1.bf16.msra.mxu0 0
      %366 = vmatprep.subr.bf16.mxu0 0
      %367 = vmatpush1.bf16.msra.mxu0 0
      %368 = vmatprep.subr.bf16.mxu0 0
      %369 = vmatpush1.bf16.msra.mxu0 0
      %370 = vmatprep.subr.bf16.mxu0 0
      %371 = vmatpush1.bf16.msra.mxu0 0
      %372 = vmatprep.subr.bf16.mxu0 0
      %373 = vmatpush1.bf16.msra.mxu0 0
      %374 = vmatprep.subr.bf16.mxu0 0
      %375 = vmatpush1.bf16.msra.mxu0 0
      %376 = vmatprep.subr.bf16.mxu0 0
      %377 = vmatpush1.bf16.msra.mxu0 0
      %378 = vmatprep.subr.bf16.mxu0 0
      %379 = vmatpush1.bf16.msra.mxu0 0
      %380 = vmatprep.subr.bf16.mxu0 0
      %381 = vmatpush1.bf16.msra.mxu0 0
      %382 = vmatprep.subr.bf16.mxu0 0
      %383 = vmatpush1.bf16.msra.mxu0 0
      %384 = vmatprep.subr.bf16.mxu0 0
      %385 = vmatpush1.bf16.msra.mxu0 0
      %386 = vmatprep.mubr.bf16.mxu0 0
      %387 = vmatmul.mubr.bf16.gmra.mrb[0].mxu0 %v352
      %v388 = vpop.f32.mrb[0].mxu0
      %v389 = vadd.f32 0.0, %v388
      %v390 = vpop.f32.mrb[0].mxu0
      %v391 = vpop.f32.mrb[0].mxu0
      %v392 = vpop.f32.mrb[0].mxu0
      %393 = vdwg.mxu0
      %v394 = vadd.f32 %v316, %v389
      %vm395 = vcmask 261120
      %396 = vst.msk [vmem:[#allocation2] sm:$0xff] %vm395, %v394
      // Predicated region
      $region49: #{encoder_gpt2_forward.14} parent=43 // pred_check
        %p397 = pneg %p310
      $region50: #{encoder_gpt2_forward.14} parent=43 // pred_check_branch
        %399 = sbr.rel (%p397) target = $region52
      $region51: #{encoder_gpt2_forward.14} parent=43 // pred_region
        %v400 = vld [vmem:[#allocation2] sm:$0xff]
        %v401 = vld [vmem:[%s2] sm:$0x1]
        %v403 = vlaneseq
        %v404 = vshrl.u32 %v403, 7
        %v405 = vsub.s32 0, %v404
        %v406 = vrot.slane %v401, %v405
        %v408 = vadd.f32 %v400, %v406
        %v409 = vld [vmem:[%s304] sm:$0xff]
        %v410 = vadd.f32 %v408, %v409
        %v411 = vsel %vm395, %v410, 0.0
        %412 = vadd.xlane.f32.xlu0 %v411
        %v413 = vpop.xlane.xlu0 %412
        %v414 = vrcp.pop 32.0
        %v415 = vmul.f32 %v413, %v414
        %v416 = vsub.f32 %v410, %v415
        %v417 = vmul.f32 %v416, %v416
        %v418 = vsel %vm395, %v417, 0.0
        %419 = vadd.xlane.f32.xlu0 %v418
        %v420 = vpop.xlane.xlu0 %419
        %v421 = vmul.f32 %v420, %v414
        %v422 = vadd.f32 %v421, 1e-05
        %v423 = vrsqrt.pop %v422
        %v424 = vmul.f32 %v416, %v423
        %v425 = vld [vmem:[%s4] sm:$0x1]
        %v427 = vlaneseq
        %v428 = vshrl.u32 %v427, 7
        %v429 = vsub.s32 0, %v428
        %v430 = vrot.slane %v425, %v429
        %v432 = vmul.f32 %v424, %v430
        %v433 = vld [vmem:[%s5] sm:$0x1]
        %v435 = vlaneseq
        %v436 = vshrl.u32 %v435, 7
        %v437 = vsub.s32 0, %v436
        %v438 = vrot.slane %v433, %v437
        %v440 = vadd.f32 %v432, %v438
        %441 = vst.msk [vmem:[%s308] sm:$0xff] %vm395, %v440
      $region52: #{encoder_gpt2_forward.14} parent=43 // pred_fallthru
        _
      %p442 = scmp.lt.s32.totalorder %s21, 1
      %s443 = scalar_select %p442, %s21, 1
      %s444 = smul.addr %s443, 8
      %s445 = scalar_lea.vmem %s6, %s444
      // Predicated region
      $region53: #{encoder_gpt2_forward.14} parent=43 // pred_check
        %p446 = pneg %p190
      $region54: #{encoder_gpt2_forward.14} parent=43 // pred_check_branch
        %448 = sbr.rel (%p446) target = $region56
      $region55: #{encoder_gpt2_forward.14} parent=43 // pred_region
        _
      $region56: #{encoder_gpt2_forward.14} parent=43 // pred_fallthru
        _
    $region44: #{encoder_gpt2_forward.14} parent=5 // pred_fallthru
      _
    %p449 = scmp.le.s32.totalorder 2, %s12
    // Predicated region
    $region57: #{encoder_gpt2_forward.14} parent=5 // pred_check
      %p450 = pneg %p449
    $region58: #{encoder_gpt2_forward.14} parent=5 // pred_check_branch
      %452 = sbr.rel (%p450) target = $region60
    $region59: #{encoder_gpt2_forward.14} parent=5 // pred_region
      %s453 = ssub.s32 %s12, 2
      // Predicated region
      $region61: #{encoder_gpt2_forward.14} parent=59 // pred_check
        %p454 = pneg %p196
      $region62: #{encoder_gpt2_forward.14} parent=59 // pred_check_branch
        %456 = sbr.rel (%p454) target = $region64
      $region63: #{encoder_gpt2_forward.14} parent=59 // pred_region
        %p457 = scmp.lt.s32.totalorder %s23, 1
        %s458 = scalar_select %p457, %s23, 1
        %s459 = smul.addr %s458, 8
        %s460 = scalar_lea.vmem %s6, %s459
      $region64: #{encoder_gpt2_forward.14} parent=59 // pred_fallthru
        _
    $region60: #{encoder_gpt2_forward.14} parent=5 // pred_fallthru
      _
  $region6: #{encoder_gpt2_forward.14} parent=0 // loop_footer
    %s16 = sadd.s32 1, %s12
  $region7: #{encoder_gpt2_forward.14} parent=0 // loop_footer_branch
    %11 = sbr.rel target = $region3
  $region8: #{encoder_gpt2_forward.14} parent=0 // loop_exit
    _

// kernel: encoder_gpt2_forward.16
$region0: #{encoder_gpt2_forward.16}
  #allocation0 [shape = 'u32[]', space=smem, size = 0x4, offset = 0x4, fixed_abs, tag = 'smem constant byte address 0x4 - core index']
  #allocation1 [shape = 'u32[144,128]{1,0:T(1,128)}', space=vmem, size = 0x12000, scoped, tag = 'internal scratch']
  %s0 = inlined_call_operand.vmem [shape: bf16[3,2,8,32], index: 0, kind: input, shape index: {}, may-alias: {0,1,2}]
  %s1 = inlined_call_operand.vmem [shape: bf16[3,2,8,32], index: 1, kind: input, shape index: {}, may-alias: {0,1,2}]
  %s2 = inlined_call_operand.vmem [shape: bf16[3,2,8,32], index: 2, kind: input, shape index: {}, may-alias: {0,1,2}]
  %s3 = inlined_call_operand.vmem [shape: f32[1,1,8,8], index: 3, kind: input, shape index: {}]
  %s4 = inlined_call_operand.vmem [shape: bf16[2,8,32], index: 4, kind: output, shape index: {0}]
  %s5 = inlined_call_operand.hbm [shape: bf16[2,4,8,8], index: 5, kind: output, shape index: {1}]
  %6 = xla_tuple %s4, %s5
  %s7 = sld [smem:[#allocation0]]
  $region57: #{encoder_gpt2_forward.16} parent=0
    _
  %s9 = ssub.s32 1, %s7
  %s10 = scalar_select 0, %s9, %s7
  $region1: #{encoder_gpt2_forward.16} parent=0
    #allocation2 [shape = 'u8[16384]{0}', space=vmem, size = 0x4000, scoped, tag = 'output window, operand 1']
    #allocation3 [shape = 's32[2]{0}', space=sflag, size = 0x8, scoped, tag = 'scoped memory for encoder_gpt2_forward.16']
    %11 = vsyncpa [#allocation3], 0
    %s12 = scalar_lea.sflag [#allocation3], 1
    %13 = vsyncpa %s12, 0
    loop: start=0, step=1, limit=4
    $region2: #{encoder_gpt2_forward.16} parent=1 // loop_pre_header
      _
    $region3: #{encoder_gpt2_forward.16} parent=1 // loop_header
      %s15 = sphi 0, %s19
      %p16 = scmp.ge.s32.totalorder %s15, 4
      %s22 = sphi 0, %s41
      %s23 = sphi 0, %s37
      %s24 = sphi 0, %s33
      %s25 = sphi 0, %s22
      %s26 = sphi 0, %s23
      %s27 = sphi 0, %s24
      %s28 = sphi 0, %s25
      %s29 = sphi 0, %s26
      %s30 = sphi 0, %s27
      %s48 = sphi 0, %s50
      %s51 = sphi 0, %s48
      %s52 = sphi 0, %s51
      %s68 = sphi 0, %s52
      %s76 = sphi 0, %s78
      %s79 = sphi 0, %s76
      %s80 = sphi 0, %s79
      %s96 = sphi 0, %s80
      %s104 = sphi 0, %s106
      %s107 = sphi 0, %s104
      %s108 = sphi 0, %s107
      %s124 = sphi 0, %s108
      %s130 = sphi 0, %s132
      %s133 = sphi 0, %s130
      %s134 = sphi 0, %s133
      %s150 = sphi 0, %s134
      %s160 = sphi 0, %s162
      %s163 = sphi 0, %s160
      %s164 = sphi 0, %s163
      %s180 = sphi 0, %s164
      %s190 = sphi 0, %s192
      %s193 = sphi 0, %s190
      %s194 = sphi 0, %s193
      %s210 = sphi 0, %s194
    $region4: #{encoder_gpt2_forward.16} parent=1 // loop_header_branch
      %18 = sbr.rel (%p16) target = $region8
    $region5: #{encoder_gpt2_forward.16} parent=1 // loop_body
      %s20 = ssub.s32 %s15, 1
      %s21 = ssub.s32 %s15, 2
      %s31 = sadd.s32 1, %s24
      %p32 = scmp.ge.s32.totalorder %s31, 1
      %s33 = scalar_select %p32, 0, %s31
      %s34 = sadd.s32 1, %s23
      %s35 = scalar_select %p32, %s34, %s23
      %p36 = scmp.ge.s32.totalorder %s35, 1
      %s37 = scalar_select %p36, 0, %s35
      %s38 = sadd.s32 1, %s22
      %s39 = scalar_select %p36, %s38, %s22
      %p40 = scmp.ge.s32.totalorder %s39, 2
      %s41 = scalar_select %p40, 0, %s39
      %s42 = ssub.s32 %s22, %s41
      %s43 = ssub.s32 %s24, %s33
      %s44 = sor.u32 %s42, %s43
      %s45 = ssub.s32 %s23, %s37
      %s46 = sor.u32 %s44, %s45
      %p47 = scmp.eq.s32.totalorder %s46, 0
      %s49 = sadd.s32 %s48, 1
      %s50 = scalar_select %p47, %s48, %s49
      %p53 = pneg %p47
      %p54 = scmp.eq.s32.totalorder %s15, 1
      %p55 = por %p53, %p54
      %p56 = scmp.ne.s32.totalorder %s48, %s51
      %p57 = scmp.eq.s32.totalorder %s15, 0
      %p58 = por %p56, %p57
      %p59 = scmp.ne.s32.totalorder %s48, %s51
      %p60 = scmp.eq.s32.totalorder %s20, 1
      %p61 = por %p59, %p60
      %p62 = scmp.ne.s32.totalorder %s51, %s52
      %p63 = scmp.eq.s32.totalorder %s20, 0
      %p64 = por %p62, %p63
      %p65 = scmp.ne.s32.totalorder %s51, %s52
      %p66 = scmp.eq.s32.totalorder %s21, 1
      %p67 = por %p65, %p66
      %p69 = scmp.ne.s32.totalorder %s52, %s68
      %p70 = scmp.eq.s32.totalorder %s21, 0
      %p71 = por %p69, %p70
      %s72 = ssub.s32 %s22, %s41
      %s73 = ssub.s32 %s23, %s37
      %s74 = sor.u32 %s72, %s73
      %p75 = scmp.eq.s32.totalorder %s74, 0
      %s77 = sadd.s32 %s76, 1
      %s78 = scalar_select %p75, %s76, %s77
      %p81 = pneg %p75
      %p82 = scmp.eq.s32.totalorder %s15, 1
      %p83 = por %p81, %p82
      %p84 = scmp.ne.s32.totalorder %s76, %s79
      %p85 = scmp.eq.s32.totalorder %s15, 0
      %p86 = por %p84, %p85
      %p87 = scmp.ne.s32.totalorder %s76, %s79
      %p88 = scmp.eq.s32.totalorder %s20, 1
      %p89 = por %p87, %p88
      %p90 = scmp.ne.s32.totalorder %s79, %s80
      %p91 = scmp.eq.s32.totalorder %s20, 0
      %p92 = por %p90, %p91
      %p93 = scmp.ne.s32.totalorder %s79, %s80
      %p94 = scmp.eq.s32.totalorder %s21, 1
      %p95 = por %p93, %p94
      %p97 = scmp.ne.s32.totalorder %s80, %s96
      %p98 = scmp.eq.s32.totalorder %s21, 0
      %p99 = por %p97, %p98
      %s100 = ssub.s32 %s22, %s41
      %s101 = ssub.s32 %s23, %s37
      %s102 = sor.u32 %s100, %s101
      %p103 = scmp.eq.s32.totalorder %s102, 0
      %s105 = sadd.s32 %s104, 1
      %s106 = scalar_select %p103, %s104, %s105
      %p109 = pneg %p103
      %p110 = scmp.eq.s32.totalorder %s15, 1
      %p111 = por %p109, %p110
      %p112 = scmp.ne.s32.totalorder %s104, %s107
      %p113 = scmp.eq.s32.totalorder %s15, 0
      %p114 = por %p112, %p113
      %p115 = scmp.ne.s32.totalorder %s104, %s107
      %p116 = scmp.eq.s32.totalorder %s20, 1
      %p117 = por %p115, %p116
      %p118 = scmp.ne.s32.totalorder %s107, %s108
      %p119 = scmp.eq.s32.totalorder %s20, 0
      %p120 = por %p118, %p119
      %p121 = scmp.ne.s32.totalorder %s107, %s108
      %p122 = scmp.eq.s32.totalorder %s21, 1
      %p123 = por %p121, %p122
      %p125 = scmp.ne.s32.totalorder %s108, %s124
      %p126 = scmp.eq.s32.totalorder %s21, 0
      %p127 = por %p125, %p126
      %s128 = ssub.s32 %s24, %s33
      %p129 = scmp.eq.s32.totalorder %s128, 0
      %s131 = sadd.s32 %s130, 1
      %s132 = scalar_select %p129, %s130, %s131
      %p135 = pneg %p129
      %p136 = scmp.eq.s32.totalorder %s15, 1
      %p137 = por %p135, %p136
      %p138 = scmp.ne.s32.totalorder %s130, %s133
      %p139 = scmp.eq.s32.totalorder %s15, 0
      %p140 = por %p138, %p139
      %p141 = scmp.ne.s32.totalorder %s130, %s133
      %p142 = scmp.eq.s32.totalorder %s20, 1
      %p143 = por %p141, %p142
      %p144 = scmp.ne.s32.totalorder %s133, %s134
      %p145 = scmp.eq.s32.totalorder %s20, 0
      %p146 = por %p144, %p145
      %p147 = scmp.ne.s32.totalorder %s133, %s134
      %p148 = scmp.eq.s32.totalorder %s21, 1
      %p149 = por %p147, %p148
      %p151 = scmp.ne.s32.totalorder %s134, %s150
      %p152 = scmp.eq.s32.totalorder %s21, 0
      %p153 = por %p151, %p152
      %s154 = ssub.s32 %s22, %s41
      %s155 = ssub.s32 %s24, %s33
      %s156 = sor.u32 %s154, %s155
      %s157 = ssub.s32 %s23, %s37
      %s158 = sor.u32 %s156, %s157
      %p159 = scmp.eq.s32.totalorder %s158, 0
      %s161 = sadd.s32 %s160, 1
      %s162 = scalar_select %p159, %s160, %s161
      %p165 = pneg %p159
      %p166 = scmp.eq.s32.totalorder %s15, 1
      %p167 = por %p165, %p166
      %p168 = scmp.ne.s32.totalorder %s160, %s163
      %p169 = scmp.eq.s32.totalorder %s15, 0
      %p170 = por %p168, %p169
      %p171 = scmp.ne.s32.totalorder %s160, %s163
      %p172 = scmp.eq.s32.totalorder %s20, 1
      %p173 = por %p171, %p172
      %p174 = scmp.ne.s32.totalorder %s163, %s164
      %p175 = scmp.eq.s32.totalorder %s20, 0
      %p176 = por %p174, %p175
      %p177 = scmp.ne.s32.totalorder %s163, %s164
      %p178 = scmp.eq.s32.totalorder %s21, 1
      %p179 = por %p177, %p178
      %p181 = scmp.ne.s32.totalorder %s164, %s180
      %p182 = scmp.eq.s32.totalorder %s21, 0
      %p183 = por %p181, %p182
      %s184 = ssub.s32 %s22, %s41
      %s185 = ssub.s32 %s23, %s37
      %s186 = sor.u32 %s184, %s185
      %s187 = ssub.s32 %s24, %s33
      %s188 = sor.u32 %s186, %s187
      %p189 = scmp.eq.s32.totalorder %s188, 0
      %s191 = sadd.s32 %s190, 1
      %s192 = scalar_select %p189, %s190, %s191
      %p195 = pneg %p189
      %p196 = scmp.eq.s32.totalorder %s15, 1
      %p197 = por %p195, %p196
      %p198 = scmp.ne.s32.totalorder %s190, %s193
      %p199 = scmp.eq.s32.totalorder %s15, 0
      %p200 = por %p198, %p199
      %p201 = scmp.ne.s32.totalorder %s190, %s193
      %p202 = scmp.eq.s32.totalorder %s20, 1
      %p203 = por %p201, %p202
      %p204 = scmp.ne.s32.totalorder %s193, %s194
      %p205 = scmp.eq.s32.totalorder %s20, 0
      %p206 = por %p204, %p205
      %p207 = scmp.ne.s32.totalorder %s193, %s194
      %p208 = scmp.eq.s32.totalorder %s21, 1
      %p209 = por %p207, %p208
      %p211 = scmp.ne.s32.totalorder %s194, %s210
      %p212 = scmp.eq.s32.totalorder %s21, 0
      %p213 = por %p211, %p212
      %p214 = scmp.le.s32.totalorder 1, %s15
      %p215 = scmp.lt.s32.totalorder %s15, 3
      %p216 = pnand %p214, %p215
      %p217 = pneg %p216
      // Predicated region
      $region9: #{encoder_gpt2_forward.16} parent=5 // pred_check
        _
      $region10: #{encoder_gpt2_forward.16} parent=5 // pred_check_branch
        %219 = sbr.rel (%p216) target = $region12
      $region11: #{encoder_gpt2_forward.16} parent=5 // pred_region
        %s220 = ssub.s32 %s15, 1
        // Predicated region
        $region13: #{encoder_gpt2_forward.16} parent=11 // pred_check
          %p221 = pneg %p146
        $region14: #{encoder_gpt2_forward.16} parent=11 // pred_check_branch
          %223 = sbr.rel (%p221) target = $region16
        $region15: #{encoder_gpt2_forward.16} parent=11 // pred_region
          %p224 = scmp.lt.s32.totalorder %s27, 0
          %s225 = scalar_select %p224, %s27, 0
          %s226 = smul.addr %s225, 8
          %s227 = scalar_lea.vmem %s3, %s226
        $region16: #{encoder_gpt2_forward.16} parent=11 // pred_fallthru
          _
      $region12: #{encoder_gpt2_forward.16} parent=5 // pred_fallthru
        _
      %p228 = scmp.lt.s32.totalorder %s15, 2
      // Predicated region
      $region17: #{encoder_gpt2_forward.16} parent=5 // pred_check
        %p229 = pneg %p228
      $region18: #{encoder_gpt2_forward.16} parent=5 // pred_check_branch
        %231 = sbr.rel (%p229) target = $region20
      $region19: #{encoder_gpt2_forward.16} parent=5 // pred_region
        // Predicated region
        $region21: #{encoder_gpt2_forward.16} parent=19 // pred_check
          %p232 = pneg %p58
        $region22: #{encoder_gpt2_forward.16} parent=19 // pred_check_branch
          %234 = sbr.rel (%p232) target = $region24
        $region23: #{encoder_gpt2_forward.16} parent=19 // pred_region
          %p235 = scmp.lt.s32.totalorder %s22, 1
          %s236 = scalar_select %p235, %s22, 1
          %p237 = scmp.lt.s32.totalorder %s24, 0
          %s238 = scalar_select %p237, %s24, 0
          %p239 = scmp.lt.s32.totalorder %s23, 0
          %s240 = scalar_select %p239, %s23, 0
          %s241 = sadd.s32 %s240, %s238
          %s242 = sadd.s32 %s241, %s236
          %s243 = smul.addr %s242, 4
          %s244 = scalar_lea.vmem %s0, %s243
        $region24: #{encoder_gpt2_forward.16} parent=19 // pred_fallthru
          _
        // Predicated region
        $region25: #{encoder_gpt2_forward.16} parent=19 // pred_check
          %p245 = pneg %p86
        $region26: #{encoder_gpt2_forward.16} parent=19 // pred_check_branch
          %247 = sbr.rel (%p245) target = $region28
        $region27: #{encoder_gpt2_forward.16} parent=19 // pred_region
          %p248 = scmp.lt.s32.totalorder %s22, 1
          %s249 = scalar_select %p248, %s22, 1
          %p250 = scmp.lt.s32.totalorder %s23, 0
          %s251 = scalar_select %p250, %s23, 0
          %s252 = sadd.s32 %s251, %s249
          %s253 = sadd.s32 %s252, 2
          %s254 = smul.addr %s253, 4
          %s255 = scalar_lea.vmem %s1, %s254
        $region28: #{encoder_gpt2_forward.16} parent=19 // pred_fallthru
          _
        // Predicated region
        $region29: #{encoder_gpt2_forward.16} parent=19 // pred_check
          %p256 = pneg %p114
        $region30: #{encoder_gpt2_forward.16} parent=19 // pred_check_branch
          %258 = sbr.rel (%p256) target = $region32
        $region31: #{encoder_gpt2_forward.16} parent=19 // pred_region
          %p259 = scmp.lt.s32.totalorder %s22, 1
          %s260 = scalar_select %p259, %s22, 1
          %p261 = scmp.lt.s32.totalorder %s23, 0
          %s262 = scalar_select %p261, %s23, 0
          %s263 = sadd.s32 %s262, %s260
          %s264 = sadd.s32 %s263, 4
          %s265 = smul.addr %s264, 4
          %s266 = scalar_lea.vmem %s2, %s265
        $region32: #{encoder_gpt2_forward.16} parent=19 // pred_fallthru
          _
      $region20: #{encoder_gpt2_forward.16} parent=5 // pred_fallthru
        _
      %p267 = scmp.le.s32.totalorder 1, %s15
      %p268 = scmp.lt.s32.totalorder %s15, 3
      %p269 = pnand %p267, %p268
      %p270 = pneg %p269
      // Predicated region
      $region33: #{encoder_gpt2_forward.16} parent=5 // pred_check
        _
      $region34: #{encoder_gpt2_forward.16} parent=5 // pred_check_branch
        %272 = sbr.rel (%p269) target = $region36
      $region35: #{encoder_gpt2_forward.16} parent=5 // pred_region
        %s273 = ssub.s32 %s15, 1
        %p274 = scmp.lt.s32.totalorder %s25, 1
        %s275 = scalar_select %p274, %s25, 1
        %p276 = scmp.lt.s32.totalorder %s27, 0
        %s277 = scalar_select %p276, %s27, 0
        %p278 = scmp.lt.s32.totalorder %s26, 0
        %s279 = scalar_select %p278, %s26, 0
        %s280 = sadd.s32 %s279, %s277
        %s281 = sadd.s32 %s280, %s275
        %s282 = smul.addr %s281, 4
        %s283 = scalar_lea.vmem %s0, %s282
        %p284 = pneg %p64
        %p285 = pneg %p61
        %p286 = scmp.lt.s32.totalorder %s25, 1
        %s287 = scalar_select %p286, %s25, 1
        %p288 = scmp.lt.s32.totalorder %s26, 0
        %s289 = scalar_select %p288, %s26, 0
        %s290 = sadd.s32 %s289, %s287
        %s291 = sadd.s32 %s290, 2
        %s292 = smul.addr %s291, 4
        %s293 = scalar_lea.vmem %s1, %s292
        %p294 = pneg %p92
        %p295 = pneg %p89
        %p296 = scmp.lt.s32.totalorder %s25, 1
        %s297 = scalar_select %p296, %s25, 1
        %p298 = scmp.lt.s32.totalorder %s26, 0
        %s299 = scalar_select %p298, %s26, 0
        %s300 = sadd.s32 %s299, %s297
        %s301 = sadd.s32 %s300, 4
        %s302 = smul.addr %s301, 4
        %s303 = scalar_lea.vmem %s2, %s302
        %p304 = pneg %p120
        %p305 = pneg %p117
        %p306 = scmp.lt.s32.totalorder %s27, 0
        %s307 = scalar_select %p306, %s27, 0
        %s308 = smul.addr %s307, 8
        %s309 = scalar_lea.vmem %s3, %s308
        %p310 = pneg %p146
        %p311 = pneg %p143
        %p312 = pneg %p176
        %p313 = pneg %p173
        %p314 = scmp.lt.s32.totalorder %s25, 1
        %s315 = scalar_select %p314, %s25, 1
        %p316 = scmp.lt.s32.totalorder %s27, 0
        %s317 = scalar_select %p316, %s27, 0
        %p318 = scmp.lt.s32.totalorder %s26, 0
        %s319 = scalar_select %p318, %s26, 0
        %s320 = sadd.s32 %s319, %s317
        %s321 = sadd.s32 %s320, %s315
        %s322 = smul.addr %s321, 4
        %s323 = scalar_lea.vmem %s4, %s322
        %p324 = pneg %p206
        %p325 = pneg %p203
        %s326 = sand.u32 %s193, 1
        %s327 = scalar_lea.sflag [#allocation3], %s326
        %s328 = sand.u32 %s193, 1
        %s329 = smul.addr %s328, 16
        %s330 = scalar_lea.vmem [#allocation2], %s329
        %p331 = scmp.lt.s32.totalorder %s25, 1
        %s332 = scalar_select %p331, %s25, 1
        %p333 = scmp.lt.s32.totalorder %s27, 0
        %s334 = scalar_select %p333, %s27, 0
        %p335 = scmp.lt.s32.totalorder %s26, 0
        %s336 = scalar_select %p335, %s26, 0
        %s337 = sadd.s32 %s336, %s334
        %s338 = sadd.s32 %s337, %s332
        %s339 = smul.addr %s338, 4
        %s340 = scalar_lea.vmem %s0, %s339
        %p341 = scmp.lt.s32.totalorder %s25, 1
        %s342 = scalar_select %p341, %s25, 1
        %p343 = scmp.lt.s32.totalorder %s26, 0
        %s344 = scalar_select %p343, %s26, 0
        %s345 = sadd.s32 %s344, %s342
        %s346 = sadd.s32 %s345, 2
        %s347 = smul.addr %s346, 4
        %s348 = scalar_lea.vmem %s1, %s347
        %p349 = scmp.lt.s32.totalorder %s25, 1
        %s350 = scalar_select %p349, %s25, 1
        %p351 = scmp.lt.s32.totalorder %s26, 0
        %s352 = scalar_select %p351, %s26, 0
        %s353 = sadd.s32 %s352, %s350
        %s354 = sadd.s32 %s353, 4
        %s355 = smul.addr %s354, 4
        %s356 = scalar_lea.vmem %s2, %s355
        %p357 = scmp.lt.s32.totalorder %s27, 0
        %s358 = scalar_select %p357, %s27, 0
        %s359 = smul.addr %s358, 8
        %s360 = scalar_lea.vmem %s3, %s359
        %p361 = scmp.lt.s32.totalorder %s25, 1
        %s362 = scalar_select %p361, %s25, 1
        %p363 = scmp.lt.s32.totalorder %s27, 0
        %s364 = scalar_select %p363, %s27, 0
        %p365 = scmp.lt.s32.totalorder %s26, 0
        %s366 = scalar_select %p365, %s26, 0
        %s367 = sadd.s32 %s366, %s364
        %s368 = sadd.s32 %s367, %s362
        %s369 = smul.addr %s368, 4
        %s370 = scalar_lea.vmem %s4, %s369
        %s371 = smul.u32 4, %s26
        %v373 = vld [vmem:[%s340] sm:$0xf]
        %v374 = vld [vmem:[%s348] sm:$0xf]
        %v375 = vld [vmem:[%s356] sm:$0xf]
        %v376 = vld [vmem:[%s360] sm:$0xff]
        %vm377 = vcmask 64512
        %v379 = vsel %vm377, %v373, 0
        %v382 = vsel %vm377, %v374, 0
        %384 = vmatprep.subr.bf16.mxu0 0
        %385 = vmatpush1.bf16.xpose.msra.mxu0 %v382
        %386 = vmatprep.subr.bf16.mxu0 0
        %387 = vmatpush1.bf16.xpose.msra.mxu0 0
        %388 = vmatprep.subr.bf16.mxu0 0
        %389 = vmatpush1.bf16.xpose.msra.mxu0 0
        %390 = vmatprep.subr.bf16.mxu0 0
        %391 = vmatpush1.bf16.xpose.msra.mxu0 0
        %392 = vmatprep.subr.bf16.mxu0 0
        %393 = vmatpush1.bf16.xpose.msra.mxu0 0
        %394 = vmatprep.subr.bf16.mxu0 0
        %395 = vmatpush1.bf16.xpose.msra.mxu0 0
        %396 = vmatprep.subr.bf16.mxu0 0
        %397 = vmatpush1.bf16.xpose.msra.mxu0 0
        %398 = vmatprep.subr.bf16.mxu0 0
        %399 = vmatpush1.bf16.xpose.msra.mxu0 0
        %400 = vmatprep.subr.bf16.mxu0 0
        %401 = vmatpush1.bf16.xpose.msra.mxu0 0
        %402 = vmatprep.subr.bf16.mxu0 0
        %403 = vmatpush1.bf16.xpose.msra.mxu0 0
        %404 = vmatprep.subr.bf16.mxu0 0
        %405 = vmatpush1.bf16.xpose.msra.mxu0 0
        %406 = vmatprep.subr.bf16.mxu0 0
        %407 = vmatpush1.bf16.xpose.msra.mxu0 0
        %408 = vmatprep.subr.bf16.mxu0 0
        %409 = vmatpush1.bf16.xpose.msra.mxu0 0
        %410 = vmatprep.subr.bf16.mxu0 0
        %411 = vmatpush1.bf16.xpose.msra.mxu0 0
        %412 = vmatprep.subr.bf16.mxu0 0
        %413 = vmatpush1.bf16.xpose.msra.mxu0 0
        %414 = vmatprep.subr.bf16.mxu0 0
        %415 = vmatpush1.bf16.xpose.msra.mxu0 0
        %416 = vmatprep.mubr.bf16.mxu0 0
        %417 = vmatmul.mubr.bf16.gmra.mrb[0].mxu0 %v379
        %v418 = vpop.f32.mrb[0].mxu0
        %v419 = vadd.f32 0.0, %v418
        %v420 = vpop.f32.mrb[0].mxu0
        %v421 = vpop.f32.mrb[0].mxu0
        %v422 = vpop.f32.mrb[0].mxu0
        %423 = vdwg.mxu0
        %v424 = vmul.f32 %v419, 0.35355338
        %v425 = vadd.f32 %v424, %v376
        %v426 = vsel %vm377, %v425, -inf
        %427 = vmax.xlane.f32.xlu0 %v426
        %v428 = vpop.xlane.xlu0 %427
        %v429 = vsub.f32 %v425, %v428
        %v430 = vmul.f32 %v429, 1.442695
        %v431 = vpow.pop %v430
        %v432 = vsel %vm377, %v431, 0.0
        %433 = vadd.xlane.f32.xlu0 %v432
        %v434 = vpop.xlane.xlu0 %433
        %v435 = vrcp.pop %v434
        %v436 = vmul.f32 %v431, %v435
        %v437 = vpack.c.bf16 %v436, %v436
        %vm438 = vcmask 60416
        %439 = vst.msk [vmem:[%s330] sm:$0xf] %vm438, %v437
        %v441 = vsel %vm377, %v437, 0
        %vm443 = vcmask 1043456
        %v445 = vsel %vm443, %v375, 0
        %447 = vmatprep.subr.bf16.mxu0 0
        %448 = vmatpush1.bf16.msra.mxu0 %v445
        %449 = vmatprep.subr.bf16.mxu0 0
        %450 = vmatpush1.bf16.msra.mxu0 0
        %451 = vmatprep.subr.bf16.mxu0 0
        %452 = vmatpush1.bf16.msra.mxu0 0
        %453 = vmatprep.subr.bf16.mxu0 0
        %454 = vmatpush1.bf16.msra.mxu0 0
        %455 = vmatprep.subr.bf16.mxu0 0
        %456 = vmatpush1.bf16.msra.mxu0 0
        %457 = vmatprep.subr.bf16.mxu0 0
        %458 = vmatpush1.bf16.msra.mxu0 0
        %459 = vmatprep.subr.bf16.mxu0 0
        %460 = vmatpush1.bf16.msra.mxu0 0
        %461 = vmatprep.subr.bf16.mxu0 0
        %462 = vmatpush1.bf16.msra.mxu0 0
        %463 = vmatprep.subr.bf16.mxu0 0
        %464 = vmatpush1.bf16.msra.mxu0 0
        %465 = vmatprep.subr.bf16.mxu0 0
        %466 = vmatpush1.bf16.msra.mxu0 0
        %467 = vmatprep.subr.bf16.mxu0 0
        %468 = vmatpush1.bf16.msra.mxu0 0
        %469 = vmatprep.subr.bf16.mxu0 0
        %470 = vmatpush1.bf16.msra.mxu0 0
        %471 = vmatprep.subr.bf16.mxu0 0
        %472 = vmatpush1.bf16.msra.mxu0 0
        %473 = vmatprep.subr.bf16.mxu0 0
        %474 = vmatpush1.bf16.msra.mxu0 0
        %475 = vmatprep.subr.bf16.mxu0 0
        %476 = vmatpush1.bf16.msra.mxu0 0
        %477 = vmatprep.subr.bf16.mxu0 0
        %478 = vmatpush1.bf16.msra.mxu0 0
        %479 = vmatprep.mubr.bf16.mxu0 0
        %480 = vmatmul.mubr.bf16.gmra.mrb[0].mxu0 %v441
        %v481 = vpop.f32.mrb[0].mxu0
        %v482 = vadd.f32 0.0, %v481
        %v483 = vpop.f32.mrb[0].mxu0
        %v484 = vpop.f32.mrb[0].mxu0
        %v485 = vpop.f32.mrb[0].mxu0
        %486 = vdwg.mxu0
        %v487 = vpack.c.bf16 %v482, %v482
        %488 = vst.msk [vmem:[%s370] sm:$0xf] %vm438, %v487
        %v490 = vunpack.c.l.b16 %v373
        %v491 = vpack.c.b16 %v490, %v490
        %492 = vrot.lane.b32.xlu0 %v491, 120
        %v493 = vpop.permute.xlu0 %492
        %v495 = vunpack.c.l.b16 %v374
        %v496 = vpack.c.b16 %v495, %v495
        %497 = vrot.lane.b32.xlu0 %v496, 120
        %v498 = vpop.permute.xlu0 %497
        %v500 = vsel %vm377, %v493, 0
        %v503 = vsel %vm377, %v498, 0
        %505 = vmatprep.subr.bf16.mxu0 0
        %506 = vmatpush1.bf16.xpose.msra.mxu0 %v503
        %507 = vmatprep.subr.bf16.mxu0 0
        %508 = vmatpush1.bf16.xpose.msra.mxu0 0
        %509 = vmatprep.subr.bf16.mxu0 0
        %510 = vmatpush1.bf16.xpose.msra.mxu0 0
        %511 = vmatprep.subr.bf16.mxu0 0
        %512 = vmatpush1.bf16.xpose.msra.mxu0 0
        %513 = vmatprep.subr.bf16.mxu0 0
        %514 = vmatpush1.bf16.xpose.msra.mxu0 0
        %515 = vmatprep.subr.bf16.mxu0 0
        %516 = vmatpush1.bf16.xpose.msra.mxu0 0
        %517 = vmatprep.subr.bf16.mxu0 0
        %518 = vmatpush1.bf16.xpose.msra.mxu0 0
        %519 = vmatprep.subr.bf16.mxu0 0
        %520 = vmatpush1.bf16.xpose.msra.mxu0 0
        %521 = vmatprep.subr.bf16.mxu0 0
        %522 = vmatpush1.bf16.xpose.msra.mxu0 0
        %523 = vmatprep.subr.bf16.mxu0 0
        %524 = vmatpush1.bf16.xpose.msra.mxu0 0
        %525 = vmatprep.subr.bf16.mxu0 0
        %526 = vmatpush1.bf16.xpose.msra.mxu0 0
        %527 = vmatprep.subr.bf16.mxu0 0
        %528 = vmatpush1.bf16.xpose.msra.mxu0 0
        %529 = vmatprep.subr.bf16.mxu0 0
        %530 = vmatpush1.bf16.xpose.msra.mxu0 0
        %531 = vmatprep.subr.bf16.mxu0 0
        %532 = vmatpush1.bf16.xpose.msra.mxu0 0
        %533 = vmatprep.subr.bf16.mxu0 0
        %534 = vmatpush1.bf16.xpose.msra.mxu0 0
        %535 = vmatprep.subr.bf16.mxu0 0
        %536 = vmatpush1.bf16.xpose.msra.mxu0 0
        %537 = vmatprep.mubr.bf16.mxu0 0
        %538 = vmatmul.mubr.bf16.gmra.mrb[0].mxu0 %v500
        %v539 = vpop.f32.mrb[0].mxu0
        %v540 = vadd.f32 0.0, %v539
        %v541 = vpop.f32.mrb[0].mxu0
        %v542 = vpop.f32.mrb[0].mxu0
        %v543 = vpop.f32.mrb[0].mxu0
        %544 = vdwg.mxu0
        %v545 = vmul.f32 %v540, 0.35355338
        %v546 = vadd.f32 %v545, %v376
        %v547 = vsel %vm377, %v546, -inf
        %548 = vmax.xlane.f32.xlu0 %v547
        %v549 = vpop.xlane.xlu0 %548
        %v550 = vsub.f32 %v546, %v549
        %v551 = vmul.f32 %v550, 1.442695
        %v552 = vpow.pop %v551
        %v553 = vsel %vm377, %v552, 0.0
        %554 = vadd.xlane.f32.xlu0 %v553
        %v555 = vpop.xlane.xlu0 %554
        %v556 = vrcp.pop %v555
        %v557 = vmul.f32 %v552, %v556
        %v558 = vpack.c.bf16 %v557, %v557
        %s559 = scalar_lea.vmem %s330, 4 [#allocation2]
        %560 = vst.msk [vmem:[%s559] sm:$0xf] %vm438, %v558
        %v562 = vunpack.c.l.b16 %v375
        %v563 = vpack.c.b16 %v562, %v562
        %564 = vrot.lane.b32.xlu0 %v563, 120
        %v565 = vpop.permute.xlu0 %564
        %v567 = vsel %vm377, %v558, 0
        %v570 = vsel %vm443, %v565, 0
        %572 = vmatprep.subr.bf16.mxu0 0
        %573 = vmatpush1.bf16.msra.mxu0 %v570
        %574 = vmatprep.subr.bf16.mxu0 0
        %575 = vmatpush1.bf16.msra.mxu0 0
        %576 = vmatprep.subr.bf16.mxu0 0
        %577 = vmatpush1.bf16.msra.mxu0 0
        %578 = vmatprep.subr.bf16.mxu0 0
        %579 = vmatpush1.bf16.msra.mxu0 0
        %580 = vmatprep.subr.bf16.mxu0 0
        %581 = vmatpush1.bf16.msra.mxu0 0
        %582 = vmatprep.subr.bf16.mxu0 0
        %583 = vmatpush1.bf16.msra.mxu0 0
        %584 = vmatprep.subr.bf16.mxu0 0
        %585 = vmatpush1.bf16.msra.mxu0 0
        %586 = vmatprep.subr.bf16.mxu0 0
        %587 = vmatpush1.bf16.msra.mxu0 0
        %588 = vmatprep.subr.bf16.mxu0 0
        %589 = vmatpush1.bf16.msra.mxu0 0
        %590 = vmatprep.subr.bf16.mxu0 0
        %591 = vmatpush1.bf16.msra.mxu0 0
        %592 = vmatprep.subr.bf16.mxu0 0
        %593 = vmatpush1.bf16.msra.mxu0 0
        %594 = vmatprep.subr.bf16.mxu0 0
        %595 = vmatpush1.bf16.msra.mxu0 0
        %596 = vmatprep.subr.bf16.mxu0 0
        %597 = vmatpush1.bf16.msra.mxu0 0
        %598 = vmatprep.subr.bf16.mxu0 0
        %599 = vmatpush1.bf16.msra.mxu0 0
        %600 = vmatprep.subr.bf16.mxu0 0
        %601 = vmatpush1.bf16.msra.mxu0 0
        %602 = vmatprep.subr.bf16.mxu0 0
        %603 = vmatpush1.bf16.msra.mxu0 0
        %604 = vmatprep.mubr.bf16.mxu0 0
        %605 = vmatmul.mubr.bf16.gmra.mrb[0].mxu0 %v567
        %v606 = vpop.f32.mrb[0].mxu0
        %v607 = vadd.f32 0.0, %v606
        %v608 = vpop.f32.mrb[0].mxu0
        %v609 = vpop.f32.mrb[0].mxu0
        %v610 = vpop.f32.mrb[0].mxu0
        %611 = vdwg.mxu0
        %v612 = vpack.c.bf16 %v607, %v607
        %v614 = vunpack.c.l.b16 %v612
        %v615 = vpack.c.b16 %v614, %v614
        %616 = vrot.lane.b32.xlu0 %v615, 8
        %v617 = vpop.permute.xlu0 %616
        %vm619 = vcmask 126016
        %620 = vst.msk [vmem:[%s370] sm:$0xf] %vm619, %v617
        %621 = vrot.lane.b32.xlu0 %v491, 112
        %v622 = vpop.permute.xlu0 %621
        %623 = vrot.lane.b32.xlu0 %v496, 112
        %v624 = vpop.permute.xlu0 %623
        %v626 = vsel %vm377, %v622, 0
        %v629 = vsel %vm377, %v624, 0
        %631 = vmatprep.subr.bf16.mxu0 0
        %632 = vmatpush1.bf16.xpose.msra.mxu0 %v629
        %633 = vmatprep.subr.bf16.mxu0 0
        %634 = vmatpush1.bf16.xpose.msra.mxu0 0
        %635 = vmatprep.subr.bf16.mxu0 0
        %636 = vmatpush1.bf16.xpose.msra.mxu0 0
        %637 = vmatprep.subr.bf16.mxu0 0
        %638 = vmatpush1.bf16.xpose.msra.mxu0 0
        %639 = vmatprep.subr.bf16.mxu0 0
        %640 = vmatpush1.bf16.xpose.msra.mxu0 0
        %641 = vmatprep.subr.bf16.mxu0 0
        %642 = vmatpush1.bf16.xpose.msra.mxu0 0
        %643 = vmatprep.subr.bf16.mxu0 0
        %644 = vmatpush1.bf16.xpose.msra.mxu0 0
        %645 = vmatprep.subr.bf16.mxu0 0
        %646 = vmatpush1.bf16.xpose.msra.mxu0 0
        %647 = vmatprep.subr.bf16.mxu0 0
        %648 = vmatpush1.bf16.xpose.msra.mxu0 0
        %649 = vmatprep.subr.bf16.mxu0 0
        %650 = vmatpush1.bf16.xpose.msra.mxu0 0
        %651 = vmatprep.subr.bf16.mxu0 0
        %652 = vmatpush1.bf16.xpose.msra.mxu0 0
        %653 = vmatprep.subr.bf16.mxu0 0
        %654 = vmatpush1.bf16.xpose.msra.mxu0 0
        %655 = vmatprep.subr.bf16.mxu0 0
        %656 = vmatpush1.bf16.xpose.msra.mxu0 0
        %657 = vmatprep.subr.bf16.mxu0 0
        %658 = vmatpush1.bf16.xpose.msra.mxu0 0
        %659 = vmatprep.subr.bf16.mxu0 0
        %660 = vmatpush1.bf16.xpose.msra.mxu0 0
        %661 = vmatprep.subr.bf16.mxu0 0
        %662 = vmatpush1.bf16.xpose.msra.mxu0 0
        %663 = vmatprep.mubr.bf16.mxu0 0
        %664 = vmatmul.mubr.bf16.gmra.mrb[0].mxu0 %v626
        %v665 = vpop.f32.mrb[0].mxu0
        %v666 = vadd.f32 0.0, %v665
        %v667 = vpop.f32.mrb[0].mxu0
        %v668 = vpop.f32.mrb[0].mxu0
        %v669 = vpop.f32.mrb[0].mxu0
        %670 = vdwg.mxu0
        %v671 = vmul.f32 %v666, 0.35355338
        %v672 = vadd.f32 %v671, %v376
        %v673 = vsel %vm377, %v672, -inf
        %674 = vmax.xlane.f32.xlu0 %v673
        %v675 = vpop.xlane.xlu0 %674
        %v676 = vsub.f32 %v672, %v675
        %v677 = vmul.f32 %v676, 1.442695
        %v678 = vpow.pop %v677
        %v679 = vsel %vm377, %v678, 0.0
        %680 = vadd.xlane.f32.xlu0 %v679
        %v681 = vpop.xlane.xlu0 %680
        %v682 = vrcp.pop %v681
        %v683 = vmul.f32 %v678, %v682
        %v684 = vpack.c.bf16 %v683, %v683
        %s685 = scalar_lea.vmem %s330, 8 [#allocation2]
        %686 = vst.msk [vmem:[%s685] sm:$0xf] %vm438, %v684
        %687 = vrot.lane.b32.xlu0 %v563, 112
        %v688 = vpop.permute.xlu0 %687
        %v690 = vsel %vm377, %v684, 0
        %v693 = vsel %vm443, %v688, 0
        %695 = vmatprep.subr.bf16.mxu0 0
        %696 = vmatpush1.bf16.msra.mxu0 %v693
        %697 = vmatprep.subr.bf16.mxu0 0
        %698 = vmatpush1.bf16.msra.mxu0 0
        %699 = vmatprep.subr.bf16.mxu0 0
        %700 = vmatpush1.bf16.msra.mxu0 0
        %701 = vmatprep.subr.bf16.mxu0 0
        %702 = vmatpush1.bf16.msra.mxu0 0
        %703 = vmatprep.subr.bf16.mxu0 0
        %704 = vmatpush1.bf16.msra.mxu0 0
        %705 = vmatprep.subr.bf16.mxu0 0
        %706 = vmatpush1.bf16.msra.mxu0 0
        %707 = vmatprep.subr.bf16.mxu0 0
        %708 = vmatpush1.bf16.msra.mxu0 0
        %709 = vmatprep.subr.bf16.mxu0 0
        %710 = vmatpush1.bf16.msra.mxu0 0
        %711 = vmatprep.subr.bf16.mxu0 0
        %712 = vmatpush1.bf16.msra.mxu0 0
        %713 = vmatprep.subr.bf16.mxu0 0
        %714 = vmatpush1.bf16.msra.mxu0 0
        %715 = vmatprep.subr.bf16.mxu0 0
        %716 = vmatpush1.bf16.msra.mxu0 0
        %717 = vmatprep.subr.bf16.mxu0 0
        %718 = vmatpush1.bf16.msra.mxu0 0
        %719 = vmatprep.subr.bf16.mxu0 0
        %720 = vmatpush1.bf16.msra.mxu0 0
        %721 = vmatprep.subr.bf16.mxu0 0
        %722 = vmatpush1.bf16.msra.mxu0 0
        %723 = vmatprep.subr.bf16.mxu0 0
        %724 = vmatpush1.bf16.msra.mxu0 0
        %725 = vmatprep.subr.bf16.mxu0 0
        %726 = vmatpush1.bf16.msra.mxu0 0
        %727 = vmatprep.mubr.bf16.mxu0 0
        %728 = vmatmul.mubr.bf16.gmra.mrb[0].mxu0 %v690
        %v729 = vpop.f32.mrb[0].mxu0
        %v730 = vadd.f32 0.0, %v729
        %v731 = vpop.f32.mrb[0].mxu0
        %v732 = vpop.f32.mrb[0].mxu0
        %v733 = vpop.f32.mrb[0].mxu0
        %734 = vdwg.mxu0
        %v735 = vpack.c.bf16 %v730, %v730
        %v737 = vunpack.c.l.b16 %v735
        %v738 = vpack.c.b16 %v737, %v737
        %739 = vrot.lane.b32.xlu0 %v738, 16
        %v740 = vpop.permute.xlu0 %739
        %vm742 = vcmask 191616
        %743 = vst.msk [vmem:[%s370] sm:$0xf] %vm742, %v740
        %744 = vrot.lane.b32.xlu0 %v491, 104
        %v745 = vpop.permute.xlu0 %744
        %746 = vrot.lane.b32.xlu0 %v496, 104
        %v747 = vpop.permute.xlu0 %746
        %v749 = vsel %vm377, %v745, 0
        %v752 = vsel %vm377, %v747, 0
        %754 = vmatprep.subr.bf16.mxu0 0
        %755 = vmatpush1.bf16.xpose.msra.mxu0 %v752
        %756 = vmatprep.subr.bf16.mxu0 0
        %757 = vmatpush1.bf16.xpose.msra.mxu0 0
        %758 = vmatprep.subr.bf16.mxu0 0
        %759 = vmatpush1.bf16.xpose.msra.mxu0 0
        %760 = vmatprep.subr.bf16.mxu0 0
        %761 = vmatpush1.bf16.xpose.msra.mxu0 0
        %762 = vmatprep.subr.bf16.mxu0 0
        %763 = vmatpush1.bf16.xpose.msra.mxu0 0
        %764 = vmatprep.subr.bf16.mxu0 0
        %765 = vmatpush1.bf16.xpose.msra.mxu0 0
        %766 = vmatprep.subr.bf16.mxu0 0
        %767 = vmatpush1.bf16.xpose.msra.mxu0 0
        %768 = vmatprep.subr.bf16.mxu0 0
        %769 = vmatpush1.bf16.xpose.msra.mxu0 0
        %770 = vmatprep.subr.bf16.mxu0 0
        %771 = vmatpush1.bf16.xpose.msra.mxu0 0
        %772 = vmatprep.subr.bf16.mxu0 0
        %773 = vmatpush1.bf16.xpose.msra.mxu0 0
        %774 = vmatprep.subr.bf16.mxu0 0
        %775 = vmatpush1.bf16.xpose.msra.mxu0 0
        %776 = vmatprep.subr.bf16.mxu0 0
        %777 = vmatpush1.bf16.xpose.msra.mxu0 0
        %778 = vmatprep.subr.bf16.mxu0 0
        %779 = vmatpush1.bf16.xpose.msra.mxu0 0
        %780 = vmatprep.subr.bf16.mxu0 0
        %781 = vmatpush1.bf16.xpose.msra.mxu0 0
        %782 = vmatprep.subr.bf16.mxu0 0
        %783 = vmatpush1.bf16.xpose.msra.mxu0 0
        %784 = vmatprep.subr.bf16.mxu0 0
        %785 = vmatpush1.bf16.xpose.msra.mxu0 0
        %786 = vmatprep.mubr.bf16.mxu0 0
        %787 = vmatmul.mubr.bf16.gmra.mrb[0].mxu0 %v749
        %v788 = vpop.f32.mrb[0].mxu0
        %v789 = vadd.f32 0.0, %v788
        %v790 = vpop.f32.mrb[0].mxu0
        %v791 = vpop.f32.mrb[0].mxu0
        %v792 = vpop.f32.mrb[0].mxu0
        %793 = vdwg.mxu0
        %v794 = vmul.f32 %v789, 0.35355338
        %v795 = vadd.f32 %v794, %v376
        %v796 = vsel %vm377, %v795, -inf
        %797 = vmax.xlane.f32.xlu0 %v796
        %v798 = vpop.xlane.xlu0 %797
        %v799 = vsub.f32 %v795, %v798
        %v800 = vmul.f32 %v799, 1.442695
        %v801 = vpow.pop %v800
        %v802 = vsel %vm377, %v801, 0.0
        %803 = vadd.xlane.f32.xlu0 %v802
        %v804 = vpop.xlane.xlu0 %803
        %v805 = vrcp.pop %v804
        %v806 = vmul.f32 %v801, %v805
        %v807 = vpack.c.bf16 %v806, %v806
        %s808 = scalar_lea.vmem %s330, 12 [#allocation2]
        %809 = vst.msk [vmem:[%s808] sm:$0xf] %vm438, %v807
        %810 = vrot.lane.b32.xlu0 %v563, 104
        %v811 = vpop.permute.xlu0 %810
        %v813 = vsel %vm377, %v807, 0
        %v816 = vsel %vm443, %v811, 0
        %818 = vmatprep.subr.bf16.mxu0 0
        %819 = vmatpush1.bf16.msra.mxu0 %v816
        %820 = vmatprep.subr.bf16.mxu0 0
        %821 = vmatpush1.bf16.msra.mxu0 0
        %822 = vmatprep.subr.bf16.mxu0 0
        %823 = vmatpush1.bf16.msra.mxu0 0
        %824 = vmatprep.subr.bf16.mxu0 0
        %825 = vmatpush1.bf16.msra.mxu0 0
        %826 = vmatprep.subr.bf16.mxu0 0
        %827 = vmatpush1.bf16.msra.mxu0 0
        %828 = vmatprep.subr.bf16.mxu0 0
        %829 = vmatpush1.bf16.msra.mxu0 0
        %830 = vmatprep.subr.bf16.mxu0 0
        %831 = vmatpush1.bf16.msra.mxu0 0
        %832 = vmatprep.subr.bf16.mxu0 0
        %833 = vmatpush1.bf16.msra.mxu0 0
        %834 = vmatprep.subr.bf16.mxu0 0
        %835 = vmatpush1.bf16.msra.mxu0 0
        %836 = vmatprep.subr.bf16.mxu0 0
        %837 = vmatpush1.bf16.msra.mxu0 0
        %838 = vmatprep.subr.bf16.mxu0 0
        %839 = vmatpush1.bf16.msra.mxu0 0
        %840 = vmatprep.subr.bf16.mxu0 0
        %841 = vmatpush1.bf16.msra.mxu0 0
        %842 = vmatprep.subr.bf16.mxu0 0
        %843 = vmatpush1.bf16.msra.mxu0 0
        %844 = vmatprep.subr.bf16.mxu0 0
        %845 = vmatpush1.bf16.msra.mxu0 0
        %846 = vmatprep.subr.bf16.mxu0 0
        %847 = vmatpush1.bf16.msra.mxu0 0
        %848 = vmatprep.subr.bf16.mxu0 0
        %849 = vmatpush1.bf16.msra.mxu0 0
        %850 = vmatprep.mubr.bf16.mxu0 0
        %851 = vmatmul.mubr.bf16.gmra.mrb[0].mxu0 %v813
        %v852 = vpop.f32.mrb[0].mxu0
        %v853 = vadd.f32 0.0, %v852
        %v854 = vpop.f32.mrb[0].mxu0
        %v855 = vpop.f32.mrb[0].mxu0
        %v856 = vpop.f32.mrb[0].mxu0
        %857 = vdwg.mxu0
        %v858 = vpack.c.bf16 %v853, %v853
        %v860 = vunpack.c.l.b16 %v858
        %v861 = vpack.c.b16 %v860, %v860
        %862 = vrot.lane.b32.xlu0 %v861, 24
        %v863 = vpop.permute.xlu0 %862
        %vm865 = vcmask 257216
        %866 = vst.msk [vmem:[%s370] sm:$0xf] %vm865, %v863
        %p867 = scmp.lt.s32.totalorder %s25, 1
        %s868 = scalar_select %p867, %s25, 1
        %p869 = scmp.lt.s32.totalorder %s27, 0
        %s870 = scalar_select %p869, %s27, 0
        %p871 = scmp.lt.s32.totalorder %s26, 0
        %s872 = scalar_select %p871, %s26, 0
        %s873 = sadd.s32 %s872, %s870
        %s874 = sadd.s32 %s873, %s868
        %s875 = smul.addr %s874, 4
        %s876 = scalar_lea.vmem %s4, %s875
        %s877 = sand.u32 %s193, 1
        %s878 = scalar_lea.sflag [#allocation3], %s877
        %s879 = sand.u32 %s193, 1
        %s880 = smul.addr %s879, 16
        %s881 = scalar_lea.vmem [#allocation2], %s880
        // Predicated region
        $region37: #{encoder_gpt2_forward.16} parent=35 // pred_check
          %p882 = pneg %p173
        $region38: #{encoder_gpt2_forward.16} parent=35 // pred_check_branch
          %884 = sbr.rel (%p882) target = $region40
        $region39: #{encoder_gpt2_forward.16} parent=35 // pred_region
          _
        $region40: #{encoder_gpt2_forward.16} parent=35 // pred_fallthru
          _
        // Predicated region
        $region41: #{encoder_gpt2_forward.16} parent=35 // pred_check
          %p885 = pneg %p203
        $region42: #{encoder_gpt2_forward.16} parent=35 // pred_check_branch
          %887 = sbr.rel (%p885) target = $region44
        $region43: #{encoder_gpt2_forward.16} parent=35 // pred_region
          %s888 = smul.u32 4, %s26
          %s890 = ssub.s32 256, 256
          %891 = vsyncadd %s878, %s890
          %s892 = sadd.s32 %s27, %s888
          %s893 = smul.addr %s25, 4
          %s894 = sadd.s32 %s892, %s893
          %s895 = smul.addr %s894, 64
          %s896 = scalar_lea.hbm %s5, %s895
          %s897 = sshll.u32 %s881, 4
          %s898 = int_to_ptr.vmem [resolvable:$true] %s897
          %903 = dma.vmem_to_hbm [thread:$0]  %s898, 256, %s896, %s878, 64, 64, 4
        $region44: #{encoder_gpt2_forward.16} parent=35 // pred_fallthru
          _
      $region36: #{encoder_gpt2_forward.16} parent=5 // pred_fallthru
        _
      %p904 = scmp.le.s32.totalorder 2, %s15
      // Predicated region
      $region45: #{encoder_gpt2_forward.16} parent=5 // pred_check
        %p905 = pneg %p904
      $region46: #{encoder_gpt2_forward.16} parent=5 // pred_check_branch
        %907 = sbr.rel (%p905) target = $region48
      $region47: #{encoder_gpt2_forward.16} parent=5 // pred_region
        %s908 = ssub.s32 %s15, 2
        // Predicated region
        $region49: #{encoder_gpt2_forward.16} parent=47 // pred_check
          %p909 = pneg %p179
        $region50: #{encoder_gpt2_forward.16} parent=47 // pred_check_branch
          %911 = sbr.rel (%p909) target = $region52
        $region51: #{encoder_gpt2_forward.16} parent=47 // pred_region
          %p912 = scmp.lt.s32.totalorder %s28, 1
          %s913 = scalar_select %p912, %s28, 1
          %p914 = scmp.lt.s32.totalorder %s30, 0
          %s915 = scalar_select %p914, %s30, 0
          %p916 = scmp.lt.s32.totalorder %s29, 0
          %s917 = scalar_select %p916, %s29, 0
          %s918 = sadd.s32 %s917, %s915
          %s919 = sadd.s32 %s918, %s913
          %s920 = smul.addr %s919, 4
          %s921 = scalar_lea.vmem %s4, %s920
        $region52: #{encoder_gpt2_forward.16} parent=47 // pred_fallthru
          _
        // Predicated region
        $region53: #{encoder_gpt2_forward.16} parent=47 // pred_check
          %p922 = pneg %p209
        $region54: #{encoder_gpt2_forward.16} parent=47 // pred_check_branch
          %924 = sbr.rel (%p922) target = $region56
        $region55: #{encoder_gpt2_forward.16} parent=47 // pred_region
          %s925 = sand.u32 %s194, 1
          %s926 = scalar_lea.sflag [#allocation3], %s925
          %s927 = sand.u32 %s194, 1
          %s928 = smul.addr %s927, 16
          %s929 = scalar_lea.vmem [#allocation2], %s928
          %930 = dma.done %s926, 256
        $region56: #{encoder_gpt2_forward.16} parent=47 // pred_fallthru
          _
      $region48: #{encoder_gpt2_forward.16} parent=5 // pred_fallthru
        _
    $region6: #{encoder_gpt2_forward.16} parent=1 // loop_footer
      %s19 = sadd.s32 1, %s15
    $region7: #{encoder_gpt2_forward.16} parent=1 // loop_footer_branch
      %14 = sbr.rel target = $region3
    $region8: #{encoder_gpt2_forward.16} parent=1 // loop_exit
      _
    %931 = vsyncpa [#allocation3], 1
    %s932 = scalar_lea.sflag [#allocation3], 1
    %933 = vsyncpa %s932, 1

</llo_original>
